<compile_context>
chip_gen: v7x
topology: tpu7x:2x2x1
jax: 0.10.0
libtpu: 0.0.40
codegen_flags: <defaults>
</compile_context>

<pallas_src>
import functools
import math

import jax
import jax.numpy as jnp
from jax.experimental import pallas as pl
from jax.experimental.pallas import tpu as pltpu

POSE_DIM = 34
H_DIM = 32
LATENT_DIM = 16
SUBLANE = 8
LANE = 128


# ----------------------------------------------------------------------------
# Packed-weight slab layout: every piece is zero-padded to 128 lanes and gets
# an 8-aligned row offset inside a single (rows, 128) f32 array.
# ----------------------------------------------------------------------------
def _build_slab_layout():
    pieces = [
        ("e_wih0", POSE_DIM), ("e_whh0", H_DIM), ("e_b0", 1),
        ("e_wih1", H_DIM), ("e_whh1", H_DIM), ("e_b1", 1),
        ("head_w", H_DIM), ("head_b", 1),
        ("dfc_w", LATENT_DIM), ("dfc_b", 1),
        ("d_wih", POSE_DIM), ("d_whh", H_DIM), ("d_b", 1),
        ("d_wrec", H_DIM), ("d_brec", 1),
        ("mlp_w", H_DIM), ("mlp_b", 1),
    ]
    layout, off = {}, 0
    for name, rows in pieces:
        layout[name] = (off, rows)
        off += ((rows + SUBLANE - 1) // SUBLANE) * SUBLANE  # 8-aligned starts
    return layout, off


_SLAB, _SLAB_ROWS = _build_slab_layout()


def pack_params(params):
    """One-time weight prep (hoisted out of the inference path).

    Merges the mean/var head, folds the decoder MLP feedback into the LSTM
    recurrence (exact algebra, kept in f32), zero-pads every piece to 128
    lanes, and stacks everything into ONE f32 slab => a single weight DMA.
    """
    p = params
    head_w = jnp.concatenate([p["fcm_w_t"], p["fcv_w_t"]], axis=1)    # (H, 2L)
    head_b = jnp.concatenate([p["fcm_b"], p["fcv_b"]], axis=1)        # (1, 2L)
    d_wrec = p["mlp_w_t"] @ p["d_wih_t"] + p["d_whh_t"]               # (H, 4H)
    d_brec = p["mlp_b"] @ p["d_wih_t"] + p["d_b"]                     # (1, 4H)
    pieces = {
        "e_wih0": p["e_wih0_t"], "e_whh0": p["e_whh0_t"], "e_b0": p["e_b0"],
        "e_wih1": p["e_wih1_t"], "e_whh1": p["e_whh1_t"], "e_b1": p["e_b1"],
        "head_w": head_w, "head_b": head_b,
        "dfc_w": p["dfc_w_t"], "dfc_b": p["dfc_b"],
        "d_wih": p["d_wih_t"], "d_whh": p["d_whh_t"], "d_b": p["d_b"],
        "d_wrec": d_wrec, "d_brec": d_brec,
        "mlp_w": p["mlp_w_t"], "mlp_b": p["mlp_b"],
    }
    slab = jnp.zeros((_SLAB_ROWS, LANE), jnp.float32)
    for name, (off, rows) in _SLAB.items():
        arr = jnp.asarray(pieces[name], jnp.float32)
        assert arr.shape[0] == rows and arr.shape[1] <= LANE
        slab = slab.at[off:off + rows, :arr.shape[1]].set(arr)
    return slab


def _lstm_cell(gates, c, hdim):
    """PyTorch-semantics LSTM cell from precomputed gates (i, f, g, o order)."""
    sig = jax.nn.sigmoid(gates)              # one EUP pass over the full vreg
    i = sig[:, 0:hdim]
    f = sig[:, hdim:2 * hdim]
    o = sig[:, 3 * hdim:4 * hdim]
    g = jnp.tanh(gates[:, 2 * hdim:3 * hdim])
    c_new = f * c + i * g
    h_new = o * jnp.tanh(c_new)
    return h_new, c_new


def vae_kernel(obs_ref, eps_ref, w_ref, out_ref, *, hdim, seq_len, pred_len):
    rows, pose_dim = obs_ref.shape
    batch = rows // seq_len
    gd = 4 * hdim                                   # = 128 (lane-dense gates)
    f32 = jnp.float32

    def W(name):                                    # static slice -> cheap view
        off, n = _SLAB[name]
        return w_ref[off:off + n, :]

    obs2d = obs_ref[...]                            # (S*B, P)

    # ---------------- Encoder: 2-layer LSTM over obs_s ----------------
    # Layer-0 input projection hoisted: ONE (S*B, P) x (P, 4H) matmul.
    xg0 = jnp.dot(obs2d, W("e_wih0"), preferred_element_type=f32) + W("e_b0")

    e_whh0 = W("e_whh0")
    e_wih1 = W("e_wih1")
    e_whh1 = W("e_whh1")
    b1 = jnp.broadcast_to(W("e_b1"), (batch, gd))   # hoisted broadcast

    zeros = jnp.zeros((batch, hdim), f32)
    h0 = c0 = h1 = c1 = zeros

    # Fully unrolled (seq_len is a compile-time constant).
    for t in range(seq_len):
        # h1 @ Whh1 only depends on step t-1 state: issue it off the layer-0
        # critical path so its MXU push overlaps layer-0's EUP/VPU cell math.
        g1_rec = jnp.dot(h1, e_whh1, preferred_element_type=f32)
        g0 = xg0[t * batch:(t + 1) * batch] + jnp.dot(
            h0, e_whh0, preferred_element_type=f32)
        h0, c0 = _lstm_cell(g0, c0, hdim)
        # TODO(synk): inter-layer dropout (p=0.3) omitted; eval-mode forward.
        g1 = jnp.dot(h0, e_wih1, preferred_element_type=f32) + g1_rec + b1
        h1, c1 = _lstm_cell(g1, c1, hdim)

    # Merged FC_mean / FC_var head (weights padded to 128 lanes -> lane-dense).
    meanvar = jnp.dot(h1, W("head_w"), preferred_element_type=f32) + W("head_b")
    latent = eps_ref.shape[1]
    mean = meanvar[:, :latent]
    logvar = meanvar[:, latent:2 * latent]

    # ------------- Reparameterization: z = mean + exp(0.5*logvar)*eps --------
    z = mean + jnp.exp(0.5 * logvar) * eps_ref[...]

    # ---------------- Decoder: autoregressive LSTM + MLP ----------------
    h_full = jnp.dot(z, W("dfc_w"), preferred_element_type=f32) + W("dfc_b")
    h = h_full[:, :hdim]
    c = zeros

    # Step 0 uses the real last observed frame; two dots (no lane concat).
    last = obs2d[(seq_len - 1) * batch:, :]                       # (B, P)
    g = (jnp.dot(last, W("d_wih"), preferred_element_type=f32)
         + jnp.dot(h, W("d_whh"), preferred_element_type=f32)
         + jnp.broadcast_to(W("d_b"), (batch, gd)))
    h, c = _lstm_cell(g, c, hdim)
    hs = [h]

    # Steps 1..P-1: MLP feedback folded into the recurrence -> one dot / step.
    d_wrec = W("d_wrec")
    b_rec = jnp.broadcast_to(W("d_brec"), (batch, gd))
    for _ in range(1, pred_len):
        g = jnp.dot(h, d_wrec, preferred_element_type=f32) + b_rec
        h, c = _lstm_cell(g, c, hdim)
        hs.append(h)

    # Output projection for all steps in one matmul; mlp_w is zero-padded to
    # 128 cols so preds is already lane-dense. One output slab, two unmasked
    # stores, one writeback DMA (wrapper slices the real lanes).
    h_all = jnp.concatenate(hs, axis=0)                           # (P*B, H)
    preds = jnp.dot(h_all, W("mlp_w"), preferred_element_type=f32) + W("mlp_b")
    out_ref[0:pred_len * batch, :] = preds
    out_ref[pred_len * batch:, :] = meanvar


@functools.partial(jax.jit, static_argnames=("pred_len",))
def vae_forward(obs_s, weight_slab, eps, *, pred_len):
    """Inference path: only pads obs/eps and runs the kernel (weight prep is
    done once, outside, by pack_params)."""
    seq_len, batch, pose_dim = obs_s.shape
    b_pad = ((batch + SUBLANE - 1) // SUBLANE) * SUBLANE
    pad = b_pad - batch
    obs2d = jnp.pad(obs_s, ((0, 0), (0, pad), (0, 0))).reshape(
        seq_len * b_pad, pose_dim)
    eps_p = jnp.pad(eps, ((0, pad), (0, 0)))

    kernel = functools.partial(vae_kernel, hdim=H_DIM,
                               seq_len=seq_len, pred_len=pred_len)
    vmem = pl.BlockSpec(memory_space=pltpu.MemorySpace.VMEM)
    out_rows = (pred_len + 1) * b_pad
    # NOTE: a leading "parallel" grid axis over independent batch groups would
    # shard work across both v7x TensorCores; with a single tiny batch there
    # is only one group, so the kernel stays grid-less.
    out = pl.pallas_call(
        kernel,
        out_shape=jax.ShapeDtypeStruct((out_rows, LANE), jnp.float32),
        in_specs=[vmem, vmem, vmem],
        out_specs=vmem,
    )(obs2d, eps_p, weight_slab)

    preds = out[:pred_len * b_pad, :pose_dim].reshape(
        pred_len, b_pad, pose_dim)[:, :batch, :]
    mv = out[pred_len * b_pad:, :]
    mean = mv[:batch, :LATENT_DIM]
    logvar = mv[:batch, LATENT_DIM:2 * LATENT_DIM]
    return preds, mean, logvar


def init_params(key):
    """Deterministic synthetic params matching PyTorch module shapes.
    Weights are stored pre-transposed ((in, out)) and LSTM biases combined."""
    H, P, L = H_DIM, POSE_DIM, LATENT_DIM
    keys = iter(jax.random.split(key, 32))

    def unif(shape, bound):
        return jax.random.uniform(next(keys), shape, jnp.float32, -bound, bound)

    kh = 1.0 / math.sqrt(H)
    p = {}
    # Encoder LSTM layer 0 (input pose_dim)
    p["e_wih0_t"] = unif((P, 4 * H), kh)
    p["e_whh0_t"] = unif((H, 4 * H), kh)
    p["e_b0"] = (unif((1, 4 * H), kh) + unif((1, 4 * H), kh))  # b_ih + b_hh
    # Encoder LSTM layer 1 (input h_dim)
    p["e_wih1_t"] = unif((H, 4 * H), kh)
    p["e_whh1_t"] = unif((H, 4 * H), kh)
    p["e_b1"] = (unif((1, 4 * H), kh) + unif((1, 4 * H), kh))
    # FC_mean / FC_var : Linear(h_dim -> latent_dim)
    p["fcm_w_t"] = unif((H, L), kh)
    p["fcm_b"] = unif((1, L), kh)
    p["fcv_w_t"] = unif((H, L), kh)
    p["fcv_b"] = unif((1, L), kh)
    # Decoder FC : Linear(latent_dim -> h_dim)
    kl = 1.0 / math.sqrt(L)
    p["dfc_w_t"] = unif((L, H), kl)
    p["dfc_b"] = unif((1, H), kl)
    # Decoder LSTM (1 layer, input pose_dim)
    p["d_wih_t"] = unif((P, 4 * H), kh)
    p["d_whh_t"] = unif((H, 4 * H), kh)
    p["d_b"] = (unif((1, 4 * H), kh) + unif((1, 4 * H), kh))
    # Decoder mlp : Linear(h_dim -> pose_dim)
    p["mlp_w_t"] = unif((H, P), kh)
    p["mlp_b"] = unif((1, P), kh)
    return p


def reference_forward(obs_s, params, eps, pred_len):
    """Pure-JAX reference mirroring the PyTorch forward (eval mode, unfused)."""
    H = H_DIM
    seq_len, batch, _ = obs_s.shape

    def step(x, h, c, wih_t, whh_t, b):
        g = x @ wih_t + h @ whh_t + b
        i = jax.nn.sigmoid(g[:, :H]); f = jax.nn.sigmoid(g[:, H:2 * H])
        gg = jnp.tanh(g[:, 2 * H:3 * H]); o = jax.nn.sigmoid(g[:, 3 * H:])
        c = f * c + i * gg
        return o * jnp.tanh(c), c

    z0 = jnp.zeros((batch, H), jnp.float32)
    h0 = c0 = h1 = c1 = z0
    for t in range(seq_len):
        h0, c0 = step(obs_s[t], h0, c0, params["e_wih0_t"],
                      params["e_whh0_t"], params["e_b0"])
        h1, c1 = step(h0, h1, c1, params["e_wih1_t"],
                      params["e_whh1_t"], params["e_b1"])
    mean = h1 @ params["fcm_w_t"] + params["fcm_b"]
    logvar = h1 @ params["fcv_w_t"] + params["fcv_b"]
    z = mean + jnp.exp(0.5 * logvar) * eps
    h = z @ params["dfc_w_t"] + params["dfc_b"]
    c = jnp.zeros((batch, H), jnp.float32)
    last = obs_s[-1]
    preds = []
    for _ in range(pred_len):
        h, c = step(last, h, c, params["d_wih_t"], params["d_whh_t"],
                    params["d_b"])
        curr = h @ params["mlp_w_t"] + params["mlp_b"]
        preds.append(curr)
        last = curr
    return jnp.stack(preds, 0), mean, logvar


if __name__ == "__main__":
    key = jax.random.PRNGKey(0)
    kp, kx, ke = jax.random.split(key, 3)

    seq_len, batch, pred_len = 8, 2, 5
    obs_s = jax.random.normal(kx, (seq_len, batch, POSE_DIM), jnp.float32)
    params = init_params(kp)
    # torch.randn_like(var) in reparameterization -> deterministic eps passed in.
    eps = jax.random.normal(ke, (batch, LATENT_DIM), jnp.float32)

    # One-time weight prep, hoisted off the inference path (single DMA slab).
    weight_slab = jax.block_until_ready(pack_params(params))

    preds, mean, logvar = vae_forward(obs_s, weight_slab, eps, pred_len=pred_len)
    jax.block_until_ready((preds, mean, logvar))

    ref_preds, ref_mean, ref_logvar = reference_forward(obs_s, params, eps, pred_len)
    assert preds.shape == (pred_len, batch, POSE_DIM)
    assert mean.shape == (batch, LATENT_DIM) and logvar.shape == (batch, LATENT_DIM)
    assert jnp.allclose(mean, ref_mean, rtol=1e-2, atol=1e-2)
    assert jnp.allclose(logvar, ref_logvar, rtol=1e-2, atol=1e-2)
    assert jnp.allclose(preds, ref_preds, rtol=1e-2, atol=1e-2)

    print("KERNEL_OK")
</pallas_src>

<mosaic_0001>
module attributes {stable_mosaic.version = 11 : i64} {
  func.func @vae_kernel(%arg0: memref<64x34xf32, #tpu.memory_space<vmem>>, %arg1: memref<8x16xf32, #tpu.memory_space<vmem>>, %arg2: memref<376x128xf32, #tpu.memory_space<vmem>>, %arg3: memref<48x128xf32, #tpu.memory_space<vmem>>) attributes {dimension_semantics = [], scalar_prefetch = 0 : i64, scratch_operands = 0 : i64, tpu.core_type = #tpu.core_type<tc>} {
    %c0 = arith.constant 0 : index
    %c0_0 = arith.constant 0 : index
    %0 = vector.load %arg0[%c0, %c0_0] : memref<64x34xf32, #tpu.memory_space<vmem>>, vector<64x34xf32>
    %c0_1 = arith.constant 0 : index
    %c0_2 = arith.constant 0 : index
    %1 = vector.load %arg2[%c0_1, %c0_2] : memref<376x128xf32, #tpu.memory_space<vmem>>, vector<34x128xf32>
    %cst = arith.constant dense<0.000000e+00> : vector<64x128xf32>
    %2 = tpu.matmul %0, %1, %cst {dimension_numbers = #tpu.dot_dimension_numbers<[1], [0], [0], [1], [0, 0, 1, 1], [], []>} : vector<64x34xf32>, vector<34x128xf32>, vector<64x128xf32> -> vector<64x128xf32>
    %c72 = arith.constant 72 : index
    %c0_3 = arith.constant 0 : index
    %3 = vector.load %arg2[%c72, %c0_3] : memref<376x128xf32, #tpu.memory_space<vmem>>, vector<1x128xf32>
    %4 = vector.broadcast %3 : vector<1x128xf32> to vector<64x128xf32>
    %5 = arith.addf %2, %4 : vector<64x128xf32>
    %c40 = arith.constant 40 : index
    %c0_4 = arith.constant 0 : index
    %6 = vector.load %arg2[%c40, %c0_4] : memref<376x128xf32, #tpu.memory_space<vmem>>, vector<32x128xf32>
    %c80 = arith.constant 80 : index
    %c0_5 = arith.constant 0 : index
    %7 = vector.load %arg2[%c80, %c0_5] : memref<376x128xf32, #tpu.memory_space<vmem>>, vector<32x128xf32>
    %c112 = arith.constant 112 : index
    %c0_6 = arith.constant 0 : index
    %8 = vector.load %arg2[%c112, %c0_6] : memref<376x128xf32, #tpu.memory_space<vmem>>, vector<32x128xf32>
    %c144 = arith.constant 144 : index
    %c0_7 = arith.constant 0 : index
    %9 = vector.load %arg2[%c144, %c0_7] : memref<376x128xf32, #tpu.memory_space<vmem>>, vector<1x128xf32>
    %10 = vector.shape_cast %9 : vector<1x128xf32> to vector<1x128xf32>
    %11 = vector.broadcast %10 : vector<1x128xf32> to vector<8x128xf32>
    %cst_8 = arith.constant 0.000000e+00 : f32
    %12 = vector.broadcast %cst_8 : f32 to vector<8x32xf32>
    %cst_9 = arith.constant dense<0.000000e+00> : vector<8x128xf32>
    %13 = tpu.matmul %12, %8, %cst_9 {dimension_numbers = #tpu.dot_dimension_numbers<[1], [0], [0], [1], [0, 0, 1, 1], [], []>} : vector<8x32xf32>, vector<32x128xf32>, vector<8x128xf32> -> vector<8x128xf32>
    %14 = vector.extract_strided_slice %5 {offsets = [0, 0], sizes = [8, 128], strides = [1, 1]} : vector<64x128xf32> to vector<8x128xf32>
    %cst_10 = arith.constant dense<0.000000e+00> : vector<8x128xf32>
    %15 = tpu.matmul %12, %6, %cst_10 {dimension_numbers = #tpu.dot_dimension_numbers<[1], [0], [0], [1], [0, 0, 1, 1], [], []>} : vector<8x32xf32>, vector<32x128xf32>, vector<8x128xf32> -> vector<8x128xf32>
    %16 = arith.addf %14, %15 : vector<8x128xf32>
    %17 = arith.negf %16 : vector<8x128xf32>
    %18 = math.exp %17 : vector<8x128xf32>
    %cst_11 = arith.constant 1.000000e+00 : f32
    %19 = vector.broadcast %cst_11 : f32 to vector<8x128xf32>
    %20 = arith.addf %19, %18 : vector<8x128xf32>
    %21 = arith.divf %19, %20 : vector<8x128xf32>
    %22 = vector.extract_strided_slice %21 {offsets = [0, 0], sizes = [8, 32], strides = [1, 1]} : vector<8x128xf32> to vector<8x32xf32>
    %23 = vector.extract_strided_slice %21 {offsets = [0, 32], sizes = [8, 32], strides = [1, 1]} : vector<8x128xf32> to vector<8x32xf32>
    %24 = vector.extract_strided_slice %21 {offsets = [0, 96], sizes = [8, 32], strides = [1, 1]} : vector<8x128xf32> to vector<8x32xf32>
    %25 = vector.extract_strided_slice %16 {offsets = [0, 64], sizes = [8, 32], strides = [1, 1]} : vector<8x128xf32> to vector<8x32xf32>
    %26 = math.tanh %25 : vector<8x32xf32>
    %27 = arith.mulf %23, %12 : vector<8x32xf32>
    %28 = arith.mulf %22, %26 : vector<8x32xf32>
    %29 = arith.addf %27, %28 : vector<8x32xf32>
    %30 = math.tanh %29 : vector<8x32xf32>
    %31 = arith.mulf %24, %30 : vector<8x32xf32>
    %cst_12 = arith.constant dense<0.000000e+00> : vector<8x128xf32>
    %32 = tpu.matmul %31, %7, %cst_12 {dimension_numbers = #tpu.dot_dimension_numbers<[1], [0], [0], [1], [0, 0, 1, 1], [], []>} : vector<8x32xf32>, vector<32x128xf32>, vector<8x128xf32> -> vector<8x128xf32>
    %33 = arith.addf %32, %13 : vector<8x128xf32>
    %34 = arith.addf %33, %11 : vector<8x128xf32>
    %35 = arith.negf %34 : vector<8x128xf32>
    %36 = math.exp %35 : vector<8x128xf32>
    %cst_13 = arith.constant 1.000000e+00 : f32
    %37 = vector.broadcast %cst_13 : f32 to vector<8x128xf32>
    %38 = arith.addf %37, %36 : vector<8x128xf32>
    %39 = arith.divf %37, %38 : vector<8x128xf32>
    %40 = vector.extract_strided_slice %39 {offsets = [0, 0], sizes = [8, 32], strides = [1, 1]} : vector<8x128xf32> to vector<8x32xf32>
    %41 = vector.extract_strided_slice %39 {offsets = [0, 32], sizes = [8, 32], strides = [1, 1]} : vector<8x128xf32> to vector<8x32xf32>
    %42 = vector.extract_strided_slice %39 {offsets = [0, 96], sizes = [8, 32], strides = [1, 1]} : vector<8x128xf32> to vector<8x32xf32>
    %43 = vector.extract_strided_slice %34 {offsets = [0, 64], sizes = [8, 32], strides = [1, 1]} : vector<8x128xf32> to vector<8x32xf32>
    %44 = math.tanh %43 : vector<8x32xf32>
    %45 = arith.mulf %41, %12 : vector<8x32xf32>
    %46 = arith.mulf %40, %44 : vector<8x32xf32>
    %47 = arith.addf %45, %46 : vector<8x32xf32>
    %48 = math.tanh %47 : vector<8x32xf32>
    %49 = arith.mulf %42, %48 : vector<8x32xf32>
    %cst_14 = arith.constant dense<0.000000e+00> : vector<8x128xf32>
    %50 = tpu.matmul %49, %8, %cst_14 {dimension_numbers = #tpu.dot_dimension_numbers<[1], [0], [0], [1], [0, 0, 1, 1], [], []>} : vector<8x32xf32>, vector<32x128xf32>, vector<8x128xf32> -> vector<8x128xf32>
    %51 = vector.extract_strided_slice %5 {offsets = [8, 0], sizes = [8, 128], strides = [1, 1]} : vector<64x128xf32> to vector<8x128xf32>
    %cst_15 = arith.constant dense<0.000000e+00> : vector<8x128xf32>
    %52 = tpu.matmul %31, %6, %cst_15 {dimension_numbers = #tpu.dot_dimension_numbers<[1], [0], [0], [1], [0, 0, 1, 1], [], []>} : vector<8x32xf32>, vector<32x128xf32>, vector<8x128xf32> -> vector<8x128xf32>
    %53 = arith.addf %51, %52 : vector<8x128xf32>
    %54 = arith.negf %53 : vector<8x128xf32>
    %55 = math.exp %54 : vector<8x128xf32>
    %cst_16 = arith.constant 1.000000e+00 : f32
    %56 = vector.broadcast %cst_16 : f32 to vector<8x128xf32>
    %57 = arith.addf %56, %55 : vector<8x128xf32>
    %58 = arith.divf %56, %57 : vector<8x128xf32>
    %59 = vector.extract_strided_slice %58 {offsets = [0, 0], sizes = [8, 32], strides = [1, 1]} : vector<8x128xf32> to vector<8x32xf32>
    %60 = vector.extract_strided_slice %58 {offsets = [0, 32], sizes = [8, 32], strides = [1, 1]} : vector<8x128xf32> to vector<8x32xf32>
    %61 = vector.extract_strided_slice %58 {offsets = [0, 96], sizes = [8, 32], strides = [1, 1]} : vector<8x128xf32> to vector<8x32xf32>
    %62 = vector.extract_strided_slice %53 {offsets = [0, 64], sizes = [8, 32], strides = [1, 1]} : vector<8x128xf32> to vector<8x32xf32>
    %63 = math.tanh %62 : vector<8x32xf32>
    %64 = arith.mulf %60, %29 : vector<8x32xf32>
    %65 = arith.mulf %59, %63 : vector<8x32xf32>
    %66 = arith.addf %64, %65 : vector<8x32xf32>
    %67 = math.tanh %66 : vector<8x32xf32>
    %68 = arith.mulf %61, %67 : vector<8x32xf32>
    %cst_17 = arith.constant dense<0.000000e+00> : vector<8x128xf32>
    %69 = tpu.matmul %68, %7, %cst_17 {dimension_numbers = #tpu.dot_dimension_numbers<[1], [0], [0], [1], [0, 0, 1, 1], [], []>} : vector<8x32xf32>, vector<32x128xf32>, vector<8x128xf32> -> vector<8x128xf32>
    %70 = arith.addf %69, %50 : vector<8x128xf32>
    %71 = arith.addf %70, %11 : vector<8x128xf32>
    %72 = arith.negf %71 : vector<8x128xf32>
    %73 = math.exp %72 : vector<8x128xf32>
    %cst_18 = arith.constant 1.000000e+00 : f32
    %74 = vector.broadcast %cst_18 : f32 to vector<8x128xf32>
    %75 = arith.addf %74, %73 : vector<8x128xf32>
    %76 = arith.divf %74, %75 : vector<8x128xf32>
    %77 = vector.extract_strided_slice %76 {offsets = [0, 0], sizes = [8, 32], strides = [1, 1]} : vector<8x128xf32> to vector<8x32xf32>
    %78 = vector.extract_strided_slice %76 {offsets = [0, 32], sizes = [8, 32], strides = [1, 1]} : vector<8x128xf32> to vector<8x32xf32>
    %79 = vector.extract_strided_slice %76 {offsets = [0, 96], sizes = [8, 32], strides = [1, 1]} : vector<8x128xf32> to vector<8x32xf32>
    %80 = vector.extract_strided_slice %71 {offsets = [0, 64], sizes = [8, 32], strides = [1, 1]} : vector<8x128xf32> to vector<8x32xf32>
    %81 = math.tanh %80 : vector<8x32xf32>
    %82 = arith.mulf %78, %47 : vector<8x32xf32>
    %83 = arith.mulf %77, %81 : vector<8x32xf32>
    %84 = arith.addf %82, %83 : vector<8x32xf32>
    %85 = math.tanh %84 : vector<8x32xf32>
    %86 = arith.mulf %79, %85 : vector<8x32xf32>
    %cst_19 = arith.constant dense<0.000000e+00> : vector<8x128xf32>
    %87 = tpu.matmul %86, %8, %cst_19 {dimension_numbers = #tpu.dot_dimension_numbers<[1], [0], [0], [1], [0, 0, 1, 1], [], []>} : vector<8x32xf32>, vector<32x128xf32>, vector<8x128xf32> -> vector<8x128xf32>
    %88 = vector.extract_strided_slice %5 {offsets = [16, 0], sizes = [8, 128], strides = [1, 1]} : vector<64x128xf32> to vector<8x128xf32>
    %cst_20 = arith.constant dense<0.000000e+00> : vector<8x128xf32>
    %89 = tpu.matmul %68, %6, %cst_20 {dimension_numbers = #tpu.dot_dimension_numbers<[1], [0], [0], [1], [0, 0, 1, 1], [], []>} : vector<8x32xf32>, vector<32x128xf32>, vector<8x128xf32> -> vector<8x128xf32>
    %90 = arith.addf %88, %89 : vector<8x128xf32>
    %91 = arith.negf %90 : vector<8x128xf32>
    %92 = math.exp %91 : vector<8x128xf32>
    %cst_21 = arith.constant 1.000000e+00 : f32
    %93 = vector.broadcast %cst_21 : f32 to vector<8x128xf32>
    %94 = arith.addf %93, %92 : vector<8x128xf32>
    %95 = arith.divf %93, %94 : vector<8x128xf32>
    %96 = vector.extract_strided_slice %95 {offsets = [0, 0], sizes = [8, 32], strides = [1, 1]} : vector<8x128xf32> to vector<8x32xf32>
    %97 = vector.extract_strided_slice %95 {offsets = [0, 32], sizes = [8, 32], strides = [1, 1]} : vector<8x128xf32> to vector<8x32xf32>
    %98 = vector.extract_strided_slice %95 {offsets = [0, 96], sizes = [8, 32], strides = [1, 1]} : vector<8x128xf32> to vector<8x32xf32>
    %99 = vector.extract_strided_slice %90 {offsets = [0, 64], sizes = [8, 32], strides = [1, 1]} : vector<8x128xf32> to vector<8x32xf32>
    %100 = math.tanh %99 : vector<8x32xf32>
    %101 = arith.mulf %97, %66 : vector<8x32xf32>
    %102 = arith.mulf %96, %100 : vector<8x32xf32>
    %103 = arith.addf %101, %102 : vector<8x32xf32>
    %104 = math.tanh %103 : vector<8x32xf32>
    %105 = arith.mulf %98, %104 : vector<8x32xf32>
    %cst_22 = arith.constant dense<0.000000e+00> : vector<8x128xf32>
    %106 = tpu.matmul %105, %7, %cst_22 {dimension_numbers = #tpu.dot_dimension_numbers<[1], [0], [0], [1], [0, 0, 1, 1], [], []>} : vector<8x32xf32>, vector<32x128xf32>, vector<8x128xf32> -> vector<8x128xf32>
    %107 = arith.addf %106, %87 : vector<8x128xf32>
    %108 = arith.addf %107, %11 : vector<8x128xf32>
    %109 = arith.negf %108 : vector<8x128xf32>
    %110 = math.exp %109 : vector<8x128xf32>
    %cst_23 = arith.constant 1.000000e+00 : f32
    %111 = vector.broadcast %cst_23 : f32 to vector<8x128xf32>
    %112 = arith.addf %111, %110 : vector<8x128xf32>
    %113 = arith.divf %111, %112 : vector<8x128xf32>
    %114 = vector.extract_strided_slice %113 {offsets = [0, 0], sizes = [8, 32], strides = [1, 1]} : vector<8x128xf32> to vector<8x32xf32>
    %115 = vector.extract_strided_slice %113 {offsets = [0, 32], sizes = [8, 32], strides = [1, 1]} : vector<8x128xf32> to vector<8x32xf32>
    %116 = vector.extract_strided_slice %113 {offsets = [0, 96], sizes = [8, 32], strides = [1, 1]} : vector<8x128xf32> to vector<8x32xf32>
    %117 = vector.extract_strided_slice %108 {offsets = [0, 64], sizes = [8, 32], strides = [1, 1]} : vector<8x128xf32> to vector<8x32xf32>
    %118 = math.tanh %117 : vector<8x32xf32>
    %119 = arith.mulf %115, %84 : vector<8x32xf32>
    %120 = arith.mulf %114, %118 : vector<8x32xf32>
    %121 = arith.addf %119, %120 : vector<8x32xf32>
    %122 = math.tanh %121 : vector<8x32xf32>
    %123 = arith.mulf %116, %122 : vector<8x32xf32>
    %cst_24 = arith.constant dense<0.000000e+00> : vector<8x128xf32>
    %124 = tpu.matmul %123, %8, %cst_24 {dimension_numbers = #tpu.dot_dimension_numbers<[1], [0], [0], [1], [0, 0, 1, 1], [], []>} : vector<8x32xf32>, vector<32x128xf32>, vector<8x128xf32> -> vector<8x128xf32>
    %125 = vector.extract_strided_slice %5 {offsets = [24, 0], sizes = [8, 128], strides = [1, 1]} : vector<64x128xf32> to vector<8x128xf32>
    %cst_25 = arith.constant dense<0.000000e+00> : vector<8x128xf32>
    %126 = tpu.matmul %105, %6, %cst_25 {dimension_numbers = #tpu.dot_dimension_numbers<[1], [0], [0], [1], [0, 0, 1, 1], [], []>} : vector<8x32xf32>, vector<32x128xf32>, vector<8x128xf32> -> vector<8x128xf32>
    %127 = arith.addf %125, %126 : vector<8x128xf32>
    %128 = arith.negf %127 : vector<8x128xf32>
    %129 = math.exp %128 : vector<8x128xf32>
    %cst_26 = arith.constant 1.000000e+00 : f32
    %130 = vector.broadcast %cst_26 : f32 to vector<8x128xf32>
    %131 = arith.addf %130, %129 : vector<8x128xf32>
    %132 = arith.divf %130, %131 : vector<8x128xf32>
    %133 = vector.extract_strided_slice %132 {offsets = [0, 0], sizes = [8, 32], strides = [1, 1]} : vector<8x128xf32> to vector<8x32xf32>
    %134 = vector.extract_strided_slice %132 {offsets = [0, 32], sizes = [8, 32], strides = [1, 1]} : vector<8x128xf32> to vector<8x32xf32>
    %135 = vector.extract_strided_slice %132 {offsets = [0, 96], sizes = [8, 32], strides = [1, 1]} : vector<8x128xf32> to vector<8x32xf32>
    %136 = vector.extract_strided_slice %127 {offsets = [0, 64], sizes = [8, 32], strides = [1, 1]} : vector<8x128xf32> to vector<8x32xf32>
    %137 = math.tanh %136 : vector<8x32xf32>
    %138 = arith.mulf %134, %103 : vector<8x32xf32>
    %139 = arith.mulf %133, %137 : vector<8x32xf32>
    %140 = arith.addf %138, %139 : vector<8x32xf32>
    %141 = math.tanh %140 : vector<8x32xf32>
    %142 = arith.mulf %135, %141 : vector<8x32xf32>
    %cst_27 = arith.constant dense<0.000000e+00> : vector<8x128xf32>
    %143 = tpu.matmul %142, %7, %cst_27 {dimension_numbers = #tpu.dot_dimension_numbers<[1], [0], [0], [1], [0, 0, 1, 1], [], []>} : vector<8x32xf32>, vector<32x128xf32>, vector<8x128xf32> -> vector<8x128xf32>
    %144 = arith.addf %143, %124 : vector<8x128xf32>
    %145 = arith.addf %144, %11 : vector<8x128xf32>
    %146 = arith.negf %145 : vector<8x128xf32>
    %147 = math.exp %146 : vector<8x128xf32>
    %cst_28 = arith.constant 1.000000e+00 : f32
    %148 = vector.broadcast %cst_28 : f32 to vector<8x128xf32>
    %149 = arith.addf %148, %147 : vector<8x128xf32>
    %150 = arith.divf %148, %149 : vector<8x128xf32>
    %151 = vector.extract_strided_slice %150 {offsets = [0, 0], sizes = [8, 32], strides = [1, 1]} : vector<8x128xf32> to vector<8x32xf32>
    %152 = vector.extract_strided_slice %150 {offsets = [0, 32], sizes = [8, 32], strides = [1, 1]} : vector<8x128xf32> to vector<8x32xf32>
    %153 = vector.extract_strided_slice %150 {offsets = [0, 96], sizes = [8, 32], strides = [1, 1]} : vector<8x128xf32> to vector<8x32xf32>
    %154 = vector.extract_strided_slice %145 {offsets = [0, 64], sizes = [8, 32], strides = [1, 1]} : vector<8x128xf32> to vector<8x32xf32>
    %155 = math.tanh %154 : vector<8x32xf32>
    %156 = arith.mulf %152, %121 : vector<8x32xf32>
    %157 = arith.mulf %151, %155 : vector<8x32xf32>
    %158 = arith.addf %156, %157 : vector<8x32xf32>
    %159 = math.tanh %158 : vector<8x32xf32>
    %160 = arith.mulf %153, %159 : vector<8x32xf32>
    %cst_29 = arith.constant dense<0.000000e+00> : vector<8x128xf32>
    %161 = tpu.matmul %160, %8, %cst_29 {dimension_numbers = #tpu.dot_dimension_numbers<[1], [0], [0], [1], [0, 0, 1, 1], [], []>} : vector<8x32xf32>, vector<32x128xf32>, vector<8x128xf32> -> vector<8x128xf32>
    %162 = vector.extract_strided_slice %5 {offsets = [32, 0], sizes = [8, 128], strides = [1, 1]} : vector<64x128xf32> to vector<8x128xf32>
    %cst_30 = arith.constant dense<0.000000e+00> : vector<8x128xf32>
    %163 = tpu.matmul %142, %6, %cst_30 {dimension_numbers = #tpu.dot_dimension_numbers<[1], [0], [0], [1], [0, 0, 1, 1], [], []>} : vector<8x32xf32>, vector<32x128xf32>, vector<8x128xf32> -> vector<8x128xf32>
    %164 = arith.addf %162, %163 : vector<8x128xf32>
    %165 = arith.negf %164 : vector<8x128xf32>
    %166 = math.exp %165 : vector<8x128xf32>
    %cst_31 = arith.constant 1.000000e+00 : f32
    %167 = vector.broadcast %cst_31 : f32 to vector<8x128xf32>
    %168 = arith.addf %167, %166 : vector<8x128xf32>
    %169 = arith.divf %167, %168 : vector<8x128xf32>
    %170 = vector.extract_strided_slice %169 {offsets = [0, 0], sizes = [8, 32], strides = [1, 1]} : vector<8x128xf32> to vector<8x32xf32>
    %171 = vector.extract_strided_slice %169 {offsets = [0, 32], sizes = [8, 32], strides = [1, 1]} : vector<8x128xf32> to vector<8x32xf32>
    %172 = vector.extract_strided_slice %169 {offsets = [0, 96], sizes = [8, 32], strides = [1, 1]} : vector<8x128xf32> to vector<8x32xf32>
    %173 = vector.extract_strided_slice %164 {offsets = [0, 64], sizes = [8, 32], strides = [1, 1]} : vector<8x128xf32> to vector<8x32xf32>
    %174 = math.tanh %173 : vector<8x32xf32>
    %175 = arith.mulf %171, %140 : vector<8x32xf32>
    %176 = arith.mulf %170, %174 : vector<8x32xf32>
    %177 = arith.addf %175, %176 : vector<8x32xf32>
    %178 = math.tanh %177 : vector<8x32xf32>
    %179 = arith.mulf %172, %178 : vector<8x32xf32>
    %cst_32 = arith.constant dense<0.000000e+00> : vector<8x128xf32>
    %180 = tpu.matmul %179, %7, %cst_32 {dimension_numbers = #tpu.dot_dimension_numbers<[1], [0], [0], [1], [0, 0, 1, 1], [], []>} : vector<8x32xf32>, vector<32x128xf32>, vector<8x128xf32> -> vector<8x128xf32>
    %181 = arith.addf %180, %161 : vector<8x128xf32>
    %182 = arith.addf %181, %11 : vector<8x128xf32>
    %183 = arith.negf %182 : vector<8x128xf32>
    %184 = math.exp %183 : vector<8x128xf32>
    %cst_33 = arith.constant 1.000000e+00 : f32
    %185 = vector.broadcast %cst_33 : f32 to vector<8x128xf32>
    %186 = arith.addf %185, %184 : vector<8x128xf32>
    %187 = arith.divf %185, %186 : vector<8x128xf32>
    %188 = vector.extract_strided_slice %187 {offsets = [0, 0], sizes = [8, 32], strides = [1, 1]} : vector<8x128xf32> to vector<8x32xf32>
    %189 = vector.extract_strided_slice %187 {offsets = [0, 32], sizes = [8, 32], strides = [1, 1]} : vector<8x128xf32> to vector<8x32xf32>
    %190 = vector.extract_strided_slice %187 {offsets = [0, 96], sizes = [8, 32], strides = [1, 1]} : vector<8x128xf32> to vector<8x32xf32>
    %191 = vector.extract_strided_slice %182 {offsets = [0, 64], sizes = [8, 32], strides = [1, 1]} : vector<8x128xf32> to vector<8x32xf32>
    %192 = math.tanh %191 : vector<8x32xf32>
    %193 = arith.mulf %189, %158 : vector<8x32xf32>
    %194 = arith.mulf %188, %192 : vector<8x32xf32>
    %195 = arith.addf %193, %194 : vector<8x32xf32>
    %196 = math.tanh %195 : vector<8x32xf32>
    %197 = arith.mulf %190, %196 : vector<8x32xf32>
    %cst_34 = arith.constant dense<0.000000e+00> : vector<8x128xf32>
    %198 = tpu.matmul %197, %8, %cst_34 {dimension_numbers = #tpu.dot_dimension_numbers<[1], [0], [0], [1], [0, 0, 1, 1], [], []>} : vector<8x32xf32>, vector<32x128xf32>, vector<8x128xf32> -> vector<8x128xf32>
    %199 = vector.extract_strided_slice %5 {offsets = [40, 0], sizes = [8, 128], strides = [1, 1]} : vector<64x128xf32> to vector<8x128xf32>
    %cst_35 = arith.constant dense<0.000000e+00> : vector<8x128xf32>
    %200 = tpu.matmul %179, %6, %cst_35 {dimension_numbers = #tpu.dot_dimension_numbers<[1], [0], [0], [1], [0, 0, 1, 1], [], []>} : vector<8x32xf32>, vector<32x128xf32>, vector<8x128xf32> -> vector<8x128xf32>
    %201 = arith.addf %199, %200 : vector<8x128xf32>
    %202 = arith.negf %201 : vector<8x128xf32>
    %203 = math.exp %202 : vector<8x128xf32>
    %cst_36 = arith.constant 1.000000e+00 : f32
    %204 = vector.broadcast %cst_36 : f32 to vector<8x128xf32>
    %205 = arith.addf %204, %203 : vector<8x128xf32>
    %206 = arith.divf %204, %205 : vector<8x128xf32>
    %207 = vector.extract_strided_slice %206 {offsets = [0, 0], sizes = [8, 32], strides = [1, 1]} : vector<8x128xf32> to vector<8x32xf32>
    %208 = vector.extract_strided_slice %206 {offsets = [0, 32], sizes = [8, 32], strides = [1, 1]} : vector<8x128xf32> to vector<8x32xf32>
    %209 = vector.extract_strided_slice %206 {offsets = [0, 96], sizes = [8, 32], strides = [1, 1]} : vector<8x128xf32> to vector<8x32xf32>
    %210 = vector.extract_strided_slice %201 {offsets = [0, 64], sizes = [8, 32], strides = [1, 1]} : vector<8x128xf32> to vector<8x32xf32>
    %211 = math.tanh %210 : vector<8x32xf32>
    %212 = arith.mulf %208, %177 : vector<8x32xf32>
    %213 = arith.mulf %207, %211 : vector<8x32xf32>
    %214 = arith.addf %212, %213 : vector<8x32xf32>
    %215 = math.tanh %214 : vector<8x32xf32>
    %216 = arith.mulf %209, %215 : vector<8x32xf32>
    %cst_37 = arith.constant dense<0.000000e+00> : vector<8x128xf32>
    %217 = tpu.matmul %216, %7, %cst_37 {dimension_numbers = #tpu.dot_dimension_numbers<[1], [0], [0], [1], [0, 0, 1, 1], [], []>} : vector<8x32xf32>, vector<32x128xf32>, vector<8x128xf32> -> vector<8x128xf32>
    %218 = arith.addf %217, %198 : vector<8x128xf32>
    %219 = arith.addf %218, %11 : vector<8x128xf32>
    %220 = arith.negf %219 : vector<8x128xf32>
    %221 = math.exp %220 : vector<8x128xf32>
    %cst_38 = arith.constant 1.000000e+00 : f32
    %222 = vector.broadcast %cst_38 : f32 to vector<8x128xf32>
    %223 = arith.addf %222, %221 : vector<8x128xf32>
    %224 = arith.divf %222, %223 : vector<8x128xf32>
    %225 = vector.extract_strided_slice %224 {offsets = [0, 0], sizes = [8, 32], strides = [1, 1]} : vector<8x128xf32> to vector<8x32xf32>
    %226 = vector.extract_strided_slice %224 {offsets = [0, 32], sizes = [8, 32], strides = [1, 1]} : vector<8x128xf32> to vector<8x32xf32>
    %227 = vector.extract_strided_slice %224 {offsets = [0, 96], sizes = [8, 32], strides = [1, 1]} : vector<8x128xf32> to vector<8x32xf32>
    %228 = vector.extract_strided_slice %219 {offsets = [0, 64], sizes = [8, 32], strides = [1, 1]} : vector<8x128xf32> to vector<8x32xf32>
    %229 = math.tanh %228 : vector<8x32xf32>
    %230 = arith.mulf %226, %195 : vector<8x32xf32>
    %231 = arith.mulf %225, %229 : vector<8x32xf32>
    %232 = arith.addf %230, %231 : vector<8x32xf32>
    %233 = math.tanh %232 : vector<8x32xf32>
    %234 = arith.mulf %227, %233 : vector<8x32xf32>
    %cst_39 = arith.constant dense<0.000000e+00> : vector<8x128xf32>
    %235 = tpu.matmul %234, %8, %cst_39 {dimension_numbers = #tpu.dot_dimension_numbers<[1], [0], [0], [1], [0, 0, 1, 1], [], []>} : vector<8x32xf32>, vector<32x128xf32>, vector<8x128xf32> -> vector<8x128xf32>
    %236 = vector.extract_strided_slice %5 {offsets = [48, 0], sizes = [8, 128], strides = [1, 1]} : vector<64x128xf32> to vector<8x128xf32>
    %cst_40 = arith.constant dense<0.000000e+00> : vector<8x128xf32>
    %237 = tpu.matmul %216, %6, %cst_40 {dimension_numbers = #tpu.dot_dimension_numbers<[1], [0], [0], [1], [0, 0, 1, 1], [], []>} : vector<8x32xf32>, vector<32x128xf32>, vector<8x128xf32> -> vector<8x128xf32>
    %238 = arith.addf %236, %237 : vector<8x128xf32>
    %239 = arith.negf %238 : vector<8x128xf32>
    %240 = math.exp %239 : vector<8x128xf32>
    %cst_41 = arith.constant 1.000000e+00 : f32
    %241 = vector.broadcast %cst_41 : f32 to vector<8x128xf32>
    %242 = arith.addf %241, %240 : vector<8x128xf32>
    %243 = arith.divf %241, %242 : vector<8x128xf32>
    %244 = vector.extract_strided_slice %243 {offsets = [0, 0], sizes = [8, 32], strides = [1, 1]} : vector<8x128xf32> to vector<8x32xf32>
    %245 = vector.extract_strided_slice %243 {offsets = [0, 32], sizes = [8, 32], strides = [1, 1]} : vector<8x128xf32> to vector<8x32xf32>
    %246 = vector.extract_strided_slice %243 {offsets = [0, 96], sizes = [8, 32], strides = [1, 1]} : vector<8x128xf32> to vector<8x32xf32>
    %247 = vector.extract_strided_slice %238 {offsets = [0, 64], sizes = [8, 32], strides = [1, 1]} : vector<8x128xf32> to vector<8x32xf32>
    %248 = math.tanh %247 : vector<8x32xf32>
    %249 = arith.mulf %245, %214 : vector<8x32xf32>
    %250 = arith.mulf %244, %248 : vector<8x32xf32>
    %251 = arith.addf %249, %250 : vector<8x32xf32>
    %252 = math.tanh %251 : vector<8x32xf32>
    %253 = arith.mulf %246, %252 : vector<8x32xf32>
    %cst_42 = arith.constant dense<0.000000e+00> : vector<8x128xf32>
    %254 = tpu.matmul %253, %7, %cst_42 {dimension_numbers = #tpu.dot_dimension_numbers<[1], [0], [0], [1], [0, 0, 1, 1], [], []>} : vector<8x32xf32>, vector<32x128xf32>, vector<8x128xf32> -> vector<8x128xf32>
    %255 = arith.addf %254, %235 : vector<8x128xf32>
    %256 = arith.addf %255, %11 : vector<8x128xf32>
    %257 = arith.negf %256 : vector<8x128xf32>
    %258 = math.exp %257 : vector<8x128xf32>
    %cst_43 = arith.constant 1.000000e+00 : f32
    %259 = vector.broadcast %cst_43 : f32 to vector<8x128xf32>
    %260 = arith.addf %259, %258 : vector<8x128xf32>
    %261 = arith.divf %259, %260 : vector<8x128xf32>
    %262 = vector.extract_strided_slice %261 {offsets = [0, 0], sizes = [8, 32], strides = [1, 1]} : vector<8x128xf32> to vector<8x32xf32>
    %263 = vector.extract_strided_slice %261 {offsets = [0, 32], sizes = [8, 32], strides = [1, 1]} : vector<8x128xf32> to vector<8x32xf32>
    %264 = vector.extract_strided_slice %261 {offsets = [0, 96], sizes = [8, 32], strides = [1, 1]} : vector<8x128xf32> to vector<8x32xf32>
    %265 = vector.extract_strided_slice %256 {offsets = [0, 64], sizes = [8, 32], strides = [1, 1]} : vector<8x128xf32> to vector<8x32xf32>
    %266 = math.tanh %265 : vector<8x32xf32>
    %267 = arith.mulf %263, %232 : vector<8x32xf32>
    %268 = arith.mulf %262, %266 : vector<8x32xf32>
    %269 = arith.addf %267, %268 : vector<8x32xf32>
    %270 = math.tanh %269 : vector<8x32xf32>
    %271 = arith.mulf %264, %270 : vector<8x32xf32>
    %cst_44 = arith.constant dense<0.000000e+00> : vector<8x128xf32>
    %272 = tpu.matmul %271, %8, %cst_44 {dimension_numbers = #tpu.dot_dimension_numbers<[1], [0], [0], [1], [0, 0, 1, 1], [], []>} : vector<8x32xf32>, vector<32x128xf32>, vector<8x128xf32> -> vector<8x128xf32>
    %273 = vector.extract_strided_slice %5 {offsets = [56, 0], sizes = [8, 128], strides = [1, 1]} : vector<64x128xf32> to vector<8x128xf32>
    %cst_45 = arith.constant dense<0.000000e+00> : vector<8x128xf32>
    %274 = tpu.matmul %253, %6, %cst_45 {dimension_numbers = #tpu.dot_dimension_numbers<[1], [0], [0], [1], [0, 0, 1, 1], [], []>} : vector<8x32xf32>, vector<32x128xf32>, vector<8x128xf32> -> vector<8x128xf32>
    %275 = arith.addf %273, %274 : vector<8x128xf32>
    %276 = arith.negf %275 : vector<8x128xf32>
    %277 = math.exp %276 : vector<8x128xf32>
    %cst_46 = arith.constant 1.000000e+00 : f32
    %278 = vector.broadcast %cst_46 : f32 to vector<8x128xf32>
    %279 = arith.addf %278, %277 : vector<8x128xf32>
    %280 = arith.divf %278, %279 : vector<8x128xf32>
    %281 = vector.extract_strided_slice %280 {offsets = [0, 0], sizes = [8, 32], strides = [1, 1]} : vector<8x128xf32> to vector<8x32xf32>
    %282 = vector.extract_strided_slice %280 {offsets = [0, 32], sizes = [8, 32], strides = [1, 1]} : vector<8x128xf32> to vector<8x32xf32>
    %283 = vector.extract_strided_slice %280 {offsets = [0, 96], sizes = [8, 32], strides = [1, 1]} : vector<8x128xf32> to vector<8x32xf32>
    %284 = vector.extract_strided_slice %275 {offsets = [0, 64], sizes = [8, 32], strides = [1, 1]} : vector<8x128xf32> to vector<8x32xf32>
    %285 = math.tanh %284 : vector<8x32xf32>
    %286 = arith.mulf %282, %251 : vector<8x32xf32>
    %287 = arith.mulf %281, %285 : vector<8x32xf32>
    %288 = arith.addf %286, %287 : vector<8x32xf32>
    %289 = math.tanh %288 : vector<8x32xf32>
    %290 = arith.mulf %283, %289 : vector<8x32xf32>
    %cst_47 = arith.constant dense<0.000000e+00> : vector<8x128xf32>
    %291 = tpu.matmul %290, %7, %cst_47 {dimension_numbers = #tpu.dot_dimension_numbers<[1], [0], [0], [1], [0, 0, 1, 1], [], []>} : vector<8x32xf32>, vector<32x128xf32>, vector<8x128xf32> -> vector<8x128xf32>
    %292 = arith.addf %291, %272 : vector<8x128xf32>
    %293 = arith.addf %292, %11 : vector<8x128xf32>
    %294 = arith.negf %293 : vector<8x128xf32>
    %295 = math.exp %294 : vector<8x128xf32>
    %cst_48 = arith.constant 1.000000e+00 : f32
    %296 = vector.broadcast %cst_48 : f32 to vector<8x128xf32>
    %297 = arith.addf %296, %295 : vector<8x128xf32>
    %298 = arith.divf %296, %297 : vector<8x128xf32>
    %299 = vector.extract_strided_slice %298 {offsets = [0, 0], sizes = [8, 32], strides = [1, 1]} : vector<8x128xf32> to vector<8x32xf32>
    %300 = vector.extract_strided_slice %298 {offsets = [0, 32], sizes = [8, 32], strides = [1, 1]} : vector<8x128xf32> to vector<8x32xf32>
    %301 = vector.extract_strided_slice %298 {offsets = [0, 96], sizes = [8, 32], strides = [1, 1]} : vector<8x128xf32> to vector<8x32xf32>
    %302 = vector.extract_strided_slice %293 {offsets = [0, 64], sizes = [8, 32], strides = [1, 1]} : vector<8x128xf32> to vector<8x32xf32>
    %303 = math.tanh %302 : vector<8x32xf32>
    %304 = arith.mulf %300, %269 : vector<8x32xf32>
    %305 = arith.mulf %299, %303 : vector<8x32xf32>
    %306 = arith.addf %304, %305 : vector<8x32xf32>
    %307 = math.tanh %306 : vector<8x32xf32>
    %308 = arith.mulf %301, %307 : vector<8x32xf32>
    %c152 = arith.constant 152 : index
    %c0_49 = arith.constant 0 : index
    %309 = vector.load %arg2[%c152, %c0_49] : memref<376x128xf32, #tpu.memory_space<vmem>>, vector<32x128xf32>
    %cst_50 = arith.constant dense<0.000000e+00> : vector<8x128xf32>
    %310 = tpu.matmul %308, %309, %cst_50 {dimension_numbers = #tpu.dot_dimension_numbers<[1], [0], [0], [1], [0, 0, 1, 1], [], []>} : vector<8x32xf32>, vector<32x128xf32>, vector<8x128xf32> -> vector<8x128xf32>
    %c184 = arith.constant 184 : index
    %c0_51 = arith.constant 0 : index
    %311 = vector.load %arg2[%c184, %c0_51] : memref<376x128xf32, #tpu.memory_space<vmem>>, vector<1x128xf32>
    %312 = vector.broadcast %311 : vector<1x128xf32> to vector<8x128xf32>
    %313 = arith.addf %310, %312 : vector<8x128xf32>
    %314 = vector.extract_strided_slice %313 {offsets = [0, 0], sizes = [8, 16], strides = [1, 1]} : vector<8x128xf32> to vector<8x16xf32>
    %315 = vector.extract_strided_slice %313 {offsets = [0, 16], sizes = [8, 16], strides = [1, 1]} : vector<8x128xf32> to vector<8x16xf32>
    %cst_52 = arith.constant 5.000000e-01 : f32
    %316 = vector.broadcast %cst_52 : f32 to vector<8x16xf32>
    %317 = arith.mulf %316, %315 : vector<8x16xf32>
    %318 = math.exp %317 : vector<8x16xf32>
    %c0_53 = arith.constant 0 : index
    %c0_54 = arith.constant 0 : index
    %319 = vector.load %arg1[%c0_53, %c0_54] : memref<8x16xf32, #tpu.memory_space<vmem>>, vector<8x16xf32>
    %320 = arith.mulf %318, %319 : vector<8x16xf32>
    %321 = arith.addf %314, %320 : vector<8x16xf32>
    %c192 = arith.constant 192 : index
    %c0_55 = arith.constant 0 : index
    %322 = vector.load %arg2[%c192, %c0_55] : memref<376x128xf32, #tpu.memory_space<vmem>>, vector<16x128xf32>
    %cst_56 = arith.constant dense<0.000000e+00> : vector<8x128xf32>
    %323 = tpu.matmul %321, %322, %cst_56 {dimension_numbers = #tpu.dot_dimension_numbers<[1], [0], [0], [1], [0, 0, 1, 1], [], []>} : vector<8x16xf32>, vector<16x128xf32>, vector<8x128xf32> -> vector<8x128xf32>
    %c208 = arith.constant 208 : index
    %c0_57 = arith.constant 0 : index
    %324 = vector.load %arg2[%c208, %c0_57] : memref<376x128xf32, #tpu.memory_space<vmem>>, vector<1x128xf32>
    %325 = vector.broadcast %324 : vector<1x128xf32> to vector<8x128xf32>
    %326 = arith.addf %323, %325 : vector<8x128xf32>
    %327 = vector.extract_strided_slice %326 {offsets = [0, 0], sizes = [8, 32], strides = [1, 1]} : vector<8x128xf32> to vector<8x32xf32>
    %328 = vector.extract_strided_slice %0 {offsets = [56, 0], sizes = [8, 34], strides = [1, 1]} : vector<64x34xf32> to vector<8x34xf32>
    %c216 = arith.constant 216 : index
    %c0_58 = arith.constant 0 : index
    %329 = vector.load %arg2[%c216, %c0_58] : memref<376x128xf32, #tpu.memory_space<vmem>>, vector<34x128xf32>
    %cst_59 = arith.constant dense<0.000000e+00> : vector<8x128xf32>
    %330 = tpu.matmul %328, %329, %cst_59 {dimension_numbers = #tpu.dot_dimension_numbers<[1], [0], [0], [1], [0, 0, 1, 1], [], []>} : vector<8x34xf32>, vector<34x128xf32>, vector<8x128xf32> -> vector<8x128xf32>
    %c256 = arith.constant 256 : index
    %c0_60 = arith.constant 0 : index
    %331 = vector.load %arg2[%c256, %c0_60] : memref<376x128xf32, #tpu.memory_space<vmem>>, vector<32x128xf32>
    %cst_61 = arith.constant dense<0.000000e+00> : vector<8x128xf32>
    %332 = tpu.matmul %327, %331, %cst_61 {dimension_numbers = #tpu.dot_dimension_numbers<[1], [0], [0], [1], [0, 0, 1, 1], [], []>} : vector<8x32xf32>, vector<32x128xf32>, vector<8x128xf32> -> vector<8x128xf32>
    %333 = arith.addf %330, %332 : vector<8x128xf32>
    %c288 = arith.constant 288 : index
    %c0_62 = arith.constant 0 : index
    %334 = vector.load %arg2[%c288, %c0_62] : memref<376x128xf32, #tpu.memory_space<vmem>>, vector<1x128xf32>
    %335 = vector.shape_cast %334 : vector<1x128xf32> to vector<1x128xf32>
    %336 = vector.broadcast %335 : vector<1x128xf32> to vector<8x128xf32>
    %337 = arith.addf %333, %336 : vector<8x128xf32>
    %338 = arith.negf %337 : vector<8x128xf32>
    %339 = math.exp %338 : vector<8x128xf32>
    %cst_63 = arith.constant 1.000000e+00 : f32
    %340 = vector.broadcast %cst_63 : f32 to vector<8x128xf32>
    %341 = arith.addf %340, %339 : vector<8x128xf32>
    %342 = arith.divf %340, %341 : vector<8x128xf32>
    %343 = vector.extract_strided_slice %342 {offsets = [0, 0], sizes = [8, 32], strides = [1, 1]} : vector<8x128xf32> to vector<8x32xf32>
    %344 = vector.extract_strided_slice %342 {offsets = [0, 32], sizes = [8, 32], strides = [1, 1]} : vector<8x128xf32> to vector<8x32xf32>
    %345 = vector.extract_strided_slice %342 {offsets = [0, 96], sizes = [8, 32], strides = [1, 1]} : vector<8x128xf32> to vector<8x32xf32>
    %346 = vector.extract_strided_slice %337 {offsets = [0, 64], sizes = [8, 32], strides = [1, 1]} : vector<8x128xf32> to vector<8x32xf32>
    %347 = math.tanh %346 : vector<8x32xf32>
    %348 = arith.mulf %344, %12 : vector<8x32xf32>
    %349 = arith.mulf %343, %347 : vector<8x32xf32>
    %350 = arith.addf %348, %349 : vector<8x32xf32>
    %351 = math.tanh %350 : vector<8x32xf32>
    %352 = arith.mulf %345, %351 : vector<8x32xf32>
    %c296 = arith.constant 296 : index
    %c0_64 = arith.constant 0 : index
    %353 = vector.load %arg2[%c296, %c0_64] : memref<376x128xf32, #tpu.memory_space<vmem>>, vector<32x128xf32>
    %c328 = arith.constant 328 : index
    %c0_65 = arith.constant 0 : index
    %354 = vector.load %arg2[%c328, %c0_65] : memref<376x128xf32, #tpu.memory_space<vmem>>, vector<1x128xf32>
    %355 = vector.shape_cast %354 : vector<1x128xf32> to vector<1x128xf32>
    %356 = vector.broadcast %355 : vector<1x128xf32> to vector<8x128xf32>
    %cst_66 = arith.constant dense<0.000000e+00> : vector<8x128xf32>
    %357 = tpu.matmul %352, %353, %cst_66 {dimension_numbers = #tpu.dot_dimension_numbers<[1], [0], [0], [1], [0, 0, 1, 1], [], []>} : vector<8x32xf32>, vector<32x128xf32>, vector<8x128xf32> -> vector<8x128xf32>
    %358 = arith.addf %357, %356 : vector<8x128xf32>
    %359 = arith.negf %358 : vector<8x128xf32>
    %360 = math.exp %359 : vector<8x128xf32>
    %cst_67 = arith.constant 1.000000e+00 : f32
    %361 = vector.broadcast %cst_67 : f32 to vector<8x128xf32>
    %362 = arith.addf %361, %360 : vector<8x128xf32>
    %363 = arith.divf %361, %362 : vector<8x128xf32>
    %364 = vector.extract_strided_slice %363 {offsets = [0, 0], sizes = [8, 32], strides = [1, 1]} : vector<8x128xf32> to vector<8x32xf32>
    %365 = vector.extract_strided_slice %363 {offsets = [0, 32], sizes = [8, 32], strides = [1, 1]} : vector<8x128xf32> to vector<8x32xf32>
    %366 = vector.extract_strided_slice %363 {offsets = [0, 96], sizes = [8, 32], strides = [1, 1]} : vector<8x128xf32> to vector<8x32xf32>
    %367 = vector.extract_strided_slice %358 {offsets = [0, 64], sizes = [8, 32], strides = [1, 1]} : vector<8x128xf32> to vector<8x32xf32>
    %368 = math.tanh %367 : vector<8x32xf32>
    %369 = arith.mulf %365, %350 : vector<8x32xf32>
    %370 = arith.mulf %364, %368 : vector<8x32xf32>
    %371 = arith.addf %369, %370 : vector<8x32xf32>
    %372 = math.tanh %371 : vector<8x32xf32>
    %373 = arith.mulf %366, %372 : vector<8x32xf32>
    %cst_68 = arith.constant dense<0.000000e+00> : vector<8x128xf32>
    %374 = tpu.matmul %373, %353, %cst_68 {dimension_numbers = #tpu.dot_dimension_numbers<[1], [0], [0], [1], [0, 0, 1, 1], [], []>} : vector<8x32xf32>, vector<32x128xf32>, vector<8x128xf32> -> vector<8x128xf32>
    %375 = arith.addf %374, %356 : vector<8x128xf32>
    %376 = arith.negf %375 : vector<8x128xf32>
    %377 = math.exp %376 : vector<8x128xf32>
    %cst_69 = arith.constant 1.000000e+00 : f32
    %378 = vector.broadcast %cst_69 : f32 to vector<8x128xf32>
    %379 = arith.addf %378, %377 : vector<8x128xf32>
    %380 = arith.divf %378, %379 : vector<8x128xf32>
    %381 = vector.extract_strided_slice %380 {offsets = [0, 0], sizes = [8, 32], strides = [1, 1]} : vector<8x128xf32> to vector<8x32xf32>
    %382 = vector.extract_strided_slice %380 {offsets = [0, 32], sizes = [8, 32], strides = [1, 1]} : vector<8x128xf32> to vector<8x32xf32>
    %383 = vector.extract_strided_slice %380 {offsets = [0, 96], sizes = [8, 32], strides = [1, 1]} : vector<8x128xf32> to vector<8x32xf32>
    %384 = vector.extract_strided_slice %375 {offsets = [0, 64], sizes = [8, 32], strides = [1, 1]} : vector<8x128xf32> to vector<8x32xf32>
    %385 = math.tanh %384 : vector<8x32xf32>
    %386 = arith.mulf %382, %371 : vector<8x32xf32>
    %387 = arith.mulf %381, %385 : vector<8x32xf32>
    %388 = arith.addf %386, %387 : vector<8x32xf32>
    %389 = math.tanh %388 : vector<8x32xf32>
    %390 = arith.mulf %383, %389 : vector<8x32xf32>
    %cst_70 = arith.constant dense<0.000000e+00> : vector<8x128xf32>
    %391 = tpu.matmul %390, %353, %cst_70 {dimension_numbers = #tpu.dot_dimension_numbers<[1], [0], [0], [1], [0, 0, 1, 1], [], []>} : vector<8x32xf32>, vector<32x128xf32>, vector<8x128xf32> -> vector<8x128xf32>
    %392 = arith.addf %391, %356 : vector<8x128xf32>
    %393 = arith.negf %392 : vector<8x128xf32>
    %394 = math.exp %393 : vector<8x128xf32>
    %cst_71 = arith.constant 1.000000e+00 : f32
    %395 = vector.broadcast %cst_71 : f32 to vector<8x128xf32>
    %396 = arith.addf %395, %394 : vector<8x128xf32>
    %397 = arith.divf %395, %396 : vector<8x128xf32>
    %398 = vector.extract_strided_slice %397 {offsets = [0, 0], sizes = [8, 32], strides = [1, 1]} : vector<8x128xf32> to vector<8x32xf32>
    %399 = vector.extract_strided_slice %397 {offsets = [0, 32], sizes = [8, 32], strides = [1, 1]} : vector<8x128xf32> to vector<8x32xf32>
    %400 = vector.extract_strided_slice %397 {offsets = [0, 96], sizes = [8, 32], strides = [1, 1]} : vector<8x128xf32> to vector<8x32xf32>
    %401 = vector.extract_strided_slice %392 {offsets = [0, 64], sizes = [8, 32], strides = [1, 1]} : vector<8x128xf32> to vector<8x32xf32>
    %402 = math.tanh %401 : vector<8x32xf32>
    %403 = arith.mulf %399, %388 : vector<8x32xf32>
    %404 = arith.mulf %398, %402 : vector<8x32xf32>
    %405 = arith.addf %403, %404 : vector<8x32xf32>
    %406 = math.tanh %405 : vector<8x32xf32>
    %407 = arith.mulf %400, %406 : vector<8x32xf32>
    %cst_72 = arith.constant dense<0.000000e+00> : vector<8x128xf32>
    %408 = tpu.matmul %407, %353, %cst_72 {dimension_numbers = #tpu.dot_dimension_numbers<[1], [0], [0], [1], [0, 0, 1, 1], [], []>} : vector<8x32xf32>, vector<32x128xf32>, vector<8x128xf32> -> vector<8x128xf32>
    %409 = arith.addf %408, %356 : vector<8x128xf32>
    %410 = arith.negf %409 : vector<8x128xf32>
    %411 = math.exp %410 : vector<8x128xf32>
    %cst_73 = arith.constant 1.000000e+00 : f32
    %412 = vector.broadcast %cst_73 : f32 to vector<8x128xf32>
    %413 = arith.addf %412, %411 : vector<8x128xf32>
    %414 = arith.divf %412, %413 : vector<8x128xf32>
    %415 = vector.extract_strided_slice %414 {offsets = [0, 0], sizes = [8, 32], strides = [1, 1]} : vector<8x128xf32> to vector<8x32xf32>
    %416 = vector.extract_strided_slice %414 {offsets = [0, 32], sizes = [8, 32], strides = [1, 1]} : vector<8x128xf32> to vector<8x32xf32>
    %417 = vector.extract_strided_slice %414 {offsets = [0, 96], sizes = [8, 32], strides = [1, 1]} : vector<8x128xf32> to vector<8x32xf32>
    %418 = vector.extract_strided_slice %409 {offsets = [0, 64], sizes = [8, 32], strides = [1, 1]} : vector<8x128xf32> to vector<8x32xf32>
    %419 = math.tanh %418 : vector<8x32xf32>
    %420 = arith.mulf %416, %405 : vector<8x32xf32>
    %421 = arith.mulf %415, %419 : vector<8x32xf32>
    %422 = arith.addf %420, %421 : vector<8x32xf32>
    %423 = math.tanh %422 : vector<8x32xf32>
    %424 = arith.mulf %417, %423 : vector<8x32xf32>
    %425 = tpu.concatenate %352, %373, %390, %407, %424 in 0 : vector<8x32xf32>, vector<8x32xf32>, vector<8x32xf32>, vector<8x32xf32>, vector<8x32xf32> -> vector<40x32xf32>
    %c336 = arith.constant 336 : index
    %c0_74 = arith.constant 0 : index
    %426 = vector.load %arg2[%c336, %c0_74] : memref<376x128xf32, #tpu.memory_space<vmem>>, vector<32x128xf32>
    %cst_75 = arith.constant dense<0.000000e+00> : vector<40x128xf32>
    %427 = tpu.matmul %425, %426, %cst_75 {dimension_numbers = #tpu.dot_dimension_numbers<[1], [0], [0], [1], [0, 0, 1, 1], [], []>} : vector<40x32xf32>, vector<32x128xf32>, vector<40x128xf32> -> vector<40x128xf32>
    %c368 = arith.constant 368 : index
    %c0_76 = arith.constant 0 : index
    %428 = vector.load %arg2[%c368, %c0_76] : memref<376x128xf32, #tpu.memory_space<vmem>>, vector<1x128xf32>
    %429 = vector.broadcast %428 : vector<1x128xf32> to vector<40x128xf32>
    %430 = arith.addf %427, %429 : vector<40x128xf32>
    %c0_77 = arith.constant 0 : index
    %c0_78 = arith.constant 0 : index
    %431 = vector.load %arg3[%c0_77, %c0_78] : memref<48x128xf32, #tpu.memory_space<vmem>>, vector<40x128xf32>
    tpu.vector_store %arg3[%c0_77, %c0_78], %430 {strides = array<i32>} : memref<48x128xf32, #tpu.memory_space<vmem>>, vector<40x128xf32>,
    %c40_79 = arith.constant 40 : index
    %c0_80 = arith.constant 0 : index
    %432 = vector.load %arg3[%c40_79, %c0_80] : memref<48x128xf32, #tpu.memory_space<vmem>>, vector<8x128xf32>
    tpu.vector_store %arg3[%c40_79, %c0_80], %313 {strides = array<i32>} : memref<48x128xf32, #tpu.memory_space<vmem>>, vector<8x128xf32>,
    return
  }
}

</mosaic_0001>

<llo_original>
// kernel: vae_forward.1
$region0: #{vae_forward.1}
  #allocation0 [shape = 'u32[]', space=smem, size = 0x4, offset = 0x4, fixed_abs, tag = 'smem constant byte address 0x4 - core index']
  #allocation1 [shape = 'u32[144,128]{1,0:T(1,128)}', space=vmem, size = 0x12000, scoped, tag = 'internal scratch']
  %s0 = inlined_call_operand.vmem [shape: f32[64,34], index: 0, kind: input, shape index: {}]
  %s1 = inlined_call_operand.vmem [shape: f32[8,16], index: 1, kind: input, shape index: {}]
  %s2 = inlined_call_operand.hbm [shape: f32[376,128], index: 2, kind: input, shape index: {}]
  %s3 = inlined_call_operand.vmem [shape: f32[48,128], index: 3, kind: output, shape index: {}]
  %s4 = sld [smem:[#allocation0]]
  $region26: #{vae_forward.1} parent=0
    _
  %s6 = ssub.s32 1, %s4
  %s7 = scalar_select 0, %s6, %s4
  $region1: #{vae_forward.1} parent=0
    #allocation2 [shape = 'u8[192512]{0}', space=vmem, size = 0x2f000, scoped, tag = 'input window, operand 2, single buffered']
    #allocation3 [shape = 's32[1]{0}', space=sflag, size = 0x4, scoped, tag = 'scoped memory for vae_forward.1']
    %8 = vsyncpa [#allocation3], 0
    // Predicated region
    $region2: #{vae_forward.1} parent=1 // pred_check
      _
    $region3: #{vae_forward.1} parent=1 // pred_check_branch
      %10 = sbr.rel (0) target = $region5
    $region4: #{vae_forward.1} parent=1 // pred_region
      _
    $region5: #{vae_forward.1} parent=1 // pred_fallthru
      _
    // Predicated region
    $region6: #{vae_forward.1} parent=1 // pred_check
      _
    $region7: #{vae_forward.1} parent=1 // pred_check_branch
      %12 = sbr.rel (0) target = $region9
    $region8: #{vae_forward.1} parent=1 // pred_region
      _
    $region9: #{vae_forward.1} parent=1 // pred_fallthru
      _
    // Predicated region
    $region10: #{vae_forward.1} parent=1 // pred_check
      _
    $region11: #{vae_forward.1} parent=1 // pred_check_branch
      %14 = sbr.rel (0) target = $region13
    $region12: #{vae_forward.1} parent=1 // pred_region
      %s16 = ssub.s32 6016, 6016
      %17 = vsyncadd [#allocation3], %s16
      %s18 = sshll.u32 [#allocation2], 4
      %s19 = int_to_ptr.vmem [resolvable:$true] %s18
      %24 = dma.hbm_to_vmem [thread:$0]  %s2, 6016, %s19, [#allocation3], 128, 128, 8
    $region13: #{vae_forward.1} parent=1 // pred_fallthru
      _
    // Predicated region
    $region14: #{vae_forward.1} parent=1 // pred_check
      _
    $region15: #{vae_forward.1} parent=1 // pred_check_branch
      %26 = sbr.rel (0) target = $region17
    $region16: #{vae_forward.1} parent=1 // pred_region
      %27 = dma.done [#allocation3], 6016
    $region17: #{vae_forward.1} parent=1 // pred_fallthru
      _
    %v28 = vld [vmem:[%s0] sm:$0xff]
    %v29 = vld [vmem:[%s0 + $0x8] sm:$0xff]
    %v30 = vld [vmem:[%s0 + $0x10] sm:$0xff]
    %v31 = vld [vmem:[%s0 + $0x18] sm:$0xff]
    %v32 = vld [vmem:[%s0 + $0x20] sm:$0xff]
    %v33 = vld [vmem:[%s0 + $0x28] sm:$0xff]
    %v34 = vld [vmem:[%s0 + $0x30] sm:$0xff]
    %v35 = vld [vmem:[%s0 + $0x38] sm:$0xff]
    %v36 = vld [vmem:[#allocation2] sm:$0xff]
    %v37 = vld [vmem:[#allocation2 + $0x8] sm:$0xff]
    %v38 = vld [vmem:[#allocation2 + $0x10] sm:$0xff]
    %v39 = vld [vmem:[#allocation2 + $0x18] sm:$0xff]
    %v40 = vld [vmem:[#allocation2 + $0x20] sm:$0x3]
    %v41 = vld [vmem:[#allocation2 + $0x48] sm:$0x1]
    %v42 = vlaneseq
    %v43 = vshrl.u32 %v42, 7
    %v44 = vsub.s32 0, %v43
    %v45 = vrot.slane %v41, %v44
    %vm46 = vcmask 277504
    %v48 = vsel %vm46, %v28, 0
    %v51 = vsel %vm46, %v29, 0
    %v54 = vsel %vm46, %v30, 0
    %v57 = vsel %vm46, %v31, 0
    %v60 = vsel %vm46, %v32, 0
    %v63 = vsel %vm46, %v33, 0
    %v66 = vsel %vm46, %v34, 0
    %v69 = vsel %vm46, %v35, 0
    %vm71 = vcmask 1041408
    %v73 = vsel %vm71, %v40, 0
    %75 = vmatprep.subr.mxu0 0.0
    %76 = vmatpush1.msra.mxu0 %v36
    %77 = vmatprep.subr.mxu0 0.0
    %78 = vmatpush1.msra.mxu0 %v37
    %79 = vmatprep.subr.mxu0 0.0
    %80 = vmatpush1.msra.mxu0 %v38
    %81 = vmatprep.subr.mxu0 0.0
    %82 = vmatpush1.msra.mxu0 %v39
    %83 = vmatprep.subr.mxu0 0.0
    %84 = vmatpush1.msra.mxu0 %v73
    %85 = vmatprep.subr.mxu0 0.0
    %86 = vmatpush1.msra.mxu0 0.0
    %87 = vmatprep.subr.mxu0 0.0
    %88 = vmatpush1.msra.mxu0 0.0
    %89 = vmatprep.subr.mxu0 0.0
    %90 = vmatpush1.msra.mxu0 0.0
    %91 = vmatprep.subr.mxu0 0.0
    %92 = vmatpush1.msra.mxu0 0.0
    %93 = vmatprep.subr.mxu0 0.0
    %94 = vmatpush1.msra.mxu0 0.0
    %95 = vmatprep.subr.mxu0 0.0
    %96 = vmatpush1.msra.mxu0 0.0
    %97 = vmatprep.subr.mxu0 0.0
    %98 = vmatpush1.msra.mxu0 0.0
    %99 = vmatprep.subr.mxu0 0.0
    %100 = vmatpush1.msra.mxu0 0.0
    %101 = vmatprep.subr.mxu0 0.0
    %102 = vmatpush1.msra.mxu0 0.0
    %103 = vmatprep.subr.mxu0 0.0
    %104 = vmatpush1.msra.mxu0 0.0
    %105 = vmatprep.subr.mxu0 0.0
    %106 = vmatpush1.msra.mxu0 0.0
    %107 = vmatprep.subr.mxu0 0.0
    %108 = vmatpush1.msra.mxu0 0.0
    %109 = vmatprep.subr.mxu0 0.0
    %110 = vmatpush1.msra.mxu0 0.0
    %111 = vmatprep.subr.mxu0 0.0
    %112 = vmatpush1.msra.mxu0 0.0
    %113 = vmatprep.subr.mxu0 0.0
    %114 = vmatpush1.msra.mxu0 0.0
    %115 = vmatprep.subr.mxu0 0.0
    %116 = vmatpush1.msra.mxu0 0.0
    %117 = vmatprep.subr.mxu0 0.0
    %118 = vmatpush1.msra.mxu0 0.0
    %119 = vmatprep.subr.mxu0 0.0
    %120 = vmatpush1.msra.mxu0 0.0
    %121 = vmatprep.subr.mxu0 0.0
    %122 = vmatpush1.msra.mxu0 0.0
    %123 = vmatprep.subr.mxu0 0.0
    %124 = vmatpush1.msra.mxu0 0.0
    %125 = vmatprep.subr.mxu0 0.0
    %126 = vmatpush1.msra.mxu0 0.0
    %127 = vmatprep.subr.mxu0 0.0
    %128 = vmatpush1.msra.mxu0 0.0
    %129 = vmatprep.subr.mxu0 0.0
    %130 = vmatpush1.msra.mxu0 0.0
    %131 = vmatprep.subr.mxu0 0.0
    %132 = vmatpush1.msra.mxu0 0.0
    %133 = vmatprep.subr.mxu0 0.0
    %134 = vmatpush1.msra.mxu0 0.0
    %135 = vmatprep.subr.mxu0 0.0
    %136 = vmatpush1.msra.mxu0 0.0
    %137 = vmatprep.subr.mxu0 0.0
    %138 = vmatpush1.msra.mxu0 0.0
    %139 = vmatprep.mubr.f32.mxu0 0.0
    %140 = vmatmul.mubr.f32.gmra.mrb[0].mxu0 %v48
    %v141 = vpop.f32.mrb[0].mxu0
    %v142 = vadd.f32 %v45, %v141
    %v143 = vpop.f32.mrb[0].mxu0
    %144 = vmatprep.mubr.f32.mxu0 0.0
    %145 = vmatmul.mubr.f32.gmra.mrb[0].mxu0 %v51
    %v146 = vpop.f32.mrb[0].mxu0
    %v147 = vadd.f32 %v45, %v146
    %v148 = vpop.f32.mrb[0].mxu0
    %149 = vmatprep.mubr.f32.mxu0 0.0
    %150 = vmatmul.mubr.f32.gmra.mrb[0].mxu0 %v54
    %v151 = vpop.f32.mrb[0].mxu0
    %v152 = vadd.f32 %v45, %v151
    %v153 = vpop.f32.mrb[0].mxu0
    %154 = vmatprep.mubr.f32.mxu0 0.0
    %155 = vmatmul.mubr.f32.gmra.mrb[0].mxu0 %v57
    %v156 = vpop.f32.mrb[0].mxu0
    %v157 = vadd.f32 %v45, %v156
    %v158 = vpop.f32.mrb[0].mxu0
    %159 = vmatprep.mubr.f32.mxu0 0.0
    %160 = vmatmul.mubr.f32.gmra.mrb[0].mxu0 %v60
    %v161 = vpop.f32.mrb[0].mxu0
    %v162 = vadd.f32 %v45, %v161
    %v163 = vpop.f32.mrb[0].mxu0
    %164 = vmatprep.mubr.f32.mxu0 0.0
    %165 = vmatmul.mubr.f32.gmra.mrb[0].mxu0 %v63
    %v166 = vpop.f32.mrb[0].mxu0
    %v167 = vadd.f32 %v45, %v166
    %v168 = vpop.f32.mrb[0].mxu0
    %169 = vmatprep.mubr.f32.mxu0 0.0
    %170 = vmatmul.mubr.f32.gmra.mrb[0].mxu0 %v66
    %v171 = vpop.f32.mrb[0].mxu0
    %v172 = vadd.f32 %v45, %v171
    %v173 = vpop.f32.mrb[0].mxu0
    %174 = vmatprep.mubr.f32.mxu0 0.0
    %175 = vmatmul.mubr.f32.gmra.mrb[0].mxu0 %v69
    %v176 = vpop.f32.mrb[0].mxu0
    %v177 = vadd.f32 %v45, %v176
    %v178 = vpop.f32.mrb[0].mxu0
    %179 = vdwg.mxu0
    %v180 = vld [vmem:[#allocation2 + $0x28] sm:$0xff]
    %v181 = vld [vmem:[#allocation2 + $0x30] sm:$0xff]
    %v182 = vld [vmem:[#allocation2 + $0x38] sm:$0xff]
    %v183 = vld [vmem:[#allocation2 + $0x40] sm:$0xff]
    %v184 = vld [vmem:[#allocation2 + $0x50] sm:$0xff]
    %v185 = vld [vmem:[#allocation2 + $0x58] sm:$0xff]
    %v186 = vld [vmem:[#allocation2 + $0x60] sm:$0xff]
    %v187 = vld [vmem:[#allocation2 + $0x68] sm:$0xff]
    %v188 = vld [vmem:[#allocation2 + $0x70] sm:$0xff]
    %v189 = vld [vmem:[#allocation2 + $0x78] sm:$0xff]
    %v190 = vld [vmem:[#allocation2 + $0x80] sm:$0xff]
    %v191 = vld [vmem:[#allocation2 + $0x88] sm:$0xff]
    %v192 = vld [vmem:[#allocation2 + $0x90] sm:$0x1]
    %v193 = vlaneseq
    %v194 = vshrl.u32 %v193, 7
    %v195 = vsub.s32 0, %v194
    %v196 = vrot.slane %v192, %v195
    %vm197 = vcmask 261120
    %v199 = vsel %vm197, 0.0, 0
    %201 = vmatprep.subr.mxu0 0.0
    %202 = vmatpush1.msra.mxu0 %v188
    %203 = vmatprep.subr.mxu0 0.0
    %204 = vmatpush1.msra.mxu0 %v189
    %205 = vmatprep.subr.mxu0 0.0
    %206 = vmatpush1.msra.mxu0 %v190
    %207 = vmatprep.subr.mxu0 0.0
    %208 = vmatpush1.msra.mxu0 %v191
    %209 = vmatprep.subr.mxu0 0.0
    %210 = vmatpush1.msra.mxu0 0.0
    %211 = vmatprep.subr.mxu0 0.0
    %212 = vmatpush1.msra.mxu0 0.0
    %213 = vmatprep.subr.mxu0 0.0
    %214 = vmatpush1.msra.mxu0 0.0
    %215 = vmatprep.subr.mxu0 0.0
    %216 = vmatpush1.msra.mxu0 0.0
    %217 = vmatprep.subr.mxu0 0.0
    %218 = vmatpush1.msra.mxu0 0.0
    %219 = vmatprep.subr.mxu0 0.0
    %220 = vmatpush1.msra.mxu0 0.0
    %221 = vmatprep.subr.mxu0 0.0
    %222 = vmatpush1.msra.mxu0 0.0
    %223 = vmatprep.subr.mxu0 0.0
    %224 = vmatpush1.msra.mxu0 0.0
    %225 = vmatprep.subr.mxu0 0.0
    %226 = vmatpush1.msra.mxu0 0.0
    %227 = vmatprep.subr.mxu0 0.0
    %228 = vmatpush1.msra.mxu0 0.0
    %229 = vmatprep.subr.mxu0 0.0
    %230 = vmatpush1.msra.mxu0 0.0
    %231 = vmatprep.subr.mxu0 0.0
    %232 = vmatpush1.msra.mxu0 0.0
    %233 = vmatprep.subr.mxu0 0.0
    %234 = vmatpush1.msra.mxu0 0.0
    %235 = vmatprep.subr.mxu0 0.0
    %236 = vmatpush1.msra.mxu0 0.0
    %237 = vmatprep.subr.mxu0 0.0
    %238 = vmatpush1.msra.mxu0 0.0
    %239 = vmatprep.subr.mxu0 0.0
    %240 = vmatpush1.msra.mxu0 0.0
    %241 = vmatprep.subr.mxu0 0.0
    %242 = vmatpush1.msra.mxu0 0.0
    %243 = vmatprep.subr.mxu0 0.0
    %244 = vmatpush1.msra.mxu0 0.0
    %245 = vmatprep.subr.mxu0 0.0
    %246 = vmatpush1.msra.mxu0 0.0
    %247 = vmatprep.subr.mxu0 0.0
    %248 = vmatpush1.msra.mxu0 0.0
    %249 = vmatprep.subr.mxu0 0.0
    %250 = vmatpush1.msra.mxu0 0.0
    %251 = vmatprep.subr.mxu0 0.0
    %252 = vmatpush1.msra.mxu0 0.0
    %253 = vmatprep.subr.mxu0 0.0
    %254 = vmatpush1.msra.mxu0 0.0
    %255 = vmatprep.subr.mxu0 0.0
    %256 = vmatpush1.msra.mxu0 0.0
    %257 = vmatprep.subr.mxu0 0.0
    %258 = vmatpush1.msra.mxu0 0.0
    %259 = vmatprep.subr.mxu0 0.0
    %260 = vmatpush1.msra.mxu0 0.0
    %261 = vmatprep.subr.mxu0 0.0
    %262 = vmatpush1.msra.mxu0 0.0
    %263 = vmatprep.subr.mxu0 0.0
    %264 = vmatpush1.msra.mxu0 0.0
    %265 = vmatprep.mubr.f32.mxu0 0.0
    %266 = vmatmul.mubr.f32.gmra.mrb[0].mxu0 %v199
    %v267 = vpop.f32.mrb[0].mxu0
    %v268 = vadd.f32 0.0, %v267
    %v269 = vpop.f32.mrb[0].mxu0
    %270 = vdwg.mxu0
    %271 = vmatprep.subr.mxu0 0.0
    %272 = vmatpush1.msra.mxu0 %v180
    %273 = vmatprep.subr.mxu0 0.0
    %274 = vmatpush1.msra.mxu0 %v181
    %275 = vmatprep.subr.mxu0 0.0
    %276 = vmatpush1.msra.mxu0 %v182
    %277 = vmatprep.subr.mxu0 0.0
    %278 = vmatpush1.msra.mxu0 %v183
    %279 = vmatprep.subr.mxu0 0.0
    %280 = vmatpush1.msra.mxu0 0.0
    %281 = vmatprep.subr.mxu0 0.0
    %282 = vmatpush1.msra.mxu0 0.0
    %283 = vmatprep.subr.mxu0 0.0
    %284 = vmatpush1.msra.mxu0 0.0
    %285 = vmatprep.subr.mxu0 0.0
    %286 = vmatpush1.msra.mxu0 0.0
    %287 = vmatprep.subr.mxu0 0.0
    %288 = vmatpush1.msra.mxu0 0.0
    %289 = vmatprep.subr.mxu0 0.0
    %290 = vmatpush1.msra.mxu0 0.0
    %291 = vmatprep.subr.mxu0 0.0
    %292 = vmatpush1.msra.mxu0 0.0
    %293 = vmatprep.subr.mxu0 0.0
    %294 = vmatpush1.msra.mxu0 0.0
    %295 = vmatprep.subr.mxu0 0.0
    %296 = vmatpush1.msra.mxu0 0.0
    %297 = vmatprep.subr.mxu0 0.0
    %298 = vmatpush1.msra.mxu0 0.0
    %299 = vmatprep.subr.mxu0 0.0
    %300 = vmatpush1.msra.mxu0 0.0
    %301 = vmatprep.subr.mxu0 0.0
    %302 = vmatpush1.msra.mxu0 0.0
    %303 = vmatprep.subr.mxu0 0.0
    %304 = vmatpush1.msra.mxu0 0.0
    %305 = vmatprep.subr.mxu0 0.0
    %306 = vmatpush1.msra.mxu0 0.0
    %307 = vmatprep.subr.mxu0 0.0
    %308 = vmatpush1.msra.mxu0 0.0
    %309 = vmatprep.subr.mxu0 0.0
    %310 = vmatpush1.msra.mxu0 0.0
    %311 = vmatprep.subr.mxu0 0.0
    %312 = vmatpush1.msra.mxu0 0.0
    %313 = vmatprep.subr.mxu0 0.0
    %314 = vmatpush1.msra.mxu0 0.0
    %315 = vmatprep.subr.mxu0 0.0
    %316 = vmatpush1.msra.mxu0 0.0
    %317 = vmatprep.subr.mxu0 0.0
    %318 = vmatpush1.msra.mxu0 0.0
    %319 = vmatprep.subr.mxu0 0.0
    %320 = vmatpush1.msra.mxu0 0.0
    %321 = vmatprep.subr.mxu0 0.0
    %322 = vmatpush1.msra.mxu0 0.0
    %323 = vmatprep.subr.mxu0 0.0
    %324 = vmatpush1.msra.mxu0 0.0
    %325 = vmatprep.subr.mxu0 0.0
    %326 = vmatpush1.msra.mxu0 0.0
    %327 = vmatprep.subr.mxu0 0.0
    %328 = vmatpush1.msra.mxu0 0.0
    %329 = vmatprep.subr.mxu0 0.0
    %330 = vmatpush1.msra.mxu0 0.0
    %331 = vmatprep.subr.mxu0 0.0
    %332 = vmatpush1.msra.mxu0 0.0
    %333 = vmatprep.subr.mxu0 0.0
    %334 = vmatpush1.msra.mxu0 0.0
    %335 = vmatprep.mubr.f32.mxu0 0.0
    %336 = vmatmul.mubr.f32.gmra.mrb[0].mxu0 %v199
    %v337 = vpop.f32.mrb[0].mxu0
    %v338 = vadd.f32 0.0, %v337
    %v339 = vpop.f32.mrb[0].mxu0
    %340 = vdwg.mxu0
    %v341 = vadd.f32 %v142, %v338
    %v342 = vxor.u32 %v341, 2147483648
    %v343 = vmul.f32 %v342, 1.442695
    %v344 = vpow.pop %v343
    %v345 = vadd.f32 %v344, 1.0
    %v346 = vrcp.pop %v345
    %v347 = vmul.f32 1.0, %v346
    %v348 = vtanh.pop %v341
    %v349 = vmul.f32 %v347, 0.0
    %351 = vrot.lane.b32.xlu0 %v348, 64
    %v352 = vpop.permute.xlu0 %351
    %v354 = vmul.f32 %v347, %v352
    %356 = vrot.lane.b32.xlu0 %v354, 32
    %v357 = vpop.permute.xlu0 %356
    %v359 = vadd.f32 %v349, %v357
    %v360 = vtanh.pop %v359
    %362 = vrot.lane.b32.xlu0 %v360, 64
    %v363 = vpop.permute.xlu0 %362
    %v365 = vmul.f32 %v347, %v363
    %367 = vrot.lane.b32.xlu0 %v365, 32
    %v368 = vpop.permute.xlu0 %367
    %v369 = vsel %vm197, %v368, 0
    %371 = vmatprep.subr.mxu0 0.0
    %372 = vmatpush1.msra.mxu0 %v184
    %373 = vmatprep.subr.mxu0 0.0
    %374 = vmatpush1.msra.mxu0 %v185
    %375 = vmatprep.subr.mxu0 0.0
    %376 = vmatpush1.msra.mxu0 %v186
    %377 = vmatprep.subr.mxu0 0.0
    %378 = vmatpush1.msra.mxu0 %v187
    %379 = vmatprep.subr.mxu0 0.0
    %380 = vmatpush1.msra.mxu0 0.0
    %381 = vmatprep.subr.mxu0 0.0
    %382 = vmatpush1.msra.mxu0 0.0
    %383 = vmatprep.subr.mxu0 0.0
    %384 = vmatpush1.msra.mxu0 0.0
    %385 = vmatprep.subr.mxu0 0.0
    %386 = vmatpush1.msra.mxu0 0.0
    %387 = vmatprep.subr.mxu0 0.0
    %388 = vmatpush1.msra.mxu0 0.0
    %389 = vmatprep.subr.mxu0 0.0
    %390 = vmatpush1.msra.mxu0 0.0
    %391 = vmatprep.subr.mxu0 0.0
    %392 = vmatpush1.msra.mxu0 0.0
    %393 = vmatprep.subr.mxu0 0.0
    %394 = vmatpush1.msra.mxu0 0.0
    %395 = vmatprep.subr.mxu0 0.0
    %396 = vmatpush1.msra.mxu0 0.0
    %397 = vmatprep.subr.mxu0 0.0
    %398 = vmatpush1.msra.mxu0 0.0
    %399 = vmatprep.subr.mxu0 0.0
    %400 = vmatpush1.msra.mxu0 0.0
    %401 = vmatprep.subr.mxu0 0.0
    %402 = vmatpush1.msra.mxu0 0.0
    %403 = vmatprep.subr.mxu0 0.0
    %404 = vmatpush1.msra.mxu0 0.0
    %405 = vmatprep.subr.mxu0 0.0
    %406 = vmatpush1.msra.mxu0 0.0
    %407 = vmatprep.subr.mxu0 0.0
    %408 = vmatpush1.msra.mxu0 0.0
    %409 = vmatprep.subr.mxu0 0.0
    %410 = vmatpush1.msra.mxu0 0.0
    %411 = vmatprep.subr.mxu0 0.0
    %412 = vmatpush1.msra.mxu0 0.0
    %413 = vmatprep.subr.mxu0 0.0
    %414 = vmatpush1.msra.mxu0 0.0
    %415 = vmatprep.subr.mxu0 0.0
    %416 = vmatpush1.msra.mxu0 0.0
    %417 = vmatprep.subr.mxu0 0.0
    %418 = vmatpush1.msra.mxu0 0.0
    %419 = vmatprep.subr.mxu0 0.0
    %420 = vmatpush1.msra.mxu0 0.0
    %421 = vmatprep.subr.mxu0 0.0
    %422 = vmatpush1.msra.mxu0 0.0
    %423 = vmatprep.subr.mxu0 0.0
    %424 = vmatpush1.msra.mxu0 0.0
    %425 = vmatprep.subr.mxu0 0.0
    %426 = vmatpush1.msra.mxu0 0.0
    %427 = vmatprep.subr.mxu0 0.0
    %428 = vmatpush1.msra.mxu0 0.0
    %429 = vmatprep.subr.mxu0 0.0
    %430 = vmatpush1.msra.mxu0 0.0
    %431 = vmatprep.subr.mxu0 0.0
    %432 = vmatpush1.msra.mxu0 0.0
    %433 = vmatprep.subr.mxu0 0.0
    %434 = vmatpush1.msra.mxu0 0.0
    %435 = vmatprep.mubr.f32.mxu0 0.0
    %436 = vmatmul.mubr.f32.gmra.mrb[0].mxu0 %v369
    %v437 = vpop.f32.mrb[0].mxu0
    %v438 = vadd.f32 %v268, %v437
    %v439 = vpop.f32.mrb[0].mxu0
    %440 = vdwg.mxu0
    %v441 = vadd.f32 %v438, %v196
    %v442 = vxor.u32 %v441, 2147483648
    %v443 = vmul.f32 %v442, 1.442695
    %v444 = vpow.pop %v443
    %v445 = vadd.f32 %v444, 1.0
    %v446 = vrcp.pop %v445
    %v447 = vmul.f32 1.0, %v446
    %v448 = vtanh.pop %v441
    %v449 = vmul.f32 %v447, 0.0
    %451 = vrot.lane.b32.xlu0 %v448, 64
    %v452 = vpop.permute.xlu0 %451
    %v454 = vmul.f32 %v447, %v452
    %456 = vrot.lane.b32.xlu0 %v454, 32
    %v457 = vpop.permute.xlu0 %456
    %v459 = vadd.f32 %v449, %v457
    %v460 = vtanh.pop %v459
    %462 = vrot.lane.b32.xlu0 %v460, 64
    %v463 = vpop.permute.xlu0 %462
    %v465 = vmul.f32 %v447, %v463
    %467 = vrot.lane.b32.xlu0 %v465, 32
    %v468 = vpop.permute.xlu0 %467
    %v469 = vsel %vm197, %v468, 0
    %471 = vmatprep.subr.mxu0 0.0
    %472 = vmatpush1.msra.mxu0 %v188
    %473 = vmatprep.subr.mxu0 0.0
    %474 = vmatpush1.msra.mxu0 %v189
    %475 = vmatprep.subr.mxu0 0.0
    %476 = vmatpush1.msra.mxu0 %v190
    %477 = vmatprep.subr.mxu0 0.0
    %478 = vmatpush1.msra.mxu0 %v191
    %479 = vmatprep.subr.mxu0 0.0
    %480 = vmatpush1.msra.mxu0 0.0
    %481 = vmatprep.subr.mxu0 0.0
    %482 = vmatpush1.msra.mxu0 0.0
    %483 = vmatprep.subr.mxu0 0.0
    %484 = vmatpush1.msra.mxu0 0.0
    %485 = vmatprep.subr.mxu0 0.0
    %486 = vmatpush1.msra.mxu0 0.0
    %487 = vmatprep.subr.mxu0 0.0
    %488 = vmatpush1.msra.mxu0 0.0
    %489 = vmatprep.subr.mxu0 0.0
    %490 = vmatpush1.msra.mxu0 0.0
    %491 = vmatprep.subr.mxu0 0.0
    %492 = vmatpush1.msra.mxu0 0.0
    %493 = vmatprep.subr.mxu0 0.0
    %494 = vmatpush1.msra.mxu0 0.0
    %495 = vmatprep.subr.mxu0 0.0
    %496 = vmatpush1.msra.mxu0 0.0
    %497 = vmatprep.subr.mxu0 0.0
    %498 = vmatpush1.msra.mxu0 0.0
    %499 = vmatprep.subr.mxu0 0.0
    %500 = vmatpush1.msra.mxu0 0.0
    %501 = vmatprep.subr.mxu0 0.0
    %502 = vmatpush1.msra.mxu0 0.0
    %503 = vmatprep.subr.mxu0 0.0
    %504 = vmatpush1.msra.mxu0 0.0
    %505 = vmatprep.subr.mxu0 0.0
    %506 = vmatpush1.msra.mxu0 0.0
    %507 = vmatprep.subr.mxu0 0.0
    %508 = vmatpush1.msra.mxu0 0.0
    %509 = vmatprep.subr.mxu0 0.0
    %510 = vmatpush1.msra.mxu0 0.0
    %511 = vmatprep.subr.mxu0 0.0
    %512 = vmatpush1.msra.mxu0 0.0
    %513 = vmatprep.subr.mxu0 0.0
    %514 = vmatpush1.msra.mxu0 0.0
    %515 = vmatprep.subr.mxu0 0.0
    %516 = vmatpush1.msra.mxu0 0.0
    %517 = vmatprep.subr.mxu0 0.0
    %518 = vmatpush1.msra.mxu0 0.0
    %519 = vmatprep.subr.mxu0 0.0
    %520 = vmatpush1.msra.mxu0 0.0
    %521 = vmatprep.subr.mxu0 0.0
    %522 = vmatpush1.msra.mxu0 0.0
    %523 = vmatprep.subr.mxu0 0.0
    %524 = vmatpush1.msra.mxu0 0.0
    %525 = vmatprep.subr.mxu0 0.0
    %526 = vmatpush1.msra.mxu0 0.0
    %527 = vmatprep.subr.mxu0 0.0
    %528 = vmatpush1.msra.mxu0 0.0
    %529 = vmatprep.subr.mxu0 0.0
    %530 = vmatpush1.msra.mxu0 0.0
    %531 = vmatprep.subr.mxu0 0.0
    %532 = vmatpush1.msra.mxu0 0.0
    %533 = vmatprep.subr.mxu0 0.0
    %534 = vmatpush1.msra.mxu0 0.0
    %535 = vmatprep.mubr.f32.mxu0 0.0
    %536 = vmatmul.mubr.f32.gmra.mrb[0].mxu0 %v469
    %v537 = vpop.f32.mrb[0].mxu0
    %v538 = vadd.f32 0.0, %v537
    %v539 = vpop.f32.mrb[0].mxu0
    %540 = vdwg.mxu0
    %541 = vmatprep.subr.mxu0 0.0
    %542 = vmatpush1.msra.mxu0 %v180
    %543 = vmatprep.subr.mxu0 0.0
    %544 = vmatpush1.msra.mxu0 %v181
    %545 = vmatprep.subr.mxu0 0.0
    %546 = vmatpush1.msra.mxu0 %v182
    %547 = vmatprep.subr.mxu0 0.0
    %548 = vmatpush1.msra.mxu0 %v183
    %549 = vmatprep.subr.mxu0 0.0
    %550 = vmatpush1.msra.mxu0 0.0
    %551 = vmatprep.subr.mxu0 0.0
    %552 = vmatpush1.msra.mxu0 0.0
    %553 = vmatprep.subr.mxu0 0.0
    %554 = vmatpush1.msra.mxu0 0.0
    %555 = vmatprep.subr.mxu0 0.0
    %556 = vmatpush1.msra.mxu0 0.0
    %557 = vmatprep.subr.mxu0 0.0
    %558 = vmatpush1.msra.mxu0 0.0
    %559 = vmatprep.subr.mxu0 0.0
    %560 = vmatpush1.msra.mxu0 0.0
    %561 = vmatprep.subr.mxu0 0.0
    %562 = vmatpush1.msra.mxu0 0.0
    %563 = vmatprep.subr.mxu0 0.0
    %564 = vmatpush1.msra.mxu0 0.0
    %565 = vmatprep.subr.mxu0 0.0
    %566 = vmatpush1.msra.mxu0 0.0
    %567 = vmatprep.subr.mxu0 0.0
    %568 = vmatpush1.msra.mxu0 0.0
    %569 = vmatprep.subr.mxu0 0.0
    %570 = vmatpush1.msra.mxu0 0.0
    %571 = vmatprep.subr.mxu0 0.0
    %572 = vmatpush1.msra.mxu0 0.0
    %573 = vmatprep.subr.mxu0 0.0
    %574 = vmatpush1.msra.mxu0 0.0
    %575 = vmatprep.subr.mxu0 0.0
    %576 = vmatpush1.msra.mxu0 0.0
    %577 = vmatprep.subr.mxu0 0.0
    %578 = vmatpush1.msra.mxu0 0.0
    %579 = vmatprep.subr.mxu0 0.0
    %580 = vmatpush1.msra.mxu0 0.0
    %581 = vmatprep.subr.mxu0 0.0
    %582 = vmatpush1.msra.mxu0 0.0
    %583 = vmatprep.subr.mxu0 0.0
    %584 = vmatpush1.msra.mxu0 0.0
    %585 = vmatprep.subr.mxu0 0.0
    %586 = vmatpush1.msra.mxu0 0.0
    %587 = vmatprep.subr.mxu0 0.0
    %588 = vmatpush1.msra.mxu0 0.0
    %589 = vmatprep.subr.mxu0 0.0
    %590 = vmatpush1.msra.mxu0 0.0
    %591 = vmatprep.subr.mxu0 0.0
    %592 = vmatpush1.msra.mxu0 0.0
    %593 = vmatprep.subr.mxu0 0.0
    %594 = vmatpush1.msra.mxu0 0.0
    %595 = vmatprep.subr.mxu0 0.0
    %596 = vmatpush1.msra.mxu0 0.0
    %597 = vmatprep.subr.mxu0 0.0
    %598 = vmatpush1.msra.mxu0 0.0
    %599 = vmatprep.subr.mxu0 0.0
    %600 = vmatpush1.msra.mxu0 0.0
    %601 = vmatprep.subr.mxu0 0.0
    %602 = vmatpush1.msra.mxu0 0.0
    %603 = vmatprep.subr.mxu0 0.0
    %604 = vmatpush1.msra.mxu0 0.0
    %605 = vmatprep.mubr.f32.mxu0 0.0
    %606 = vmatmul.mubr.f32.gmra.mrb[0].mxu0 %v369
    %v607 = vpop.f32.mrb[0].mxu0
    %v608 = vadd.f32 0.0, %v607
    %v609 = vpop.f32.mrb[0].mxu0
    %610 = vdwg.mxu0
    %v611 = vadd.f32 %v147, %v608
    %v612 = vxor.u32 %v611, 2147483648
    %v613 = vmul.f32 %v612, 1.442695
    %v614 = vpow.pop %v613
    %v615 = vadd.f32 %v614, 1.0
    %v616 = vrcp.pop %v615
    %v617 = vmul.f32 1.0, %v616
    %v618 = vtanh.pop %v611
    %v619 = vmul.f32 %v617, %v359
    %621 = vrot.lane.b32.xlu0 %v618, 64
    %v622 = vpop.permute.xlu0 %621
    %v624 = vmul.f32 %v617, %v622
    %626 = vrot.lane.b32.xlu0 %v624, 32
    %v627 = vpop.permute.xlu0 %626
    %v629 = vadd.f32 %v619, %v627
    %v630 = vtanh.pop %v629
    %632 = vrot.lane.b32.xlu0 %v630, 64
    %v633 = vpop.permute.xlu0 %632
    %v635 = vmul.f32 %v617, %v633
    %637 = vrot.lane.b32.xlu0 %v635, 32
    %v638 = vpop.permute.xlu0 %637
    %v639 = vsel %vm197, %v638, 0
    %641 = vmatprep.subr.mxu0 0.0
    %642 = vmatpush1.msra.mxu0 %v184
    %643 = vmatprep.subr.mxu0 0.0
    %644 = vmatpush1.msra.mxu0 %v185
    %645 = vmatprep.subr.mxu0 0.0
    %646 = vmatpush1.msra.mxu0 %v186
    %647 = vmatprep.subr.mxu0 0.0
    %648 = vmatpush1.msra.mxu0 %v187
    %649 = vmatprep.subr.mxu0 0.0
    %650 = vmatpush1.msra.mxu0 0.0
    %651 = vmatprep.subr.mxu0 0.0
    %652 = vmatpush1.msra.mxu0 0.0
    %653 = vmatprep.subr.mxu0 0.0
    %654 = vmatpush1.msra.mxu0 0.0
    %655 = vmatprep.subr.mxu0 0.0
    %656 = vmatpush1.msra.mxu0 0.0
    %657 = vmatprep.subr.mxu0 0.0
    %658 = vmatpush1.msra.mxu0 0.0
    %659 = vmatprep.subr.mxu0 0.0
    %660 = vmatpush1.msra.mxu0 0.0
    %661 = vmatprep.subr.mxu0 0.0
    %662 = vmatpush1.msra.mxu0 0.0
    %663 = vmatprep.subr.mxu0 0.0
    %664 = vmatpush1.msra.mxu0 0.0
    %665 = vmatprep.subr.mxu0 0.0
    %666 = vmatpush1.msra.mxu0 0.0
    %667 = vmatprep.subr.mxu0 0.0
    %668 = vmatpush1.msra.mxu0 0.0
    %669 = vmatprep.subr.mxu0 0.0
    %670 = vmatpush1.msra.mxu0 0.0
    %671 = vmatprep.subr.mxu0 0.0
    %672 = vmatpush1.msra.mxu0 0.0
    %673 = vmatprep.subr.mxu0 0.0
    %674 = vmatpush1.msra.mxu0 0.0
    %675 = vmatprep.subr.mxu0 0.0
    %676 = vmatpush1.msra.mxu0 0.0
    %677 = vmatprep.subr.mxu0 0.0
    %678 = vmatpush1.msra.mxu0 0.0
    %679 = vmatprep.subr.mxu0 0.0
    %680 = vmatpush1.msra.mxu0 0.0
    %681 = vmatprep.subr.mxu0 0.0
    %682 = vmatpush1.msra.mxu0 0.0
    %683 = vmatprep.subr.mxu0 0.0
    %684 = vmatpush1.msra.mxu0 0.0
    %685 = vmatprep.subr.mxu0 0.0
    %686 = vmatpush1.msra.mxu0 0.0
    %687 = vmatprep.subr.mxu0 0.0
    %688 = vmatpush1.msra.mxu0 0.0
    %689 = vmatprep.subr.mxu0 0.0
    %690 = vmatpush1.msra.mxu0 0.0
    %691 = vmatprep.subr.mxu0 0.0
    %692 = vmatpush1.msra.mxu0 0.0
    %693 = vmatprep.subr.mxu0 0.0
    %694 = vmatpush1.msra.mxu0 0.0
    %695 = vmatprep.subr.mxu0 0.0
    %696 = vmatpush1.msra.mxu0 0.0
    %697 = vmatprep.subr.mxu0 0.0
    %698 = vmatpush1.msra.mxu0 0.0
    %699 = vmatprep.subr.mxu0 0.0
    %700 = vmatpush1.msra.mxu0 0.0
    %701 = vmatprep.subr.mxu0 0.0
    %702 = vmatpush1.msra.mxu0 0.0
    %703 = vmatprep.subr.mxu0 0.0
    %704 = vmatpush1.msra.mxu0 0.0
    %705 = vmatprep.mubr.f32.mxu0 0.0
    %706 = vmatmul.mubr.f32.gmra.mrb[0].mxu0 %v639
    %v707 = vpop.f32.mrb[0].mxu0
    %v708 = vadd.f32 %v538, %v707
    %v709 = vpop.f32.mrb[0].mxu0
    %710 = vdwg.mxu0
    %v711 = vadd.f32 %v708, %v196
    %v712 = vxor.u32 %v711, 2147483648
    %v713 = vmul.f32 %v712, 1.442695
    %v714 = vpow.pop %v713
    %v715 = vadd.f32 %v714, 1.0
    %v716 = vrcp.pop %v715
    %v717 = vmul.f32 1.0, %v716
    %v718 = vtanh.pop %v711
    %v719 = vmul.f32 %v717, %v459
    %721 = vrot.lane.b32.xlu0 %v718, 64
    %v722 = vpop.permute.xlu0 %721
    %v724 = vmul.f32 %v717, %v722
    %726 = vrot.lane.b32.xlu0 %v724, 32
    %v727 = vpop.permute.xlu0 %726
    %v729 = vadd.f32 %v719, %v727
    %v730 = vtanh.pop %v729
    %732 = vrot.lane.b32.xlu0 %v730, 64
    %v733 = vpop.permute.xlu0 %732
    %v735 = vmul.f32 %v717, %v733
    %737 = vrot.lane.b32.xlu0 %v735, 32
    %v738 = vpop.permute.xlu0 %737
    %v739 = vsel %vm197, %v738, 0
    %741 = vmatprep.subr.mxu0 0.0
    %742 = vmatpush1.msra.mxu0 %v188
    %743 = vmatprep.subr.mxu0 0.0
    %744 = vmatpush1.msra.mxu0 %v189
    %745 = vmatprep.subr.mxu0 0.0
    %746 = vmatpush1.msra.mxu0 %v190
    %747 = vmatprep.subr.mxu0 0.0
    %748 = vmatpush1.msra.mxu0 %v191
    %749 = vmatprep.subr.mxu0 0.0
    %750 = vmatpush1.msra.mxu0 0.0
    %751 = vmatprep.subr.mxu0 0.0
    %752 = vmatpush1.msra.mxu0 0.0
    %753 = vmatprep.subr.mxu0 0.0
    %754 = vmatpush1.msra.mxu0 0.0
    %755 = vmatprep.subr.mxu0 0.0
    %756 = vmatpush1.msra.mxu0 0.0
    %757 = vmatprep.subr.mxu0 0.0
    %758 = vmatpush1.msra.mxu0 0.0
    %759 = vmatprep.subr.mxu0 0.0
    %760 = vmatpush1.msra.mxu0 0.0
    %761 = vmatprep.subr.mxu0 0.0
    %762 = vmatpush1.msra.mxu0 0.0
    %763 = vmatprep.subr.mxu0 0.0
    %764 = vmatpush1.msra.mxu0 0.0
    %765 = vmatprep.subr.mxu0 0.0
    %766 = vmatpush1.msra.mxu0 0.0
    %767 = vmatprep.subr.mxu0 0.0
    %768 = vmatpush1.msra.mxu0 0.0
    %769 = vmatprep.subr.mxu0 0.0
    %770 = vmatpush1.msra.mxu0 0.0
    %771 = vmatprep.subr.mxu0 0.0
    %772 = vmatpush1.msra.mxu0 0.0
    %773 = vmatprep.subr.mxu0 0.0
    %774 = vmatpush1.msra.mxu0 0.0
    %775 = vmatprep.subr.mxu0 0.0
    %776 = vmatpush1.msra.mxu0 0.0
    %777 = vmatprep.subr.mxu0 0.0
    %778 = vmatpush1.msra.mxu0 0.0
    %779 = vmatprep.subr.mxu0 0.0
    %780 = vmatpush1.msra.mxu0 0.0
    %781 = vmatprep.subr.mxu0 0.0
    %782 = vmatpush1.msra.mxu0 0.0
    %783 = vmatprep.subr.mxu0 0.0
    %784 = vmatpush1.msra.mxu0 0.0
    %785 = vmatprep.subr.mxu0 0.0
    %786 = vmatpush1.msra.mxu0 0.0
    %787 = vmatprep.subr.mxu0 0.0
    %788 = vmatpush1.msra.mxu0 0.0
    %789 = vmatprep.subr.mxu0 0.0
    %790 = vmatpush1.msra.mxu0 0.0
    %791 = vmatprep.subr.mxu0 0.0
    %792 = vmatpush1.msra.mxu0 0.0
    %793 = vmatprep.subr.mxu0 0.0
    %794 = vmatpush1.msra.mxu0 0.0
    %795 = vmatprep.subr.mxu0 0.0
    %796 = vmatpush1.msra.mxu0 0.0
    %797 = vmatprep.subr.mxu0 0.0
    %798 = vmatpush1.msra.mxu0 0.0
    %799 = vmatprep.subr.mxu0 0.0
    %800 = vmatpush1.msra.mxu0 0.0
    %801 = vmatprep.subr.mxu0 0.0
    %802 = vmatpush1.msra.mxu0 0.0
    %803 = vmatprep.subr.mxu0 0.0
    %804 = vmatpush1.msra.mxu0 0.0
    %805 = vmatprep.mubr.f32.mxu0 0.0
    %806 = vmatmul.mubr.f32.gmra.mrb[0].mxu0 %v739
    %v807 = vpop.f32.mrb[0].mxu0
    %v808 = vadd.f32 0.0, %v807
    %v809 = vpop.f32.mrb[0].mxu0
    %810 = vdwg.mxu0
    %811 = vmatprep.subr.mxu0 0.0
    %812 = vmatpush1.msra.mxu0 %v180
    %813 = vmatprep.subr.mxu0 0.0
    %814 = vmatpush1.msra.mxu0 %v181
    %815 = vmatprep.subr.mxu0 0.0
    %816 = vmatpush1.msra.mxu0 %v182
    %817 = vmatprep.subr.mxu0 0.0
    %818 = vmatpush1.msra.mxu0 %v183
    %819 = vmatprep.subr.mxu0 0.0
    %820 = vmatpush1.msra.mxu0 0.0
    %821 = vmatprep.subr.mxu0 0.0
    %822 = vmatpush1.msra.mxu0 0.0
    %823 = vmatprep.subr.mxu0 0.0
    %824 = vmatpush1.msra.mxu0 0.0
    %825 = vmatprep.subr.mxu0 0.0
    %826 = vmatpush1.msra.mxu0 0.0
    %827 = vmatprep.subr.mxu0 0.0
    %828 = vmatpush1.msra.mxu0 0.0
    %829 = vmatprep.subr.mxu0 0.0
    %830 = vmatpush1.msra.mxu0 0.0
    %831 = vmatprep.subr.mxu0 0.0
    %832 = vmatpush1.msra.mxu0 0.0
    %833 = vmatprep.subr.mxu0 0.0
    %834 = vmatpush1.msra.mxu0 0.0
    %835 = vmatprep.subr.mxu0 0.0
    %836 = vmatpush1.msra.mxu0 0.0
    %837 = vmatprep.subr.mxu0 0.0
    %838 = vmatpush1.msra.mxu0 0.0
    %839 = vmatprep.subr.mxu0 0.0
    %840 = vmatpush1.msra.mxu0 0.0
    %841 = vmatprep.subr.mxu0 0.0
    %842 = vmatpush1.msra.mxu0 0.0
    %843 = vmatprep.subr.mxu0 0.0
    %844 = vmatpush1.msra.mxu0 0.0
    %845 = vmatprep.subr.mxu0 0.0
    %846 = vmatpush1.msra.mxu0 0.0
    %847 = vmatprep.subr.mxu0 0.0
    %848 = vmatpush1.msra.mxu0 0.0
    %849 = vmatprep.subr.mxu0 0.0
    %850 = vmatpush1.msra.mxu0 0.0
    %851 = vmatprep.subr.mxu0 0.0
    %852 = vmatpush1.msra.mxu0 0.0
    %853 = vmatprep.subr.mxu0 0.0
    %854 = vmatpush1.msra.mxu0 0.0
    %855 = vmatprep.subr.mxu0 0.0
    %856 = vmatpush1.msra.mxu0 0.0
    %857 = vmatprep.subr.mxu0 0.0
    %858 = vmatpush1.msra.mxu0 0.0
    %859 = vmatprep.subr.mxu0 0.0
    %860 = vmatpush1.msra.mxu0 0.0
    %861 = vmatprep.subr.mxu0 0.0
    %862 = vmatpush1.msra.mxu0 0.0
    %863 = vmatprep.subr.mxu0 0.0
    %864 = vmatpush1.msra.mxu0 0.0
    %865 = vmatprep.subr.mxu0 0.0
    %866 = vmatpush1.msra.mxu0 0.0
    %867 = vmatprep.subr.mxu0 0.0
    %868 = vmatpush1.msra.mxu0 0.0
    %869 = vmatprep.subr.mxu0 0.0
    %870 = vmatpush1.msra.mxu0 0.0
    %871 = vmatprep.subr.mxu0 0.0
    %872 = vmatpush1.msra.mxu0 0.0
    %873 = vmatprep.subr.mxu0 0.0
    %874 = vmatpush1.msra.mxu0 0.0
    %875 = vmatprep.mubr.f32.mxu0 0.0
    %876 = vmatmul.mubr.f32.gmra.mrb[0].mxu0 %v639
    %v877 = vpop.f32.mrb[0].mxu0
    %v878 = vadd.f32 0.0, %v877
    %v879 = vpop.f32.mrb[0].mxu0
    %880 = vdwg.mxu0
    %v881 = vadd.f32 %v152, %v878
    %v882 = vxor.u32 %v881, 2147483648
    %v883 = vmul.f32 %v882, 1.442695
    %v884 = vpow.pop %v883
    %v885 = vadd.f32 %v884, 1.0
    %v886 = vrcp.pop %v885
    %v887 = vmul.f32 1.0, %v886
    %v888 = vtanh.pop %v881
    %v889 = vmul.f32 %v887, %v629
    %891 = vrot.lane.b32.xlu0 %v888, 64
    %v892 = vpop.permute.xlu0 %891
    %v894 = vmul.f32 %v887, %v892
    %896 = vrot.lane.b32.xlu0 %v894, 32
    %v897 = vpop.permute.xlu0 %896
    %v899 = vadd.f32 %v889, %v897
    %v900 = vtanh.pop %v899
    %902 = vrot.lane.b32.xlu0 %v900, 64
    %v903 = vpop.permute.xlu0 %902
    %v905 = vmul.f32 %v887, %v903
    %907 = vrot.lane.b32.xlu0 %v905, 32
    %v908 = vpop.permute.xlu0 %907
    %v909 = vsel %vm197, %v908, 0
    %911 = vmatprep.subr.mxu0 0.0
    %912 = vmatpush1.msra.mxu0 %v184
    %913 = vmatprep.subr.mxu0 0.0
    %914 = vmatpush1.msra.mxu0 %v185
    %915 = vmatprep.subr.mxu0 0.0
    %916 = vmatpush1.msra.mxu0 %v186
    %917 = vmatprep.subr.mxu0 0.0
    %918 = vmatpush1.msra.mxu0 %v187
    %919 = vmatprep.subr.mxu0 0.0
    %920 = vmatpush1.msra.mxu0 0.0
    %921 = vmatprep.subr.mxu0 0.0
    %922 = vmatpush1.msra.mxu0 0.0
    %923 = vmatprep.subr.mxu0 0.0
    %924 = vmatpush1.msra.mxu0 0.0
    %925 = vmatprep.subr.mxu0 0.0
    %926 = vmatpush1.msra.mxu0 0.0
    %927 = vmatprep.subr.mxu0 0.0
    %928 = vmatpush1.msra.mxu0 0.0
    %929 = vmatprep.subr.mxu0 0.0
    %930 = vmatpush1.msra.mxu0 0.0
    %931 = vmatprep.subr.mxu0 0.0
    %932 = vmatpush1.msra.mxu0 0.0
    %933 = vmatprep.subr.mxu0 0.0
    %934 = vmatpush1.msra.mxu0 0.0
    %935 = vmatprep.subr.mxu0 0.0
    %936 = vmatpush1.msra.mxu0 0.0
    %937 = vmatprep.subr.mxu0 0.0
    %938 = vmatpush1.msra.mxu0 0.0
    %939 = vmatprep.subr.mxu0 0.0
    %940 = vmatpush1.msra.mxu0 0.0
    %941 = vmatprep.subr.mxu0 0.0
    %942 = vmatpush1.msra.mxu0 0.0
    %943 = vmatprep.subr.mxu0 0.0
    %944 = vmatpush1.msra.mxu0 0.0
    %945 = vmatprep.subr.mxu0 0.0
    %946 = vmatpush1.msra.mxu0 0.0
    %947 = vmatprep.subr.mxu0 0.0
    %948 = vmatpush1.msra.mxu0 0.0
    %949 = vmatprep.subr.mxu0 0.0
    %950 = vmatpush1.msra.mxu0 0.0
    %951 = vmatprep.subr.mxu0 0.0
    %952 = vmatpush1.msra.mxu0 0.0
    %953 = vmatprep.subr.mxu0 0.0
    %954 = vmatpush1.msra.mxu0 0.0
    %955 = vmatprep.subr.mxu0 0.0
    %956 = vmatpush1.msra.mxu0 0.0
    %957 = vmatprep.subr.mxu0 0.0
    %958 = vmatpush1.msra.mxu0 0.0
    %959 = vmatprep.subr.mxu0 0.0
    %960 = vmatpush1.msra.mxu0 0.0
    %961 = vmatprep.subr.mxu0 0.0
    %962 = vmatpush1.msra.mxu0 0.0
    %963 = vmatprep.subr.mxu0 0.0
    %964 = vmatpush1.msra.mxu0 0.0
    %965 = vmatprep.subr.mxu0 0.0
    %966 = vmatpush1.msra.mxu0 0.0
    %967 = vmatprep.subr.mxu0 0.0
    %968 = vmatpush1.msra.mxu0 0.0
    %969 = vmatprep.subr.mxu0 0.0
    %970 = vmatpush1.msra.mxu0 0.0
    %971 = vmatprep.subr.mxu0 0.0
    %972 = vmatpush1.msra.mxu0 0.0
    %973 = vmatprep.subr.mxu0 0.0
    %974 = vmatpush1.msra.mxu0 0.0
    %975 = vmatprep.mubr.f32.mxu0 0.0
    %976 = vmatmul.mubr.f32.gmra.mrb[0].mxu0 %v909
    %v977 = vpop.f32.mrb[0].mxu0
    %v978 = vadd.f32 %v808, %v977
    %v979 = vpop.f32.mrb[0].mxu0
    %980 = vdwg.mxu0
    %v981 = vadd.f32 %v978, %v196
    %v982 = vxor.u32 %v981, 2147483648
    %v983 = vmul.f32 %v982, 1.442695
    %v984 = vpow.pop %v983
    %v985 = vadd.f32 %v984, 1.0
    %v986 = vrcp.pop %v985
    %v987 = vmul.f32 1.0, %v986
    %v988 = vtanh.pop %v981
    %v989 = vmul.f32 %v987, %v729
    %991 = vrot.lane.b32.xlu0 %v988, 64
    %v992 = vpop.permute.xlu0 %991
    %v994 = vmul.f32 %v987, %v992
    %996 = vrot.lane.b32.xlu0 %v994, 32
    %v997 = vpop.permute.xlu0 %996
    %v999 = vadd.f32 %v989, %v997
    %v1000 = vtanh.pop %v999
    %1002 = vrot.lane.b32.xlu0 %v1000, 64
    %v1003 = vpop.permute.xlu0 %1002
    %v1005 = vmul.f32 %v987, %v1003
    %1007 = vrot.lane.b32.xlu0 %v1005, 32
    %v1008 = vpop.permute.xlu0 %1007
    %v1009 = vsel %vm197, %v1008, 0
    %1011 = vmatprep.subr.mxu0 0.0
    %1012 = vmatpush1.msra.mxu0 %v188
    %1013 = vmatprep.subr.mxu0 0.0
    %1014 = vmatpush1.msra.mxu0 %v189
    %1015 = vmatprep.subr.mxu0 0.0
    %1016 = vmatpush1.msra.mxu0 %v190
    %1017 = vmatprep.subr.mxu0 0.0
    %1018 = vmatpush1.msra.mxu0 %v191
    %1019 = vmatprep.subr.mxu0 0.0
    %1020 = vmatpush1.msra.mxu0 0.0
    %1021 = vmatprep.subr.mxu0 0.0
    %1022 = vmatpush1.msra.mxu0 0.0
    %1023 = vmatprep.subr.mxu0 0.0
    %1024 = vmatpush1.msra.mxu0 0.0
    %1025 = vmatprep.subr.mxu0 0.0
    %1026 = vmatpush1.msra.mxu0 0.0
    %1027 = vmatprep.subr.mxu0 0.0
    %1028 = vmatpush1.msra.mxu0 0.0
    %1029 = vmatprep.subr.mxu0 0.0
    %1030 = vmatpush1.msra.mxu0 0.0
    %1031 = vmatprep.subr.mxu0 0.0
    %1032 = vmatpush1.msra.mxu0 0.0
    %1033 = vmatprep.subr.mxu0 0.0
    %1034 = vmatpush1.msra.mxu0 0.0
    %1035 = vmatprep.subr.mxu0 0.0
    %1036 = vmatpush1.msra.mxu0 0.0
    %1037 = vmatprep.subr.mxu0 0.0
    %1038 = vmatpush1.msra.mxu0 0.0
    %1039 = vmatprep.subr.mxu0 0.0
    %1040 = vmatpush1.msra.mxu0 0.0
    %1041 = vmatprep.subr.mxu0 0.0
    %1042 = vmatpush1.msra.mxu0 0.0
    %1043 = vmatprep.subr.mxu0 0.0
    %1044 = vmatpush1.msra.mxu0 0.0
    %1045 = vmatprep.subr.mxu0 0.0
    %1046 = vmatpush1.msra.mxu0 0.0
    %1047 = vmatprep.subr.mxu0 0.0
    %1048 = vmatpush1.msra.mxu0 0.0
    %1049 = vmatprep.subr.mxu0 0.0
    %1050 = vmatpush1.msra.mxu0 0.0
    %1051 = vmatprep.subr.mxu0 0.0
    %1052 = vmatpush1.msra.mxu0 0.0
    %1053 = vmatprep.subr.mxu0 0.0
    %1054 = vmatpush1.msra.mxu0 0.0
    %1055 = vmatprep.subr.mxu0 0.0
    %1056 = vmatpush1.msra.mxu0 0.0
    %1057 = vmatprep.subr.mxu0 0.0
    %1058 = vmatpush1.msra.mxu0 0.0
    %1059 = vmatprep.subr.mxu0 0.0
    %1060 = vmatpush1.msra.mxu0 0.0
    %1061 = vmatprep.subr.mxu0 0.0
    %1062 = vmatpush1.msra.mxu0 0.0
    %1063 = vmatprep.subr.mxu0 0.0
    %1064 = vmatpush1.msra.mxu0 0.0
    %1065 = vmatprep.subr.mxu0 0.0
    %1066 = vmatpush1.msra.mxu0 0.0
    %1067 = vmatprep.subr.mxu0 0.0
    %1068 = vmatpush1.msra.mxu0 0.0
    %1069 = vmatprep.subr.mxu0 0.0
    %1070 = vmatpush1.msra.mxu0 0.0
    %1071 = vmatprep.subr.mxu0 0.0
    %1072 = vmatpush1.msra.mxu0 0.0
    %1073 = vmatprep.subr.mxu0 0.0
    %1074 = vmatpush1.msra.mxu0 0.0
    %1075 = vmatprep.mubr.f32.mxu0 0.0
    %1076 = vmatmul.mubr.f32.gmra.mrb[0].mxu0 %v1009
    %v1077 = vpop.f32.mrb[0].mxu0
    %v1078 = vadd.f32 0.0, %v1077
    %v1079 = vpop.f32.mrb[0].mxu0
    %1080 = vdwg.mxu0
    %1081 = vmatprep.subr.mxu0 0.0
    %1082 = vmatpush1.msra.mxu0 %v180
    %1083 = vmatprep.subr.mxu0 0.0
    %1084 = vmatpush1.msra.mxu0 %v181
    %1085 = vmatprep.subr.mxu0 0.0
    %1086 = vmatpush1.msra.mxu0 %v182
    %1087 = vmatprep.subr.mxu0 0.0
    %1088 = vmatpush1.msra.mxu0 %v183
    %1089 = vmatprep.subr.mxu0 0.0
    %1090 = vmatpush1.msra.mxu0 0.0
    %1091 = vmatprep.subr.mxu0 0.0
    %1092 = vmatpush1.msra.mxu0 0.0
    %1093 = vmatprep.subr.mxu0 0.0
    %1094 = vmatpush1.msra.mxu0 0.0
    %1095 = vmatprep.subr.mxu0 0.0
    %1096 = vmatpush1.msra.mxu0 0.0
    %1097 = vmatprep.subr.mxu0 0.0
    %1098 = vmatpush1.msra.mxu0 0.0
    %1099 = vmatprep.subr.mxu0 0.0
    %1100 = vmatpush1.msra.mxu0 0.0
    %1101 = vmatprep.subr.mxu0 0.0
    %1102 = vmatpush1.msra.mxu0 0.0
    %1103 = vmatprep.subr.mxu0 0.0
    %1104 = vmatpush1.msra.mxu0 0.0
    %1105 = vmatprep.subr.mxu0 0.0
    %1106 = vmatpush1.msra.mxu0 0.0
    %1107 = vmatprep.subr.mxu0 0.0
    %1108 = vmatpush1.msra.mxu0 0.0
    %1109 = vmatprep.subr.mxu0 0.0
    %1110 = vmatpush1.msra.mxu0 0.0
    %1111 = vmatprep.subr.mxu0 0.0
    %1112 = vmatpush1.msra.mxu0 0.0
    %1113 = vmatprep.subr.mxu0 0.0
    %1114 = vmatpush1.msra.mxu0 0.0
    %1115 = vmatprep.subr.mxu0 0.0
    %1116 = vmatpush1.msra.mxu0 0.0
    %1117 = vmatprep.subr.mxu0 0.0
    %1118 = vmatpush1.msra.mxu0 0.0
    %1119 = vmatprep.subr.mxu0 0.0
    %1120 = vmatpush1.msra.mxu0 0.0
    %1121 = vmatprep.subr.mxu0 0.0
    %1122 = vmatpush1.msra.mxu0 0.0
    %1123 = vmatprep.subr.mxu0 0.0
    %1124 = vmatpush1.msra.mxu0 0.0
    %1125 = vmatprep.subr.mxu0 0.0
    %1126 = vmatpush1.msra.mxu0 0.0
    %1127 = vmatprep.subr.mxu0 0.0
    %1128 = vmatpush1.msra.mxu0 0.0
    %1129 = vmatprep.subr.mxu0 0.0
    %1130 = vmatpush1.msra.mxu0 0.0
    %1131 = vmatprep.subr.mxu0 0.0
    %1132 = vmatpush1.msra.mxu0 0.0
    %1133 = vmatprep.subr.mxu0 0.0
    %1134 = vmatpush1.msra.mxu0 0.0
    %1135 = vmatprep.subr.mxu0 0.0
    %1136 = vmatpush1.msra.mxu0 0.0
    %1137 = vmatprep.subr.mxu0 0.0
    %1138 = vmatpush1.msra.mxu0 0.0
    %1139 = vmatprep.subr.mxu0 0.0
    %1140 = vmatpush1.msra.mxu0 0.0
    %1141 = vmatprep.subr.mxu0 0.0
    %1142 = vmatpush1.msra.mxu0 0.0
    %1143 = vmatprep.subr.mxu0 0.0
    %1144 = vmatpush1.msra.mxu0 0.0
    %1145 = vmatprep.mubr.f32.mxu0 0.0
    %1146 = vmatmul.mubr.f32.gmra.mrb[0].mxu0 %v909
    %v1147 = vpop.f32.mrb[0].mxu0
    %v1148 = vadd.f32 0.0, %v1147
    %v1149 = vpop.f32.mrb[0].mxu0
    %1150 = vdwg.mxu0
    %v1151 = vadd.f32 %v157, %v1148
    %v1152 = vxor.u32 %v1151, 2147483648
    %v1153 = vmul.f32 %v1152, 1.442695
    %v1154 = vpow.pop %v1153
    %v1155 = vadd.f32 %v1154, 1.0
    %v1156 = vrcp.pop %v1155
    %v1157 = vmul.f32 1.0, %v1156
    %v1158 = vtanh.pop %v1151
    %v1159 = vmul.f32 %v1157, %v899
    %1161 = vrot.lane.b32.xlu0 %v1158, 64
    %v1162 = vpop.permute.xlu0 %1161
    %v1164 = vmul.f32 %v1157, %v1162
    %1166 = vrot.lane.b32.xlu0 %v1164, 32
    %v1167 = vpop.permute.xlu0 %1166
    %v1169 = vadd.f32 %v1159, %v1167
    %v1170 = vtanh.pop %v1169
    %1172 = vrot.lane.b32.xlu0 %v1170, 64
    %v1173 = vpop.permute.xlu0 %1172
    %v1175 = vmul.f32 %v1157, %v1173
    %1177 = vrot.lane.b32.xlu0 %v1175, 32
    %v1178 = vpop.permute.xlu0 %1177
    %v1179 = vsel %vm197, %v1178, 0
    %1181 = vmatprep.subr.mxu0 0.0
    %1182 = vmatpush1.msra.mxu0 %v184
    %1183 = vmatprep.subr.mxu0 0.0
    %1184 = vmatpush1.msra.mxu0 %v185
    %1185 = vmatprep.subr.mxu0 0.0
    %1186 = vmatpush1.msra.mxu0 %v186
    %1187 = vmatprep.subr.mxu0 0.0
    %1188 = vmatpush1.msra.mxu0 %v187
    %1189 = vmatprep.subr.mxu0 0.0
    %1190 = vmatpush1.msra.mxu0 0.0
    %1191 = vmatprep.subr.mxu0 0.0
    %1192 = vmatpush1.msra.mxu0 0.0
    %1193 = vmatprep.subr.mxu0 0.0
    %1194 = vmatpush1.msra.mxu0 0.0
    %1195 = vmatprep.subr.mxu0 0.0
    %1196 = vmatpush1.msra.mxu0 0.0
    %1197 = vmatprep.subr.mxu0 0.0
    %1198 = vmatpush1.msra.mxu0 0.0
    %1199 = vmatprep.subr.mxu0 0.0
    %1200 = vmatpush1.msra.mxu0 0.0
    %1201 = vmatprep.subr.mxu0 0.0
    %1202 = vmatpush1.msra.mxu0 0.0
    %1203 = vmatprep.subr.mxu0 0.0
    %1204 = vmatpush1.msra.mxu0 0.0
    %1205 = vmatprep.subr.mxu0 0.0
    %1206 = vmatpush1.msra.mxu0 0.0
    %1207 = vmatprep.subr.mxu0 0.0
    %1208 = vmatpush1.msra.mxu0 0.0
    %1209 = vmatprep.subr.mxu0 0.0
    %1210 = vmatpush1.msra.mxu0 0.0
    %1211 = vmatprep.subr.mxu0 0.0
    %1212 = vmatpush1.msra.mxu0 0.0
    %1213 = vmatprep.subr.mxu0 0.0
    %1214 = vmatpush1.msra.mxu0 0.0
    %1215 = vmatprep.subr.mxu0 0.0
    %1216 = vmatpush1.msra.mxu0 0.0
    %1217 = vmatprep.subr.mxu0 0.0
    %1218 = vmatpush1.msra.mxu0 0.0
    %1219 = vmatprep.subr.mxu0 0.0
    %1220 = vmatpush1.msra.mxu0 0.0
    %1221 = vmatprep.subr.mxu0 0.0
    %1222 = vmatpush1.msra.mxu0 0.0
    %1223 = vmatprep.subr.mxu0 0.0
    %1224 = vmatpush1.msra.mxu0 0.0
    %1225 = vmatprep.subr.mxu0 0.0
    %1226 = vmatpush1.msra.mxu0 0.0
    %1227 = vmatprep.subr.mxu0 0.0
    %1228 = vmatpush1.msra.mxu0 0.0
    %1229 = vmatprep.subr.mxu0 0.0
    %1230 = vmatpush1.msra.mxu0 0.0
    %1231 = vmatprep.subr.mxu0 0.0
    %1232 = vmatpush1.msra.mxu0 0.0
    %1233 = vmatprep.subr.mxu0 0.0
    %1234 = vmatpush1.msra.mxu0 0.0
    %1235 = vmatprep.subr.mxu0 0.0
    %1236 = vmatpush1.msra.mxu0 0.0
    %1237 = vmatprep.subr.mxu0 0.0
    %1238 = vmatpush1.msra.mxu0 0.0
    %1239 = vmatprep.subr.mxu0 0.0
    %1240 = vmatpush1.msra.mxu0 0.0
    %1241 = vmatprep.subr.mxu0 0.0
    %1242 = vmatpush1.msra.mxu0 0.0
    %1243 = vmatprep.subr.mxu0 0.0
    %1244 = vmatpush1.msra.mxu0 0.0
    %1245 = vmatprep.mubr.f32.mxu0 0.0
    %1246 = vmatmul.mubr.f32.gmra.mrb[0].mxu0 %v1179
    %v1247 = vpop.f32.mrb[0].mxu0
    %v1248 = vadd.f32 %v1078, %v1247
    %v1249 = vpop.f32.mrb[0].mxu0
    %1250 = vdwg.mxu0
    %v1251 = vadd.f32 %v1248, %v196
    %v1252 = vxor.u32 %v1251, 2147483648
    %v1253 = vmul.f32 %v1252, 1.442695
    %v1254 = vpow.pop %v1253
    %v1255 = vadd.f32 %v1254, 1.0
    %v1256 = vrcp.pop %v1255
    %v1257 = vmul.f32 1.0, %v1256
    %v1258 = vtanh.pop %v1251
    %v1259 = vmul.f32 %v1257, %v999
    %1261 = vrot.lane.b32.xlu0 %v1258, 64
    %v1262 = vpop.permute.xlu0 %1261
    %v1264 = vmul.f32 %v1257, %v1262
    %1266 = vrot.lane.b32.xlu0 %v1264, 32
    %v1267 = vpop.permute.xlu0 %1266
    %v1269 = vadd.f32 %v1259, %v1267
    %v1270 = vtanh.pop %v1269
    %1272 = vrot.lane.b32.xlu0 %v1270, 64
    %v1273 = vpop.permute.xlu0 %1272
    %v1275 = vmul.f32 %v1257, %v1273
    %1277 = vrot.lane.b32.xlu0 %v1275, 32
    %v1278 = vpop.permute.xlu0 %1277
    %v1279 = vsel %vm197, %v1278, 0
    %1281 = vmatprep.subr.mxu0 0.0
    %1282 = vmatpush1.msra.mxu0 %v188
    %1283 = vmatprep.subr.mxu0 0.0
    %1284 = vmatpush1.msra.mxu0 %v189
    %1285 = vmatprep.subr.mxu0 0.0
    %1286 = vmatpush1.msra.mxu0 %v190
    %1287 = vmatprep.subr.mxu0 0.0
    %1288 = vmatpush1.msra.mxu0 %v191
    %1289 = vmatprep.subr.mxu0 0.0
    %1290 = vmatpush1.msra.mxu0 0.0
    %1291 = vmatprep.subr.mxu0 0.0
    %1292 = vmatpush1.msra.mxu0 0.0
    %1293 = vmatprep.subr.mxu0 0.0
    %1294 = vmatpush1.msra.mxu0 0.0
    %1295 = vmatprep.subr.mxu0 0.0
    %1296 = vmatpush1.msra.mxu0 0.0
    %1297 = vmatprep.subr.mxu0 0.0
    %1298 = vmatpush1.msra.mxu0 0.0
    %1299 = vmatprep.subr.mxu0 0.0
    %1300 = vmatpush1.msra.mxu0 0.0
    %1301 = vmatprep.subr.mxu0 0.0
    %1302 = vmatpush1.msra.mxu0 0.0
    %1303 = vmatprep.subr.mxu0 0.0
    %1304 = vmatpush1.msra.mxu0 0.0
    %1305 = vmatprep.subr.mxu0 0.0
    %1306 = vmatpush1.msra.mxu0 0.0
    %1307 = vmatprep.subr.mxu0 0.0
    %1308 = vmatpush1.msra.mxu0 0.0
    %1309 = vmatprep.subr.mxu0 0.0
    %1310 = vmatpush1.msra.mxu0 0.0
    %1311 = vmatprep.subr.mxu0 0.0
    %1312 = vmatpush1.msra.mxu0 0.0
    %1313 = vmatprep.subr.mxu0 0.0
    %1314 = vmatpush1.msra.mxu0 0.0
    %1315 = vmatprep.subr.mxu0 0.0
    %1316 = vmatpush1.msra.mxu0 0.0
    %1317 = vmatprep.subr.mxu0 0.0
    %1318 = vmatpush1.msra.mxu0 0.0
    %1319 = vmatprep.subr.mxu0 0.0
    %1320 = vmatpush1.msra.mxu0 0.0
    %1321 = vmatprep.subr.mxu0 0.0
    %1322 = vmatpush1.msra.mxu0 0.0
    %1323 = vmatprep.subr.mxu0 0.0
    %1324 = vmatpush1.msra.mxu0 0.0
    %1325 = vmatprep.subr.mxu0 0.0
    %1326 = vmatpush1.msra.mxu0 0.0
    %1327 = vmatprep.subr.mxu0 0.0
    %1328 = vmatpush1.msra.mxu0 0.0
    %1329 = vmatprep.subr.mxu0 0.0
    %1330 = vmatpush1.msra.mxu0 0.0
    %1331 = vmatprep.subr.mxu0 0.0
    %1332 = vmatpush1.msra.mxu0 0.0
    %1333 = vmatprep.subr.mxu0 0.0
    %1334 = vmatpush1.msra.mxu0 0.0
    %1335 = vmatprep.subr.mxu0 0.0
    %1336 = vmatpush1.msra.mxu0 0.0
    %1337 = vmatprep.subr.mxu0 0.0
    %1338 = vmatpush1.msra.mxu0 0.0
    %1339 = vmatprep.subr.mxu0 0.0
    %1340 = vmatpush1.msra.mxu0 0.0
    %1341 = vmatprep.subr.mxu0 0.0
    %1342 = vmatpush1.msra.mxu0 0.0
    %1343 = vmatprep.subr.mxu0 0.0
    %1344 = vmatpush1.msra.mxu0 0.0
    %1345 = vmatprep.mubr.f32.mxu0 0.0
    %1346 = vmatmul.mubr.f32.gmra.mrb[0].mxu0 %v1279
    %v1347 = vpop.f32.mrb[0].mxu0
    %v1348 = vadd.f32 0.0, %v1347
    %v1349 = vpop.f32.mrb[0].mxu0
    %1350 = vdwg.mxu0
    %1351 = vmatprep.subr.mxu0 0.0
    %1352 = vmatpush1.msra.mxu0 %v180
    %1353 = vmatprep.subr.mxu0 0.0
    %1354 = vmatpush1.msra.mxu0 %v181
    %1355 = vmatprep.subr.mxu0 0.0
    %1356 = vmatpush1.msra.mxu0 %v182
    %1357 = vmatprep.subr.mxu0 0.0
    %1358 = vmatpush1.msra.mxu0 %v183
    %1359 = vmatprep.subr.mxu0 0.0
    %1360 = vmatpush1.msra.mxu0 0.0
    %1361 = vmatprep.subr.mxu0 0.0
    %1362 = vmatpush1.msra.mxu0 0.0
    %1363 = vmatprep.subr.mxu0 0.0
    %1364 = vmatpush1.msra.mxu0 0.0
    %1365 = vmatprep.subr.mxu0 0.0
    %1366 = vmatpush1.msra.mxu0 0.0
    %1367 = vmatprep.subr.mxu0 0.0
    %1368 = vmatpush1.msra.mxu0 0.0
    %1369 = vmatprep.subr.mxu0 0.0
    %1370 = vmatpush1.msra.mxu0 0.0
    %1371 = vmatprep.subr.mxu0 0.0
    %1372 = vmatpush1.msra.mxu0 0.0
    %1373 = vmatprep.subr.mxu0 0.0
    %1374 = vmatpush1.msra.mxu0 0.0
    %1375 = vmatprep.subr.mxu0 0.0
    %1376 = vmatpush1.msra.mxu0 0.0
    %1377 = vmatprep.subr.mxu0 0.0
    %1378 = vmatpush1.msra.mxu0 0.0
    %1379 = vmatprep.subr.mxu0 0.0
    %1380 = vmatpush1.msra.mxu0 0.0
    %1381 = vmatprep.subr.mxu0 0.0
    %1382 = vmatpush1.msra.mxu0 0.0
    %1383 = vmatprep.subr.mxu0 0.0
    %1384 = vmatpush1.msra.mxu0 0.0
    %1385 = vmatprep.subr.mxu0 0.0
    %1386 = vmatpush1.msra.mxu0 0.0
    %1387 = vmatprep.subr.mxu0 0.0
    %1388 = vmatpush1.msra.mxu0 0.0
    %1389 = vmatprep.subr.mxu0 0.0
    %1390 = vmatpush1.msra.mxu0 0.0
    %1391 = vmatprep.subr.mxu0 0.0
    %1392 = vmatpush1.msra.mxu0 0.0
    %1393 = vmatprep.subr.mxu0 0.0
    %1394 = vmatpush1.msra.mxu0 0.0
    %1395 = vmatprep.subr.mxu0 0.0
    %1396 = vmatpush1.msra.mxu0 0.0
    %1397 = vmatprep.subr.mxu0 0.0
    %1398 = vmatpush1.msra.mxu0 0.0
    %1399 = vmatprep.subr.mxu0 0.0
    %1400 = vmatpush1.msra.mxu0 0.0
    %1401 = vmatprep.subr.mxu0 0.0
    %1402 = vmatpush1.msra.mxu0 0.0
    %1403 = vmatprep.subr.mxu0 0.0
    %1404 = vmatpush1.msra.mxu0 0.0
    %1405 = vmatprep.subr.mxu0 0.0
    %1406 = vmatpush1.msra.mxu0 0.0
    %1407 = vmatprep.subr.mxu0 0.0
    %1408 = vmatpush1.msra.mxu0 0.0
    %1409 = vmatprep.subr.mxu0 0.0
    %1410 = vmatpush1.msra.mxu0 0.0
    %1411 = vmatprep.subr.mxu0 0.0
    %1412 = vmatpush1.msra.mxu0 0.0
    %1413 = vmatprep.subr.mxu0 0.0
    %1414 = vmatpush1.msra.mxu0 0.0
    %1415 = vmatprep.mubr.f32.mxu0 0.0
    %1416 = vmatmul.mubr.f32.gmra.mrb[0].mxu0 %v1179
    %v1417 = vpop.f32.mrb[0].mxu0
    %v1418 = vadd.f32 0.0, %v1417
    %v1419 = vpop.f32.mrb[0].mxu0
    %1420 = vdwg.mxu0
    %v1421 = vadd.f32 %v162, %v1418
    %v1422 = vxor.u32 %v1421, 2147483648
    %v1423 = vmul.f32 %v1422, 1.442695
    %v1424 = vpow.pop %v1423
    %v1425 = vadd.f32 %v1424, 1.0
    %v1426 = vrcp.pop %v1425
    %v1427 = vmul.f32 1.0, %v1426
    %v1428 = vtanh.pop %v1421
    %v1429 = vmul.f32 %v1427, %v1169
    %1431 = vrot.lane.b32.xlu0 %v1428, 64
    %v1432 = vpop.permute.xlu0 %1431
    %v1434 = vmul.f32 %v1427, %v1432
    %1436 = vrot.lane.b32.xlu0 %v1434, 32
    %v1437 = vpop.permute.xlu0 %1436
    %v1439 = vadd.f32 %v1429, %v1437
    %v1440 = vtanh.pop %v1439
    %1442 = vrot.lane.b32.xlu0 %v1440, 64
    %v1443 = vpop.permute.xlu0 %1442
    %v1445 = vmul.f32 %v1427, %v1443
    %1447 = vrot.lane.b32.xlu0 %v1445, 32
    %v1448 = vpop.permute.xlu0 %1447
    %v1449 = vsel %vm197, %v1448, 0
    %1451 = vmatprep.subr.mxu0 0.0
    %1452 = vmatpush1.msra.mxu0 %v184
    %1453 = vmatprep.subr.mxu0 0.0
    %1454 = vmatpush1.msra.mxu0 %v185
    %1455 = vmatprep.subr.mxu0 0.0
    %1456 = vmatpush1.msra.mxu0 %v186
    %1457 = vmatprep.subr.mxu0 0.0
    %1458 = vmatpush1.msra.mxu0 %v187
    %1459 = vmatprep.subr.mxu0 0.0
    %1460 = vmatpush1.msra.mxu0 0.0
    %1461 = vmatprep.subr.mxu0 0.0
    %1462 = vmatpush1.msra.mxu0 0.0
    %1463 = vmatprep.subr.mxu0 0.0
    %1464 = vmatpush1.msra.mxu0 0.0
    %1465 = vmatprep.subr.mxu0 0.0
    %1466 = vmatpush1.msra.mxu0 0.0
    %1467 = vmatprep.subr.mxu0 0.0
    %1468 = vmatpush1.msra.mxu0 0.0
    %1469 = vmatprep.subr.mxu0 0.0
    %1470 = vmatpush1.msra.mxu0 0.0
    %1471 = vmatprep.subr.mxu0 0.0
    %1472 = vmatpush1.msra.mxu0 0.0
    %1473 = vmatprep.subr.mxu0 0.0
    %1474 = vmatpush1.msra.mxu0 0.0
    %1475 = vmatprep.subr.mxu0 0.0
    %1476 = vmatpush1.msra.mxu0 0.0
    %1477 = vmatprep.subr.mxu0 0.0
    %1478 = vmatpush1.msra.mxu0 0.0
    %1479 = vmatprep.subr.mxu0 0.0
    %1480 = vmatpush1.msra.mxu0 0.0
    %1481 = vmatprep.subr.mxu0 0.0
    %1482 = vmatpush1.msra.mxu0 0.0
    %1483 = vmatprep.subr.mxu0 0.0
    %1484 = vmatpush1.msra.mxu0 0.0
    %1485 = vmatprep.subr.mxu0 0.0
    %1486 = vmatpush1.msra.mxu0 0.0
    %1487 = vmatprep.subr.mxu0 0.0
    %1488 = vmatpush1.msra.mxu0 0.0
    %1489 = vmatprep.subr.mxu0 0.0
    %1490 = vmatpush1.msra.mxu0 0.0
    %1491 = vmatprep.subr.mxu0 0.0
    %1492 = vmatpush1.msra.mxu0 0.0
    %1493 = vmatprep.subr.mxu0 0.0
    %1494 = vmatpush1.msra.mxu0 0.0
    %1495 = vmatprep.subr.mxu0 0.0
    %1496 = vmatpush1.msra.mxu0 0.0
    %1497 = vmatprep.subr.mxu0 0.0
    %1498 = vmatpush1.msra.mxu0 0.0
    %1499 = vmatprep.subr.mxu0 0.0
    %1500 = vmatpush1.msra.mxu0 0.0
    %1501 = vmatprep.subr.mxu0 0.0
    %1502 = vmatpush1.msra.mxu0 0.0
    %1503 = vmatprep.subr.mxu0 0.0
    %1504 = vmatpush1.msra.mxu0 0.0
    %1505 = vmatprep.subr.mxu0 0.0
    %1506 = vmatpush1.msra.mxu0 0.0
    %1507 = vmatprep.subr.mxu0 0.0
    %1508 = vmatpush1.msra.mxu0 0.0
    %1509 = vmatprep.subr.mxu0 0.0
    %1510 = vmatpush1.msra.mxu0 0.0
    %1511 = vmatprep.subr.mxu0 0.0
    %1512 = vmatpush1.msra.mxu0 0.0
    %1513 = vmatprep.subr.mxu0 0.0
    %1514 = vmatpush1.msra.mxu0 0.0
    %1515 = vmatprep.mubr.f32.mxu0 0.0
    %1516 = vmatmul.mubr.f32.gmra.mrb[0].mxu0 %v1449
    %v1517 = vpop.f32.mrb[0].mxu0
    %v1518 = vadd.f32 %v1348, %v1517
    %v1519 = vpop.f32.mrb[0].mxu0
    %1520 = vdwg.mxu0
    %v1521 = vadd.f32 %v1518, %v196
    %v1522 = vxor.u32 %v1521, 2147483648
    %v1523 = vmul.f32 %v1522, 1.442695
    %v1524 = vpow.pop %v1523
    %v1525 = vadd.f32 %v1524, 1.0
    %v1526 = vrcp.pop %v1525
    %v1527 = vmul.f32 1.0, %v1526
    %v1528 = vtanh.pop %v1521
    %v1529 = vmul.f32 %v1527, %v1269
    %1531 = vrot.lane.b32.xlu0 %v1528, 64
    %v1532 = vpop.permute.xlu0 %1531
    %v1534 = vmul.f32 %v1527, %v1532
    %1536 = vrot.lane.b32.xlu0 %v1534, 32
    %v1537 = vpop.permute.xlu0 %1536
    %v1539 = vadd.f32 %v1529, %v1537
    %v1540 = vtanh.pop %v1539
    %1542 = vrot.lane.b32.xlu0 %v1540, 64
    %v1543 = vpop.permute.xlu0 %1542
    %v1545 = vmul.f32 %v1527, %v1543
    %1547 = vrot.lane.b32.xlu0 %v1545, 32
    %v1548 = vpop.permute.xlu0 %1547
    %v1549 = vsel %vm197, %v1548, 0
    %1551 = vmatprep.subr.mxu0 0.0
    %1552 = vmatpush1.msra.mxu0 %v188
    %1553 = vmatprep.subr.mxu0 0.0
    %1554 = vmatpush1.msra.mxu0 %v189
    %1555 = vmatprep.subr.mxu0 0.0
    %1556 = vmatpush1.msra.mxu0 %v190
    %1557 = vmatprep.subr.mxu0 0.0
    %1558 = vmatpush1.msra.mxu0 %v191
    %1559 = vmatprep.subr.mxu0 0.0
    %1560 = vmatpush1.msra.mxu0 0.0
    %1561 = vmatprep.subr.mxu0 0.0
    %1562 = vmatpush1.msra.mxu0 0.0
    %1563 = vmatprep.subr.mxu0 0.0
    %1564 = vmatpush1.msra.mxu0 0.0
    %1565 = vmatprep.subr.mxu0 0.0
    %1566 = vmatpush1.msra.mxu0 0.0
    %1567 = vmatprep.subr.mxu0 0.0
    %1568 = vmatpush1.msra.mxu0 0.0
    %1569 = vmatprep.subr.mxu0 0.0
    %1570 = vmatpush1.msra.mxu0 0.0
    %1571 = vmatprep.subr.mxu0 0.0
    %1572 = vmatpush1.msra.mxu0 0.0
    %1573 = vmatprep.subr.mxu0 0.0
    %1574 = vmatpush1.msra.mxu0 0.0
    %1575 = vmatprep.subr.mxu0 0.0
    %1576 = vmatpush1.msra.mxu0 0.0
    %1577 = vmatprep.subr.mxu0 0.0
    %1578 = vmatpush1.msra.mxu0 0.0
    %1579 = vmatprep.subr.mxu0 0.0
    %1580 = vmatpush1.msra.mxu0 0.0
    %1581 = vmatprep.subr.mxu0 0.0
    %1582 = vmatpush1.msra.mxu0 0.0
    %1583 = vmatprep.subr.mxu0 0.0
    %1584 = vmatpush1.msra.mxu0 0.0
    %1585 = vmatprep.subr.mxu0 0.0
    %1586 = vmatpush1.msra.mxu0 0.0
    %1587 = vmatprep.subr.mxu0 0.0
    %1588 = vmatpush1.msra.mxu0 0.0
    %1589 = vmatprep.subr.mxu0 0.0
    %1590 = vmatpush1.msra.mxu0 0.0
    %1591 = vmatprep.subr.mxu0 0.0
    %1592 = vmatpush1.msra.mxu0 0.0
    %1593 = vmatprep.subr.mxu0 0.0
    %1594 = vmatpush1.msra.mxu0 0.0
    %1595 = vmatprep.subr.mxu0 0.0
    %1596 = vmatpush1.msra.mxu0 0.0
    %1597 = vmatprep.subr.mxu0 0.0
    %1598 = vmatpush1.msra.mxu0 0.0
    %1599 = vmatprep.subr.mxu0 0.0
    %1600 = vmatpush1.msra.mxu0 0.0
    %1601 = vmatprep.subr.mxu0 0.0
    %1602 = vmatpush1.msra.mxu0 0.0
    %1603 = vmatprep.subr.mxu0 0.0
    %1604 = vmatpush1.msra.mxu0 0.0
    %1605 = vmatprep.subr.mxu0 0.0
    %1606 = vmatpush1.msra.mxu0 0.0
    %1607 = vmatprep.subr.mxu0 0.0
    %1608 = vmatpush1.msra.mxu0 0.0
    %1609 = vmatprep.subr.mxu0 0.0
    %1610 = vmatpush1.msra.mxu0 0.0
    %1611 = vmatprep.subr.mxu0 0.0
    %1612 = vmatpush1.msra.mxu0 0.0
    %1613 = vmatprep.subr.mxu0 0.0
    %1614 = vmatpush1.msra.mxu0 0.0
    %1615 = vmatprep.mubr.f32.mxu0 0.0
    %1616 = vmatmul.mubr.f32.gmra.mrb[0].mxu0 %v1549
    %v1617 = vpop.f32.mrb[0].mxu0
    %v1618 = vadd.f32 0.0, %v1617
    %v1619 = vpop.f32.mrb[0].mxu0
    %1620 = vdwg.mxu0
    %1621 = vmatprep.subr.mxu0 0.0
    %1622 = vmatpush1.msra.mxu0 %v180
    %1623 = vmatprep.subr.mxu0 0.0
    %1624 = vmatpush1.msra.mxu0 %v181
    %1625 = vmatprep.subr.mxu0 0.0
    %1626 = vmatpush1.msra.mxu0 %v182
    %1627 = vmatprep.subr.mxu0 0.0
    %1628 = vmatpush1.msra.mxu0 %v183
    %1629 = vmatprep.subr.mxu0 0.0
    %1630 = vmatpush1.msra.mxu0 0.0
    %1631 = vmatprep.subr.mxu0 0.0
    %1632 = vmatpush1.msra.mxu0 0.0
    %1633 = vmatprep.subr.mxu0 0.0
    %1634 = vmatpush1.msra.mxu0 0.0
    %1635 = vmatprep.subr.mxu0 0.0
    %1636 = vmatpush1.msra.mxu0 0.0
    %1637 = vmatprep.subr.mxu0 0.0
    %1638 = vmatpush1.msra.mxu0 0.0
    %1639 = vmatprep.subr.mxu0 0.0
    %1640 = vmatpush1.msra.mxu0 0.0
    %1641 = vmatprep.subr.mxu0 0.0
    %1642 = vmatpush1.msra.mxu0 0.0
    %1643 = vmatprep.subr.mxu0 0.0
    %1644 = vmatpush1.msra.mxu0 0.0
    %1645 = vmatprep.subr.mxu0 0.0
    %1646 = vmatpush1.msra.mxu0 0.0
    %1647 = vmatprep.subr.mxu0 0.0
    %1648 = vmatpush1.msra.mxu0 0.0
    %1649 = vmatprep.subr.mxu0 0.0
    %1650 = vmatpush1.msra.mxu0 0.0
    %1651 = vmatprep.subr.mxu0 0.0
    %1652 = vmatpush1.msra.mxu0 0.0
    %1653 = vmatprep.subr.mxu0 0.0
    %1654 = vmatpush1.msra.mxu0 0.0
    %1655 = vmatprep.subr.mxu0 0.0
    %1656 = vmatpush1.msra.mxu0 0.0
    %1657 = vmatprep.subr.mxu0 0.0
    %1658 = vmatpush1.msra.mxu0 0.0
    %1659 = vmatprep.subr.mxu0 0.0
    %1660 = vmatpush1.msra.mxu0 0.0
    %1661 = vmatprep.subr.mxu0 0.0
    %1662 = vmatpush1.msra.mxu0 0.0
    %1663 = vmatprep.subr.mxu0 0.0
    %1664 = vmatpush1.msra.mxu0 0.0
    %1665 = vmatprep.subr.mxu0 0.0
    %1666 = vmatpush1.msra.mxu0 0.0
    %1667 = vmatprep.subr.mxu0 0.0
    %1668 = vmatpush1.msra.mxu0 0.0
    %1669 = vmatprep.subr.mxu0 0.0
    %1670 = vmatpush1.msra.mxu0 0.0
    %1671 = vmatprep.subr.mxu0 0.0
    %1672 = vmatpush1.msra.mxu0 0.0
    %1673 = vmatprep.subr.mxu0 0.0
    %1674 = vmatpush1.msra.mxu0 0.0
    %1675 = vmatprep.subr.mxu0 0.0
    %1676 = vmatpush1.msra.mxu0 0.0
    %1677 = vmatprep.subr.mxu0 0.0
    %1678 = vmatpush1.msra.mxu0 0.0
    %1679 = vmatprep.subr.mxu0 0.0
    %1680 = vmatpush1.msra.mxu0 0.0
    %1681 = vmatprep.subr.mxu0 0.0
    %1682 = vmatpush1.msra.mxu0 0.0
    %1683 = vmatprep.subr.mxu0 0.0
    %1684 = vmatpush1.msra.mxu0 0.0
    %1685 = vmatprep.mubr.f32.mxu0 0.0
    %1686 = vmatmul.mubr.f32.gmra.mrb[0].mxu0 %v1449
    %v1687 = vpop.f32.mrb[0].mxu0
    %v1688 = vadd.f32 0.0, %v1687
    %v1689 = vpop.f32.mrb[0].mxu0
    %1690 = vdwg.mxu0
    %v1691 = vadd.f32 %v167, %v1688
    %v1692 = vxor.u32 %v1691, 2147483648
    %v1693 = vmul.f32 %v1692, 1.442695
    %v1694 = vpow.pop %v1693
    %v1695 = vadd.f32 %v1694, 1.0
    %v1696 = vrcp.pop %v1695
    %v1697 = vmul.f32 1.0, %v1696
    %v1698 = vtanh.pop %v1691
    %v1699 = vmul.f32 %v1697, %v1439
    %1701 = vrot.lane.b32.xlu0 %v1698, 64
    %v1702 = vpop.permute.xlu0 %1701
    %v1704 = vmul.f32 %v1697, %v1702
    %1706 = vrot.lane.b32.xlu0 %v1704, 32
    %v1707 = vpop.permute.xlu0 %1706
    %v1709 = vadd.f32 %v1699, %v1707
    %v1710 = vtanh.pop %v1709
    %1712 = vrot.lane.b32.xlu0 %v1710, 64
    %v1713 = vpop.permute.xlu0 %1712
    %v1715 = vmul.f32 %v1697, %v1713
    %1717 = vrot.lane.b32.xlu0 %v1715, 32
    %v1718 = vpop.permute.xlu0 %1717
    %v1719 = vsel %vm197, %v1718, 0
    %1721 = vmatprep.subr.mxu0 0.0
    %1722 = vmatpush1.msra.mxu0 %v184
    %1723 = vmatprep.subr.mxu0 0.0
    %1724 = vmatpush1.msra.mxu0 %v185
    %1725 = vmatprep.subr.mxu0 0.0
    %1726 = vmatpush1.msra.mxu0 %v186
    %1727 = vmatprep.subr.mxu0 0.0
    %1728 = vmatpush1.msra.mxu0 %v187
    %1729 = vmatprep.subr.mxu0 0.0
    %1730 = vmatpush1.msra.mxu0 0.0
    %1731 = vmatprep.subr.mxu0 0.0
    %1732 = vmatpush1.msra.mxu0 0.0
    %1733 = vmatprep.subr.mxu0 0.0
    %1734 = vmatpush1.msra.mxu0 0.0
    %1735 = vmatprep.subr.mxu0 0.0
    %1736 = vmatpush1.msra.mxu0 0.0
    %1737 = vmatprep.subr.mxu0 0.0
    %1738 = vmatpush1.msra.mxu0 0.0
    %1739 = vmatprep.subr.mxu0 0.0
    %1740 = vmatpush1.msra.mxu0 0.0
    %1741 = vmatprep.subr.mxu0 0.0
    %1742 = vmatpush1.msra.mxu0 0.0
    %1743 = vmatprep.subr.mxu0 0.0
    %1744 = vmatpush1.msra.mxu0 0.0
    %1745 = vmatprep.subr.mxu0 0.0
    %1746 = vmatpush1.msra.mxu0 0.0
    %1747 = vmatprep.subr.mxu0 0.0
    %1748 = vmatpush1.msra.mxu0 0.0
    %1749 = vmatprep.subr.mxu0 0.0
    %1750 = vmatpush1.msra.mxu0 0.0
    %1751 = vmatprep.subr.mxu0 0.0
    %1752 = vmatpush1.msra.mxu0 0.0
    %1753 = vmatprep.subr.mxu0 0.0
    %1754 = vmatpush1.msra.mxu0 0.0
    %1755 = vmatprep.subr.mxu0 0.0
    %1756 = vmatpush1.msra.mxu0 0.0
    %1757 = vmatprep.subr.mxu0 0.0
    %1758 = vmatpush1.msra.mxu0 0.0
    %1759 = vmatprep.subr.mxu0 0.0
    %1760 = vmatpush1.msra.mxu0 0.0
    %1761 = vmatprep.subr.mxu0 0.0
    %1762 = vmatpush1.msra.mxu0 0.0
    %1763 = vmatprep.subr.mxu0 0.0
    %1764 = vmatpush1.msra.mxu0 0.0
    %1765 = vmatprep.subr.mxu0 0.0
    %1766 = vmatpush1.msra.mxu0 0.0
    %1767 = vmatprep.subr.mxu0 0.0
    %1768 = vmatpush1.msra.mxu0 0.0
    %1769 = vmatprep.subr.mxu0 0.0
    %1770 = vmatpush1.msra.mxu0 0.0
    %1771 = vmatprep.subr.mxu0 0.0
    %1772 = vmatpush1.msra.mxu0 0.0
    %1773 = vmatprep.subr.mxu0 0.0
    %1774 = vmatpush1.msra.mxu0 0.0
    %1775 = vmatprep.subr.mxu0 0.0
    %1776 = vmatpush1.msra.mxu0 0.0
    %1777 = vmatprep.subr.mxu0 0.0
    %1778 = vmatpush1.msra.mxu0 0.0
    %1779 = vmatprep.subr.mxu0 0.0
    %1780 = vmatpush1.msra.mxu0 0.0
    %1781 = vmatprep.subr.mxu0 0.0
    %1782 = vmatpush1.msra.mxu0 0.0
    %1783 = vmatprep.subr.mxu0 0.0
    %1784 = vmatpush1.msra.mxu0 0.0
    %1785 = vmatprep.mubr.f32.mxu0 0.0
    %1786 = vmatmul.mubr.f32.gmra.mrb[0].mxu0 %v1719
    %v1787 = vpop.f32.mrb[0].mxu0
    %v1788 = vadd.f32 %v1618, %v1787
    %v1789 = vpop.f32.mrb[0].mxu0
    %1790 = vdwg.mxu0
    %v1791 = vadd.f32 %v1788, %v196
    %v1792 = vxor.u32 %v1791, 2147483648
    %v1793 = vmul.f32 %v1792, 1.442695
    %v1794 = vpow.pop %v1793
    %v1795 = vadd.f32 %v1794, 1.0
    %v1796 = vrcp.pop %v1795
    %v1797 = vmul.f32 1.0, %v1796
    %v1798 = vtanh.pop %v1791
    %v1799 = vmul.f32 %v1797, %v1539
    %1801 = vrot.lane.b32.xlu0 %v1798, 64
    %v1802 = vpop.permute.xlu0 %1801
    %v1804 = vmul.f32 %v1797, %v1802
    %1806 = vrot.lane.b32.xlu0 %v1804, 32
    %v1807 = vpop.permute.xlu0 %1806
    %v1809 = vadd.f32 %v1799, %v1807
    %v1810 = vtanh.pop %v1809
    %1812 = vrot.lane.b32.xlu0 %v1810, 64
    %v1813 = vpop.permute.xlu0 %1812
    %v1815 = vmul.f32 %v1797, %v1813
    %1817 = vrot.lane.b32.xlu0 %v1815, 32
    %v1818 = vpop.permute.xlu0 %1817
    %v1819 = vsel %vm197, %v1818, 0
    %1821 = vmatprep.subr.mxu0 0.0
    %1822 = vmatpush1.msra.mxu0 %v188
    %1823 = vmatprep.subr.mxu0 0.0
    %1824 = vmatpush1.msra.mxu0 %v189
    %1825 = vmatprep.subr.mxu0 0.0
    %1826 = vmatpush1.msra.mxu0 %v190
    %1827 = vmatprep.subr.mxu0 0.0
    %1828 = vmatpush1.msra.mxu0 %v191
    %1829 = vmatprep.subr.mxu0 0.0
    %1830 = vmatpush1.msra.mxu0 0.0
    %1831 = vmatprep.subr.mxu0 0.0
    %1832 = vmatpush1.msra.mxu0 0.0
    %1833 = vmatprep.subr.mxu0 0.0
    %1834 = vmatpush1.msra.mxu0 0.0
    %1835 = vmatprep.subr.mxu0 0.0
    %1836 = vmatpush1.msra.mxu0 0.0
    %1837 = vmatprep.subr.mxu0 0.0
    %1838 = vmatpush1.msra.mxu0 0.0
    %1839 = vmatprep.subr.mxu0 0.0
    %1840 = vmatpush1.msra.mxu0 0.0
    %1841 = vmatprep.subr.mxu0 0.0
    %1842 = vmatpush1.msra.mxu0 0.0
    %1843 = vmatprep.subr.mxu0 0.0
    %1844 = vmatpush1.msra.mxu0 0.0
    %1845 = vmatprep.subr.mxu0 0.0
    %1846 = vmatpush1.msra.mxu0 0.0
    %1847 = vmatprep.subr.mxu0 0.0
    %1848 = vmatpush1.msra.mxu0 0.0
    %1849 = vmatprep.subr.mxu0 0.0
    %1850 = vmatpush1.msra.mxu0 0.0
    %1851 = vmatprep.subr.mxu0 0.0
    %1852 = vmatpush1.msra.mxu0 0.0
    %1853 = vmatprep.subr.mxu0 0.0
    %1854 = vmatpush1.msra.mxu0 0.0
    %1855 = vmatprep.subr.mxu0 0.0
    %1856 = vmatpush1.msra.mxu0 0.0
    %1857 = vmatprep.subr.mxu0 0.0
    %1858 = vmatpush1.msra.mxu0 0.0
    %1859 = vmatprep.subr.mxu0 0.0
    %1860 = vmatpush1.msra.mxu0 0.0
    %1861 = vmatprep.subr.mxu0 0.0
    %1862 = vmatpush1.msra.mxu0 0.0
    %1863 = vmatprep.subr.mxu0 0.0
    %1864 = vmatpush1.msra.mxu0 0.0
    %1865 = vmatprep.subr.mxu0 0.0
    %1866 = vmatpush1.msra.mxu0 0.0
    %1867 = vmatprep.subr.mxu0 0.0
    %1868 = vmatpush1.msra.mxu0 0.0
    %1869 = vmatprep.subr.mxu0 0.0
    %1870 = vmatpush1.msra.mxu0 0.0
    %1871 = vmatprep.subr.mxu0 0.0
    %1872 = vmatpush1.msra.mxu0 0.0
    %1873 = vmatprep.subr.mxu0 0.0
    %1874 = vmatpush1.msra.mxu0 0.0
    %1875 = vmatprep.subr.mxu0 0.0
    %1876 = vmatpush1.msra.mxu0 0.0
    %1877 = vmatprep.subr.mxu0 0.0
    %1878 = vmatpush1.msra.mxu0 0.0
    %1879 = vmatprep.subr.mxu0 0.0
    %1880 = vmatpush1.msra.mxu0 0.0
    %1881 = vmatprep.subr.mxu0 0.0
    %1882 = vmatpush1.msra.mxu0 0.0
    %1883 = vmatprep.subr.mxu0 0.0
    %1884 = vmatpush1.msra.mxu0 0.0
    %1885 = vmatprep.mubr.f32.mxu0 0.0
    %1886 = vmatmul.mubr.f32.gmra.mrb[0].mxu0 %v1819
    %v1887 = vpop.f32.mrb[0].mxu0
    %v1888 = vadd.f32 0.0, %v1887
    %v1889 = vpop.f32.mrb[0].mxu0
    %1890 = vdwg.mxu0
    %1891 = vmatprep.subr.mxu0 0.0
    %1892 = vmatpush1.msra.mxu0 %v180
    %1893 = vmatprep.subr.mxu0 0.0
    %1894 = vmatpush1.msra.mxu0 %v181
    %1895 = vmatprep.subr.mxu0 0.0
    %1896 = vmatpush1.msra.mxu0 %v182
    %1897 = vmatprep.subr.mxu0 0.0
    %1898 = vmatpush1.msra.mxu0 %v183
    %1899 = vmatprep.subr.mxu0 0.0
    %1900 = vmatpush1.msra.mxu0 0.0
    %1901 = vmatprep.subr.mxu0 0.0
    %1902 = vmatpush1.msra.mxu0 0.0
    %1903 = vmatprep.subr.mxu0 0.0
    %1904 = vmatpush1.msra.mxu0 0.0
    %1905 = vmatprep.subr.mxu0 0.0
    %1906 = vmatpush1.msra.mxu0 0.0
    %1907 = vmatprep.subr.mxu0 0.0
    %1908 = vmatpush1.msra.mxu0 0.0
    %1909 = vmatprep.subr.mxu0 0.0
    %1910 = vmatpush1.msra.mxu0 0.0
    %1911 = vmatprep.subr.mxu0 0.0
    %1912 = vmatpush1.msra.mxu0 0.0
    %1913 = vmatprep.subr.mxu0 0.0
    %1914 = vmatpush1.msra.mxu0 0.0
    %1915 = vmatprep.subr.mxu0 0.0
    %1916 = vmatpush1.msra.mxu0 0.0
    %1917 = vmatprep.subr.mxu0 0.0
    %1918 = vmatpush1.msra.mxu0 0.0
    %1919 = vmatprep.subr.mxu0 0.0
    %1920 = vmatpush1.msra.mxu0 0.0
    %1921 = vmatprep.subr.mxu0 0.0
    %1922 = vmatpush1.msra.mxu0 0.0
    %1923 = vmatprep.subr.mxu0 0.0
    %1924 = vmatpush1.msra.mxu0 0.0
    %1925 = vmatprep.subr.mxu0 0.0
    %1926 = vmatpush1.msra.mxu0 0.0
    %1927 = vmatprep.subr.mxu0 0.0
    %1928 = vmatpush1.msra.mxu0 0.0
    %1929 = vmatprep.subr.mxu0 0.0
    %1930 = vmatpush1.msra.mxu0 0.0
    %1931 = vmatprep.subr.mxu0 0.0
    %1932 = vmatpush1.msra.mxu0 0.0
    %1933 = vmatprep.subr.mxu0 0.0
    %1934 = vmatpush1.msra.mxu0 0.0
    %1935 = vmatprep.subr.mxu0 0.0
    %1936 = vmatpush1.msra.mxu0 0.0
    %1937 = vmatprep.subr.mxu0 0.0
    %1938 = vmatpush1.msra.mxu0 0.0
    %1939 = vmatprep.subr.mxu0 0.0
    %1940 = vmatpush1.msra.mxu0 0.0
    %1941 = vmatprep.subr.mxu0 0.0
    %1942 = vmatpush1.msra.mxu0 0.0
    %1943 = vmatprep.subr.mxu0 0.0
    %1944 = vmatpush1.msra.mxu0 0.0
    %1945 = vmatprep.subr.mxu0 0.0
    %1946 = vmatpush1.msra.mxu0 0.0
    %1947 = vmatprep.subr.mxu0 0.0
    %1948 = vmatpush1.msra.mxu0 0.0
    %1949 = vmatprep.subr.mxu0 0.0
    %1950 = vmatpush1.msra.mxu0 0.0
    %1951 = vmatprep.subr.mxu0 0.0
    %1952 = vmatpush1.msra.mxu0 0.0
    %1953 = vmatprep.subr.mxu0 0.0
    %1954 = vmatpush1.msra.mxu0 0.0
    %1955 = vmatprep.mubr.f32.mxu0 0.0
    %1956 = vmatmul.mubr.f32.gmra.mrb[0].mxu0 %v1719
    %v1957 = vpop.f32.mrb[0].mxu0
    %v1958 = vadd.f32 0.0, %v1957
    %v1959 = vpop.f32.mrb[0].mxu0
    %1960 = vdwg.mxu0
    %v1961 = vadd.f32 %v172, %v1958
    %v1962 = vxor.u32 %v1961, 2147483648
    %v1963 = vmul.f32 %v1962, 1.442695
    %v1964 = vpow.pop %v1963
    %v1965 = vadd.f32 %v1964, 1.0
    %v1966 = vrcp.pop %v1965
    %v1967 = vmul.f32 1.0, %v1966
    %v1968 = vtanh.pop %v1961
    %v1969 = vmul.f32 %v1967, %v1709
    %1971 = vrot.lane.b32.xlu0 %v1968, 64
    %v1972 = vpop.permute.xlu0 %1971
    %v1974 = vmul.f32 %v1967, %v1972
    %1976 = vrot.lane.b32.xlu0 %v1974, 32
    %v1977 = vpop.permute.xlu0 %1976
    %v1979 = vadd.f32 %v1969, %v1977
    %v1980 = vtanh.pop %v1979
    %1982 = vrot.lane.b32.xlu0 %v1980, 64
    %v1983 = vpop.permute.xlu0 %1982
    %v1985 = vmul.f32 %v1967, %v1983
    %1987 = vrot.lane.b32.xlu0 %v1985, 32
    %v1988 = vpop.permute.xlu0 %1987
    %v1989 = vsel %vm197, %v1988, 0
    %1991 = vmatprep.subr.mxu0 0.0
    %1992 = vmatpush1.msra.mxu0 %v184
    %1993 = vmatprep.subr.mxu0 0.0
    %1994 = vmatpush1.msra.mxu0 %v185
    %1995 = vmatprep.subr.mxu0 0.0
    %1996 = vmatpush1.msra.mxu0 %v186
    %1997 = vmatprep.subr.mxu0 0.0
    %1998 = vmatpush1.msra.mxu0 %v187
    %1999 = vmatprep.subr.mxu0 0.0
    %2000 = vmatpush1.msra.mxu0 0.0
    %2001 = vmatprep.subr.mxu0 0.0
    %2002 = vmatpush1.msra.mxu0 0.0
    %2003 = vmatprep.subr.mxu0 0.0
    %2004 = vmatpush1.msra.mxu0 0.0
    %2005 = vmatprep.subr.mxu0 0.0
    %2006 = vmatpush1.msra.mxu0 0.0
    %2007 = vmatprep.subr.mxu0 0.0
    %2008 = vmatpush1.msra.mxu0 0.0
    %2009 = vmatprep.subr.mxu0 0.0
    %2010 = vmatpush1.msra.mxu0 0.0
    %2011 = vmatprep.subr.mxu0 0.0
    %2012 = vmatpush1.msra.mxu0 0.0
    %2013 = vmatprep.subr.mxu0 0.0
    %2014 = vmatpush1.msra.mxu0 0.0
    %2015 = vmatprep.subr.mxu0 0.0
    %2016 = vmatpush1.msra.mxu0 0.0
    %2017 = vmatprep.subr.mxu0 0.0
    %2018 = vmatpush1.msra.mxu0 0.0
    %2019 = vmatprep.subr.mxu0 0.0
    %2020 = vmatpush1.msra.mxu0 0.0
    %2021 = vmatprep.subr.mxu0 0.0
    %2022 = vmatpush1.msra.mxu0 0.0
    %2023 = vmatprep.subr.mxu0 0.0
    %2024 = vmatpush1.msra.mxu0 0.0
    %2025 = vmatprep.subr.mxu0 0.0
    %2026 = vmatpush1.msra.mxu0 0.0
    %2027 = vmatprep.subr.mxu0 0.0
    %2028 = vmatpush1.msra.mxu0 0.0
    %2029 = vmatprep.subr.mxu0 0.0
    %2030 = vmatpush1.msra.mxu0 0.0
    %2031 = vmatprep.subr.mxu0 0.0
    %2032 = vmatpush1.msra.mxu0 0.0
    %2033 = vmatprep.subr.mxu0 0.0
    %2034 = vmatpush1.msra.mxu0 0.0
    %2035 = vmatprep.subr.mxu0 0.0
    %2036 = vmatpush1.msra.mxu0 0.0
    %2037 = vmatprep.subr.mxu0 0.0
    %2038 = vmatpush1.msra.mxu0 0.0
    %2039 = vmatprep.subr.mxu0 0.0
    %2040 = vmatpush1.msra.mxu0 0.0
    %2041 = vmatprep.subr.mxu0 0.0
    %2042 = vmatpush1.msra.mxu0 0.0
    %2043 = vmatprep.subr.mxu0 0.0
    %2044 = vmatpush1.msra.mxu0 0.0
    %2045 = vmatprep.subr.mxu0 0.0
    %2046 = vmatpush1.msra.mxu0 0.0
    %2047 = vmatprep.subr.mxu0 0.0
    %2048 = vmatpush1.msra.mxu0 0.0
    %2049 = vmatprep.subr.mxu0 0.0
    %2050 = vmatpush1.msra.mxu0 0.0
    %2051 = vmatprep.subr.mxu0 0.0
    %2052 = vmatpush1.msra.mxu0 0.0
    %2053 = vmatprep.subr.mxu0 0.0
    %2054 = vmatpush1.msra.mxu0 0.0
    %2055 = vmatprep.mubr.f32.mxu0 0.0
    %2056 = vmatmul.mubr.f32.gmra.mrb[0].mxu0 %v1989
    %v2057 = vpop.f32.mrb[0].mxu0
    %v2058 = vadd.f32 %v1888, %v2057
    %v2059 = vpop.f32.mrb[0].mxu0
    %2060 = vdwg.mxu0
    %v2061 = vadd.f32 %v2058, %v196
    %v2062 = vxor.u32 %v2061, 2147483648
    %v2063 = vmul.f32 %v2062, 1.442695
    %v2064 = vpow.pop %v2063
    %v2065 = vadd.f32 %v2064, 1.0
    %v2066 = vrcp.pop %v2065
    %v2067 = vmul.f32 1.0, %v2066
    %v2068 = vtanh.pop %v2061
    %v2069 = vmul.f32 %v2067, %v1809
    %2071 = vrot.lane.b32.xlu0 %v2068, 64
    %v2072 = vpop.permute.xlu0 %2071
    %v2074 = vmul.f32 %v2067, %v2072
    %2076 = vrot.lane.b32.xlu0 %v2074, 32
    %v2077 = vpop.permute.xlu0 %2076
    %v2079 = vadd.f32 %v2069, %v2077
    %v2080 = vtanh.pop %v2079
    %2082 = vrot.lane.b32.xlu0 %v2080, 64
    %v2083 = vpop.permute.xlu0 %2082
    %v2085 = vmul.f32 %v2067, %v2083
    %2087 = vrot.lane.b32.xlu0 %v2085, 32
    %v2088 = vpop.permute.xlu0 %2087
    %v2089 = vsel %vm197, %v2088, 0
    %2091 = vmatprep.subr.mxu0 0.0
    %2092 = vmatpush1.msra.mxu0 %v188
    %2093 = vmatprep.subr.mxu0 0.0
    %2094 = vmatpush1.msra.mxu0 %v189
    %2095 = vmatprep.subr.mxu0 0.0
    %2096 = vmatpush1.msra.mxu0 %v190
    %2097 = vmatprep.subr.mxu0 0.0
    %2098 = vmatpush1.msra.mxu0 %v191
    %2099 = vmatprep.subr.mxu0 0.0
    %2100 = vmatpush1.msra.mxu0 0.0
    %2101 = vmatprep.subr.mxu0 0.0
    %2102 = vmatpush1.msra.mxu0 0.0
    %2103 = vmatprep.subr.mxu0 0.0
    %2104 = vmatpush1.msra.mxu0 0.0
    %2105 = vmatprep.subr.mxu0 0.0
    %2106 = vmatpush1.msra.mxu0 0.0
    %2107 = vmatprep.subr.mxu0 0.0
    %2108 = vmatpush1.msra.mxu0 0.0
    %2109 = vmatprep.subr.mxu0 0.0
    %2110 = vmatpush1.msra.mxu0 0.0
    %2111 = vmatprep.subr.mxu0 0.0
    %2112 = vmatpush1.msra.mxu0 0.0
    %2113 = vmatprep.subr.mxu0 0.0
    %2114 = vmatpush1.msra.mxu0 0.0
    %2115 = vmatprep.subr.mxu0 0.0
    %2116 = vmatpush1.msra.mxu0 0.0
    %2117 = vmatprep.subr.mxu0 0.0
    %2118 = vmatpush1.msra.mxu0 0.0
    %2119 = vmatprep.subr.mxu0 0.0
    %2120 = vmatpush1.msra.mxu0 0.0
    %2121 = vmatprep.subr.mxu0 0.0
    %2122 = vmatpush1.msra.mxu0 0.0
    %2123 = vmatprep.subr.mxu0 0.0
    %2124 = vmatpush1.msra.mxu0 0.0
    %2125 = vmatprep.subr.mxu0 0.0
    %2126 = vmatpush1.msra.mxu0 0.0
    %2127 = vmatprep.subr.mxu0 0.0
    %2128 = vmatpush1.msra.mxu0 0.0
    %2129 = vmatprep.subr.mxu0 0.0
    %2130 = vmatpush1.msra.mxu0 0.0
    %2131 = vmatprep.subr.mxu0 0.0
    %2132 = vmatpush1.msra.mxu0 0.0
    %2133 = vmatprep.subr.mxu0 0.0
    %2134 = vmatpush1.msra.mxu0 0.0
    %2135 = vmatprep.subr.mxu0 0.0
    %2136 = vmatpush1.msra.mxu0 0.0
    %2137 = vmatprep.subr.mxu0 0.0
    %2138 = vmatpush1.msra.mxu0 0.0
    %2139 = vmatprep.subr.mxu0 0.0
    %2140 = vmatpush1.msra.mxu0 0.0
    %2141 = vmatprep.subr.mxu0 0.0
    %2142 = vmatpush1.msra.mxu0 0.0
    %2143 = vmatprep.subr.mxu0 0.0
    %2144 = vmatpush1.msra.mxu0 0.0
    %2145 = vmatprep.subr.mxu0 0.0
    %2146 = vmatpush1.msra.mxu0 0.0
    %2147 = vmatprep.subr.mxu0 0.0
    %2148 = vmatpush1.msra.mxu0 0.0
    %2149 = vmatprep.subr.mxu0 0.0
    %2150 = vmatpush1.msra.mxu0 0.0
    %2151 = vmatprep.subr.mxu0 0.0
    %2152 = vmatpush1.msra.mxu0 0.0
    %2153 = vmatprep.subr.mxu0 0.0
    %2154 = vmatpush1.msra.mxu0 0.0
    %2155 = vmatprep.mubr.f32.mxu0 0.0
    %2156 = vmatmul.mubr.f32.gmra.mrb[0].mxu0 %v2089
    %v2157 = vpop.f32.mrb[0].mxu0
    %v2158 = vadd.f32 0.0, %v2157
    %v2159 = vpop.f32.mrb[0].mxu0
    %2160 = vdwg.mxu0
    %2161 = vmatprep.subr.mxu0 0.0
    %2162 = vmatpush1.msra.mxu0 %v180
    %2163 = vmatprep.subr.mxu0 0.0
    %2164 = vmatpush1.msra.mxu0 %v181
    %2165 = vmatprep.subr.mxu0 0.0
    %2166 = vmatpush1.msra.mxu0 %v182
    %2167 = vmatprep.subr.mxu0 0.0
    %2168 = vmatpush1.msra.mxu0 %v183
    %2169 = vmatprep.subr.mxu0 0.0
    %2170 = vmatpush1.msra.mxu0 0.0
    %2171 = vmatprep.subr.mxu0 0.0
    %2172 = vmatpush1.msra.mxu0 0.0
    %2173 = vmatprep.subr.mxu0 0.0
    %2174 = vmatpush1.msra.mxu0 0.0
    %2175 = vmatprep.subr.mxu0 0.0
    %2176 = vmatpush1.msra.mxu0 0.0
    %2177 = vmatprep.subr.mxu0 0.0
    %2178 = vmatpush1.msra.mxu0 0.0
    %2179 = vmatprep.subr.mxu0 0.0
    %2180 = vmatpush1.msra.mxu0 0.0
    %2181 = vmatprep.subr.mxu0 0.0
    %2182 = vmatpush1.msra.mxu0 0.0
    %2183 = vmatprep.subr.mxu0 0.0
    %2184 = vmatpush1.msra.mxu0 0.0
    %2185 = vmatprep.subr.mxu0 0.0
    %2186 = vmatpush1.msra.mxu0 0.0
    %2187 = vmatprep.subr.mxu0 0.0
    %2188 = vmatpush1.msra.mxu0 0.0
    %2189 = vmatprep.subr.mxu0 0.0
    %2190 = vmatpush1.msra.mxu0 0.0
    %2191 = vmatprep.subr.mxu0 0.0
    %2192 = vmatpush1.msra.mxu0 0.0
    %2193 = vmatprep.subr.mxu0 0.0
    %2194 = vmatpush1.msra.mxu0 0.0
    %2195 = vmatprep.subr.mxu0 0.0
    %2196 = vmatpush1.msra.mxu0 0.0
    %2197 = vmatprep.subr.mxu0 0.0
    %2198 = vmatpush1.msra.mxu0 0.0
    %2199 = vmatprep.subr.mxu0 0.0
    %2200 = vmatpush1.msra.mxu0 0.0
    %2201 = vmatprep.subr.mxu0 0.0
    %2202 = vmatpush1.msra.mxu0 0.0
    %2203 = vmatprep.subr.mxu0 0.0
    %2204 = vmatpush1.msra.mxu0 0.0
    %2205 = vmatprep.subr.mxu0 0.0
    %2206 = vmatpush1.msra.mxu0 0.0
    %2207 = vmatprep.subr.mxu0 0.0
    %2208 = vmatpush1.msra.mxu0 0.0
    %2209 = vmatprep.subr.mxu0 0.0
    %2210 = vmatpush1.msra.mxu0 0.0
    %2211 = vmatprep.subr.mxu0 0.0
    %2212 = vmatpush1.msra.mxu0 0.0
    %2213 = vmatprep.subr.mxu0 0.0
    %2214 = vmatpush1.msra.mxu0 0.0
    %2215 = vmatprep.subr.mxu0 0.0
    %2216 = vmatpush1.msra.mxu0 0.0
    %2217 = vmatprep.subr.mxu0 0.0
    %2218 = vmatpush1.msra.mxu0 0.0
    %2219 = vmatprep.subr.mxu0 0.0
    %2220 = vmatpush1.msra.mxu0 0.0
    %2221 = vmatprep.subr.mxu0 0.0
    %2222 = vmatpush1.msra.mxu0 0.0
    %2223 = vmatprep.subr.mxu0 0.0
    %2224 = vmatpush1.msra.mxu0 0.0
    %2225 = vmatprep.mubr.f32.mxu0 0.0
    %2226 = vmatmul.mubr.f32.gmra.mrb[0].mxu0 %v1989
    %v2227 = vpop.f32.mrb[0].mxu0
    %v2228 = vadd.f32 0.0, %v2227
    %v2229 = vpop.f32.mrb[0].mxu0
    %2230 = vdwg.mxu0
    %v2231 = vadd.f32 %v177, %v2228
    %v2232 = vxor.u32 %v2231, 2147483648
    %v2233 = vmul.f32 %v2232, 1.442695
    %v2234 = vpow.pop %v2233
    %v2235 = vadd.f32 %v2234, 1.0
    %v2236 = vrcp.pop %v2235
    %v2237 = vmul.f32 1.0, %v2236
    %v2238 = vtanh.pop %v2231
    %v2239 = vmul.f32 %v2237, %v1979
    %2241 = vrot.lane.b32.xlu0 %v2238, 64
    %v2242 = vpop.permute.xlu0 %2241
    %v2244 = vmul.f32 %v2237, %v2242
    %2246 = vrot.lane.b32.xlu0 %v2244, 32
    %v2247 = vpop.permute.xlu0 %2246
    %v2249 = vadd.f32 %v2239, %v2247
    %v2250 = vtanh.pop %v2249
    %2252 = vrot.lane.b32.xlu0 %v2250, 64
    %v2253 = vpop.permute.xlu0 %2252
    %v2255 = vmul.f32 %v2237, %v2253
    %2257 = vrot.lane.b32.xlu0 %v2255, 32
    %v2258 = vpop.permute.xlu0 %2257
    %v2259 = vsel %vm197, %v2258, 0
    %2261 = vmatprep.subr.mxu0 0.0
    %2262 = vmatpush1.msra.mxu0 %v184
    %2263 = vmatprep.subr.mxu0 0.0
    %2264 = vmatpush1.msra.mxu0 %v185
    %2265 = vmatprep.subr.mxu0 0.0
    %2266 = vmatpush1.msra.mxu0 %v186
    %2267 = vmatprep.subr.mxu0 0.0
    %2268 = vmatpush1.msra.mxu0 %v187
    %2269 = vmatprep.subr.mxu0 0.0
    %2270 = vmatpush1.msra.mxu0 0.0
    %2271 = vmatprep.subr.mxu0 0.0
    %2272 = vmatpush1.msra.mxu0 0.0
    %2273 = vmatprep.subr.mxu0 0.0
    %2274 = vmatpush1.msra.mxu0 0.0
    %2275 = vmatprep.subr.mxu0 0.0
    %2276 = vmatpush1.msra.mxu0 0.0
    %2277 = vmatprep.subr.mxu0 0.0
    %2278 = vmatpush1.msra.mxu0 0.0
    %2279 = vmatprep.subr.mxu0 0.0
    %2280 = vmatpush1.msra.mxu0 0.0
    %2281 = vmatprep.subr.mxu0 0.0
    %2282 = vmatpush1.msra.mxu0 0.0
    %2283 = vmatprep.subr.mxu0 0.0
    %2284 = vmatpush1.msra.mxu0 0.0
    %2285 = vmatprep.subr.mxu0 0.0
    %2286 = vmatpush1.msra.mxu0 0.0
    %2287 = vmatprep.subr.mxu0 0.0
    %2288 = vmatpush1.msra.mxu0 0.0
    %2289 = vmatprep.subr.mxu0 0.0
    %2290 = vmatpush1.msra.mxu0 0.0
    %2291 = vmatprep.subr.mxu0 0.0
    %2292 = vmatpush1.msra.mxu0 0.0
    %2293 = vmatprep.subr.mxu0 0.0
    %2294 = vmatpush1.msra.mxu0 0.0
    %2295 = vmatprep.subr.mxu0 0.0
    %2296 = vmatpush1.msra.mxu0 0.0
    %2297 = vmatprep.subr.mxu0 0.0
    %2298 = vmatpush1.msra.mxu0 0.0
    %2299 = vmatprep.subr.mxu0 0.0
    %2300 = vmatpush1.msra.mxu0 0.0
    %2301 = vmatprep.subr.mxu0 0.0
    %2302 = vmatpush1.msra.mxu0 0.0
    %2303 = vmatprep.subr.mxu0 0.0
    %2304 = vmatpush1.msra.mxu0 0.0
    %2305 = vmatprep.subr.mxu0 0.0
    %2306 = vmatpush1.msra.mxu0 0.0
    %2307 = vmatprep.subr.mxu0 0.0
    %2308 = vmatpush1.msra.mxu0 0.0
    %2309 = vmatprep.subr.mxu0 0.0
    %2310 = vmatpush1.msra.mxu0 0.0
    %2311 = vmatprep.subr.mxu0 0.0
    %2312 = vmatpush1.msra.mxu0 0.0
    %2313 = vmatprep.subr.mxu0 0.0
    %2314 = vmatpush1.msra.mxu0 0.0
    %2315 = vmatprep.subr.mxu0 0.0
    %2316 = vmatpush1.msra.mxu0 0.0
    %2317 = vmatprep.subr.mxu0 0.0
    %2318 = vmatpush1.msra.mxu0 0.0
    %2319 = vmatprep.subr.mxu0 0.0
    %2320 = vmatpush1.msra.mxu0 0.0
    %2321 = vmatprep.subr.mxu0 0.0
    %2322 = vmatpush1.msra.mxu0 0.0
    %2323 = vmatprep.subr.mxu0 0.0
    %2324 = vmatpush1.msra.mxu0 0.0
    %2325 = vmatprep.mubr.f32.mxu0 0.0
    %2326 = vmatmul.mubr.f32.gmra.mrb[0].mxu0 %v2259
    %v2327 = vpop.f32.mrb[0].mxu0
    %v2328 = vadd.f32 %v2158, %v2327
    %v2329 = vpop.f32.mrb[0].mxu0
    %2330 = vdwg.mxu0
    %v2331 = vadd.f32 %v2328, %v196
    %v2332 = vxor.u32 %v2331, 2147483648
    %v2333 = vmul.f32 %v2332, 1.442695
    %v2334 = vpow.pop %v2333
    %v2335 = vadd.f32 %v2334, 1.0
    %v2336 = vrcp.pop %v2335
    %v2337 = vmul.f32 1.0, %v2336
    %v2338 = vtanh.pop %v2331
    %v2339 = vmul.f32 %v2337, %v2079
    %2341 = vrot.lane.b32.xlu0 %v2338, 64
    %v2342 = vpop.permute.xlu0 %2341
    %v2344 = vmul.f32 %v2337, %v2342
    %2346 = vrot.lane.b32.xlu0 %v2344, 32
    %v2347 = vpop.permute.xlu0 %2346
    %v2349 = vadd.f32 %v2339, %v2347
    %v2350 = vtanh.pop %v2349
    %2352 = vrot.lane.b32.xlu0 %v2350, 64
    %v2353 = vpop.permute.xlu0 %2352
    %v2355 = vmul.f32 %v2337, %v2353
    %v2356 = vld [vmem:[#allocation2 + $0x98] sm:$0xff]
    %v2357 = vld [vmem:[#allocation2 + $0xa0] sm:$0xff]
    %v2358 = vld [vmem:[#allocation2 + $0xa8] sm:$0xff]
    %v2359 = vld [vmem:[#allocation2 + $0xb0] sm:$0xff]
    %v2360 = vld [vmem:[#allocation2 + $0xb8] sm:$0x1]
    %v2361 = vlaneseq
    %v2362 = vshrl.u32 %v2361, 7
    %v2363 = vsub.s32 0, %v2362
    %v2364 = vrot.slane %v2360, %v2363
    %2366 = vrot.lane.b32.xlu0 %v2355, 32
    %v2367 = vpop.permute.xlu0 %2366
    %v2368 = vsel %vm197, %v2367, 0
    %2370 = vmatprep.subr.mxu0 0.0
    %2371 = vmatpush1.msra.mxu0 %v2356
    %2372 = vmatprep.subr.mxu0 0.0
    %2373 = vmatpush1.msra.mxu0 %v2357
    %2374 = vmatprep.subr.mxu0 0.0
    %2375 = vmatpush1.msra.mxu0 %v2358
    %2376 = vmatprep.subr.mxu0 0.0
    %2377 = vmatpush1.msra.mxu0 %v2359
    %2378 = vmatprep.subr.mxu0 0.0
    %2379 = vmatpush1.msra.mxu0 0.0
    %2380 = vmatprep.subr.mxu0 0.0
    %2381 = vmatpush1.msra.mxu0 0.0
    %2382 = vmatprep.subr.mxu0 0.0
    %2383 = vmatpush1.msra.mxu0 0.0
    %2384 = vmatprep.subr.mxu0 0.0
    %2385 = vmatpush1.msra.mxu0 0.0
    %2386 = vmatprep.subr.mxu0 0.0
    %2387 = vmatpush1.msra.mxu0 0.0
    %2388 = vmatprep.subr.mxu0 0.0
    %2389 = vmatpush1.msra.mxu0 0.0
    %2390 = vmatprep.subr.mxu0 0.0
    %2391 = vmatpush1.msra.mxu0 0.0
    %2392 = vmatprep.subr.mxu0 0.0
    %2393 = vmatpush1.msra.mxu0 0.0
    %2394 = vmatprep.subr.mxu0 0.0
    %2395 = vmatpush1.msra.mxu0 0.0
    %2396 = vmatprep.subr.mxu0 0.0
    %2397 = vmatpush1.msra.mxu0 0.0
    %2398 = vmatprep.subr.mxu0 0.0
    %2399 = vmatpush1.msra.mxu0 0.0
    %2400 = vmatprep.subr.mxu0 0.0
    %2401 = vmatpush1.msra.mxu0 0.0
    %2402 = vmatprep.subr.mxu0 0.0
    %2403 = vmatpush1.msra.mxu0 0.0
    %2404 = vmatprep.subr.mxu0 0.0
    %2405 = vmatpush1.msra.mxu0 0.0
    %2406 = vmatprep.subr.mxu0 0.0
    %2407 = vmatpush1.msra.mxu0 0.0
    %2408 = vmatprep.subr.mxu0 0.0
    %2409 = vmatpush1.msra.mxu0 0.0
    %2410 = vmatprep.subr.mxu0 0.0
    %2411 = vmatpush1.msra.mxu0 0.0
    %2412 = vmatprep.subr.mxu0 0.0
    %2413 = vmatpush1.msra.mxu0 0.0
    %2414 = vmatprep.subr.mxu0 0.0
    %2415 = vmatpush1.msra.mxu0 0.0
    %2416 = vmatprep.subr.mxu0 0.0
    %2417 = vmatpush1.msra.mxu0 0.0
    %2418 = vmatprep.subr.mxu0 0.0
    %2419 = vmatpush1.msra.mxu0 0.0
    %2420 = vmatprep.subr.mxu0 0.0
    %2421 = vmatpush1.msra.mxu0 0.0
    %2422 = vmatprep.subr.mxu0 0.0
    %2423 = vmatpush1.msra.mxu0 0.0
    %2424 = vmatprep.subr.mxu0 0.0
    %2425 = vmatpush1.msra.mxu0 0.0
    %2426 = vmatprep.subr.mxu0 0.0
    %2427 = vmatpush1.msra.mxu0 0.0
    %2428 = vmatprep.subr.mxu0 0.0
    %2429 = vmatpush1.msra.mxu0 0.0
    %2430 = vmatprep.subr.mxu0 0.0
    %2431 = vmatpush1.msra.mxu0 0.0
    %2432 = vmatprep.subr.mxu0 0.0
    %2433 = vmatpush1.msra.mxu0 0.0
    %2434 = vmatprep.mubr.f32.mxu0 0.0
    %2435 = vmatmul.mubr.f32.gmra.mrb[0].mxu0 %v2368
    %v2436 = vpop.f32.mrb[0].mxu0
    %v2437 = vadd.f32 %v2364, %v2436
    %v2438 = vpop.f32.mrb[0].mxu0
    %2439 = vdwg.mxu0
    %v2440 = vmul.f32 %v2437, 0.5
    %v2441 = vmul.f32 %v2440, 1.442695
    %v2442 = vpow.pop %v2441
    %v2443 = vld [vmem:[%s1] sm:$0xff]
    %2445 = vrot.lane.b32.xlu0 %v2443, 16
    %v2446 = vpop.permute.xlu0 %2445
    %v2448 = vmul.f32 %v2442, %v2446
    %2450 = vrot.lane.b32.xlu0 %v2448, 112
    %v2451 = vpop.permute.xlu0 %2450
    %v2453 = vadd.f32 %v2437, %v2451
    %v2454 = vld [vmem:[#allocation2 + $0xc0] sm:$0xff]
    %v2455 = vld [vmem:[#allocation2 + $0xc8] sm:$0xff]
    %v2456 = vld [vmem:[#allocation2 + $0xd0] sm:$0x1]
    %v2457 = vlaneseq
    %v2458 = vshrl.u32 %v2457, 7
    %v2459 = vsub.s32 0, %v2458
    %v2460 = vrot.slane %v2456, %v2459
    %vm2461 = vcmask 130048
    %v2463 = vsel %vm2461, %v2453, 0
    %2465 = vmatprep.subr.mxu0 0.0
    %2466 = vmatpush1.msra.mxu0 %v2454
    %2467 = vmatprep.subr.mxu0 0.0
    %2468 = vmatpush1.msra.mxu0 %v2455
    %2469 = vmatprep.subr.mxu0 0.0
    %2470 = vmatpush1.msra.mxu0 0.0
    %2471 = vmatprep.subr.mxu0 0.0
    %2472 = vmatpush1.msra.mxu0 0.0
    %2473 = vmatprep.subr.mxu0 0.0
    %2474 = vmatpush1.msra.mxu0 0.0
    %2475 = vmatprep.subr.mxu0 0.0
    %2476 = vmatpush1.msra.mxu0 0.0
    %2477 = vmatprep.subr.mxu0 0.0
    %2478 = vmatpush1.msra.mxu0 0.0
    %2479 = vmatprep.subr.mxu0 0.0
    %2480 = vmatpush1.msra.mxu0 0.0
    %2481 = vmatprep.subr.mxu0 0.0
    %2482 = vmatpush1.msra.mxu0 0.0
    %2483 = vmatprep.subr.mxu0 0.0
    %2484 = vmatpush1.msra.mxu0 0.0
    %2485 = vmatprep.subr.mxu0 0.0
    %2486 = vmatpush1.msra.mxu0 0.0
    %2487 = vmatprep.subr.mxu0 0.0
    %2488 = vmatpush1.msra.mxu0 0.0
    %2489 = vmatprep.subr.mxu0 0.0
    %2490 = vmatpush1.msra.mxu0 0.0
    %2491 = vmatprep.subr.mxu0 0.0
    %2492 = vmatpush1.msra.mxu0 0.0
    %2493 = vmatprep.subr.mxu0 0.0
    %2494 = vmatpush1.msra.mxu0 0.0
    %2495 = vmatprep.subr.mxu0 0.0
    %2496 = vmatpush1.msra.mxu0 0.0
    %2497 = vmatprep.subr.mxu0 0.0
    %2498 = vmatpush1.msra.mxu0 0.0
    %2499 = vmatprep.subr.mxu0 0.0
    %2500 = vmatpush1.msra.mxu0 0.0
    %2501 = vmatprep.subr.mxu0 0.0
    %2502 = vmatpush1.msra.mxu0 0.0
    %2503 = vmatprep.subr.mxu0 0.0
    %2504 = vmatpush1.msra.mxu0 0.0
    %2505 = vmatprep.subr.mxu0 0.0
    %2506 = vmatpush1.msra.mxu0 0.0
    %2507 = vmatprep.subr.mxu0 0.0
    %2508 = vmatpush1.msra.mxu0 0.0
    %2509 = vmatprep.subr.mxu0 0.0
    %2510 = vmatpush1.msra.mxu0 0.0
    %2511 = vmatprep.subr.mxu0 0.0
    %2512 = vmatpush1.msra.mxu0 0.0
    %2513 = vmatprep.subr.mxu0 0.0
    %2514 = vmatpush1.msra.mxu0 0.0
    %2515 = vmatprep.subr.mxu0 0.0
    %2516 = vmatpush1.msra.mxu0 0.0
    %2517 = vmatprep.subr.mxu0 0.0
    %2518 = vmatpush1.msra.mxu0 0.0
    %2519 = vmatprep.subr.mxu0 0.0
    %2520 = vmatpush1.msra.mxu0 0.0
    %2521 = vmatprep.subr.mxu0 0.0
    %2522 = vmatpush1.msra.mxu0 0.0
    %2523 = vmatprep.subr.mxu0 0.0
    %2524 = vmatpush1.msra.mxu0 0.0
    %2525 = vmatprep.subr.mxu0 0.0
    %2526 = vmatpush1.msra.mxu0 0.0
    %2527 = vmatprep.subr.mxu0 0.0
    %2528 = vmatpush1.msra.mxu0 0.0
    %2529 = vmatprep.mubr.f32.mxu0 0.0
    %2530 = vmatmul.mubr.f32.gmra.mrb[0].mxu0 %v2463
    %v2531 = vpop.f32.mrb[0].mxu0
    %v2532 = vadd.f32 %v2460, %v2531
    %v2533 = vpop.f32.mrb[0].mxu0
    %2534 = vdwg.mxu0
    %v2535 = vld [vmem:[#allocation2 + $0xd8] sm:$0xff]
    %v2536 = vld [vmem:[#allocation2 + $0xe0] sm:$0xff]
    %v2537 = vld [vmem:[#allocation2 + $0xe8] sm:$0xff]
    %v2538 = vld [vmem:[#allocation2 + $0xf0] sm:$0xff]
    %v2539 = vld [vmem:[#allocation2 + $0xf8] sm:$0x3]
    %v2540 = vld [vmem:[#allocation2 + $0x100] sm:$0xff]
    %v2541 = vld [vmem:[#allocation2 + $0x108] sm:$0xff]
    %v2542 = vld [vmem:[#allocation2 + $0x110] sm:$0xff]
    %v2543 = vld [vmem:[#allocation2 + $0x118] sm:$0xff]
    %v2545 = vsel %vm197, %v2532, 0
    %2547 = vmatprep.subr.mxu0 0.0
    %2548 = vmatpush1.msra.mxu0 %v2540
    %2549 = vmatprep.subr.mxu0 0.0
    %2550 = vmatpush1.msra.mxu0 %v2541
    %2551 = vmatprep.subr.mxu0 0.0
    %2552 = vmatpush1.msra.mxu0 %v2542
    %2553 = vmatprep.subr.mxu0 0.0
    %2554 = vmatpush1.msra.mxu0 %v2543
    %2555 = vmatprep.subr.mxu0 0.0
    %2556 = vmatpush1.msra.mxu0 0.0
    %2557 = vmatprep.subr.mxu0 0.0
    %2558 = vmatpush1.msra.mxu0 0.0
    %2559 = vmatprep.subr.mxu0 0.0
    %2560 = vmatpush1.msra.mxu0 0.0
    %2561 = vmatprep.subr.mxu0 0.0
    %2562 = vmatpush1.msra.mxu0 0.0
    %2563 = vmatprep.subr.mxu0 0.0
    %2564 = vmatpush1.msra.mxu0 0.0
    %2565 = vmatprep.subr.mxu0 0.0
    %2566 = vmatpush1.msra.mxu0 0.0
    %2567 = vmatprep.subr.mxu0 0.0
    %2568 = vmatpush1.msra.mxu0 0.0
    %2569 = vmatprep.subr.mxu0 0.0
    %2570 = vmatpush1.msra.mxu0 0.0
    %2571 = vmatprep.subr.mxu0 0.0
    %2572 = vmatpush1.msra.mxu0 0.0
    %2573 = vmatprep.subr.mxu0 0.0
    %2574 = vmatpush1.msra.mxu0 0.0
    %2575 = vmatprep.subr.mxu0 0.0
    %2576 = vmatpush1.msra.mxu0 0.0
    %2577 = vmatprep.subr.mxu0 0.0
    %2578 = vmatpush1.msra.mxu0 0.0
    %2579 = vmatprep.subr.mxu0 0.0
    %2580 = vmatpush1.msra.mxu0 0.0
    %2581 = vmatprep.subr.mxu0 0.0
    %2582 = vmatpush1.msra.mxu0 0.0
    %2583 = vmatprep.subr.mxu0 0.0
    %2584 = vmatpush1.msra.mxu0 0.0
    %2585 = vmatprep.subr.mxu0 0.0
    %2586 = vmatpush1.msra.mxu0 0.0
    %2587 = vmatprep.subr.mxu0 0.0
    %2588 = vmatpush1.msra.mxu0 0.0
    %2589 = vmatprep.subr.mxu0 0.0
    %2590 = vmatpush1.msra.mxu0 0.0
    %2591 = vmatprep.subr.mxu0 0.0
    %2592 = vmatpush1.msra.mxu0 0.0
    %2593 = vmatprep.subr.mxu0 0.0
    %2594 = vmatpush1.msra.mxu0 0.0
    %2595 = vmatprep.subr.mxu0 0.0
    %2596 = vmatpush1.msra.mxu0 0.0
    %2597 = vmatprep.subr.mxu0 0.0
    %2598 = vmatpush1.msra.mxu0 0.0
    %2599 = vmatprep.subr.mxu0 0.0
    %2600 = vmatpush1.msra.mxu0 0.0
    %2601 = vmatprep.subr.mxu0 0.0
    %2602 = vmatpush1.msra.mxu0 0.0
    %2603 = vmatprep.subr.mxu0 0.0
    %2604 = vmatpush1.msra.mxu0 0.0
    %2605 = vmatprep.subr.mxu0 0.0
    %2606 = vmatpush1.msra.mxu0 0.0
    %2607 = vmatprep.subr.mxu0 0.0
    %2608 = vmatpush1.msra.mxu0 0.0
    %2609 = vmatprep.subr.mxu0 0.0
    %2610 = vmatpush1.msra.mxu0 0.0
    %2611 = vmatprep.mubr.f32.mxu0 0.0
    %2612 = vmatmul.mubr.f32.gmra.mrb[0].mxu0 %v2545
    %v2613 = vpop.f32.mrb[0].mxu0
    %v2614 = vadd.f32 0.0, %v2613
    %v2615 = vpop.f32.mrb[0].mxu0
    %2616 = vdwg.mxu0
    %v2618 = vsel %vm71, %v2539, 0
    %2620 = vmatprep.subr.mxu0 0.0
    %2621 = vmatpush1.msra.mxu0 %v2535
    %2622 = vmatprep.subr.mxu0 0.0
    %2623 = vmatpush1.msra.mxu0 %v2536
    %2624 = vmatprep.subr.mxu0 0.0
    %2625 = vmatpush1.msra.mxu0 %v2537
    %2626 = vmatprep.subr.mxu0 0.0
    %2627 = vmatpush1.msra.mxu0 %v2538
    %2628 = vmatprep.subr.mxu0 0.0
    %2629 = vmatpush1.msra.mxu0 %v2618
    %2630 = vmatprep.subr.mxu0 0.0
    %2631 = vmatpush1.msra.mxu0 0.0
    %2632 = vmatprep.subr.mxu0 0.0
    %2633 = vmatpush1.msra.mxu0 0.0
    %2634 = vmatprep.subr.mxu0 0.0
    %2635 = vmatpush1.msra.mxu0 0.0
    %2636 = vmatprep.subr.mxu0 0.0
    %2637 = vmatpush1.msra.mxu0 0.0
    %2638 = vmatprep.subr.mxu0 0.0
    %2639 = vmatpush1.msra.mxu0 0.0
    %2640 = vmatprep.subr.mxu0 0.0
    %2641 = vmatpush1.msra.mxu0 0.0
    %2642 = vmatprep.subr.mxu0 0.0
    %2643 = vmatpush1.msra.mxu0 0.0
    %2644 = vmatprep.subr.mxu0 0.0
    %2645 = vmatpush1.msra.mxu0 0.0
    %2646 = vmatprep.subr.mxu0 0.0
    %2647 = vmatpush1.msra.mxu0 0.0
    %2648 = vmatprep.subr.mxu0 0.0
    %2649 = vmatpush1.msra.mxu0 0.0
    %2650 = vmatprep.subr.mxu0 0.0
    %2651 = vmatpush1.msra.mxu0 0.0
    %2652 = vmatprep.subr.mxu0 0.0
    %2653 = vmatpush1.msra.mxu0 0.0
    %2654 = vmatprep.subr.mxu0 0.0
    %2655 = vmatpush1.msra.mxu0 0.0
    %2656 = vmatprep.subr.mxu0 0.0
    %2657 = vmatpush1.msra.mxu0 0.0
    %2658 = vmatprep.subr.mxu0 0.0
    %2659 = vmatpush1.msra.mxu0 0.0
    %2660 = vmatprep.subr.mxu0 0.0
    %2661 = vmatpush1.msra.mxu0 0.0
    %2662 = vmatprep.subr.mxu0 0.0
    %2663 = vmatpush1.msra.mxu0 0.0
    %2664 = vmatprep.subr.mxu0 0.0
    %2665 = vmatpush1.msra.mxu0 0.0
    %2666 = vmatprep.subr.mxu0 0.0
    %2667 = vmatpush1.msra.mxu0 0.0
    %2668 = vmatprep.subr.mxu0 0.0
    %2669 = vmatpush1.msra.mxu0 0.0
    %2670 = vmatprep.subr.mxu0 0.0
    %2671 = vmatpush1.msra.mxu0 0.0
    %2672 = vmatprep.subr.mxu0 0.0
    %2673 = vmatpush1.msra.mxu0 0.0
    %2674 = vmatprep.subr.mxu0 0.0
    %2675 = vmatpush1.msra.mxu0 0.0
    %2676 = vmatprep.subr.mxu0 0.0
    %2677 = vmatpush1.msra.mxu0 0.0
    %2678 = vmatprep.subr.mxu0 0.0
    %2679 = vmatpush1.msra.mxu0 0.0
    %2680 = vmatprep.subr.mxu0 0.0
    %2681 = vmatpush1.msra.mxu0 0.0
    %2682 = vmatprep.subr.mxu0 0.0
    %2683 = vmatpush1.msra.mxu0 0.0
    %2684 = vmatprep.mubr.f32.mxu0 0.0
    %2685 = vmatmul.mubr.f32.gmra.mrb[0].mxu0 %v69
    %v2686 = vpop.f32.mrb[0].mxu0
    %v2687 = vadd.f32 %v2614, %v2686
    %v2688 = vpop.f32.mrb[0].mxu0
    %2689 = vdwg.mxu0
    %v2690 = vld [vmem:[#allocation2 + $0x120] sm:$0x1]
    %v2691 = vlaneseq
    %v2692 = vshrl.u32 %v2691, 7
    %v2693 = vsub.s32 0, %v2692
    %v2694 = vrot.slane %v2690, %v2693
    %v2695 = vadd.f32 %v2687, %v2694
    %v2696 = vxor.u32 %v2695, 2147483648
    %v2697 = vmul.f32 %v2696, 1.442695
    %v2698 = vpow.pop %v2697
    %v2699 = vadd.f32 %v2698, 1.0
    %v2700 = vrcp.pop %v2699
    %v2701 = vmul.f32 1.0, %v2700
    %v2702 = vtanh.pop %v2695
    %v2703 = vmul.f32 %v2701, 0.0
    %2705 = vrot.lane.b32.xlu0 %v2702, 64
    %v2706 = vpop.permute.xlu0 %2705
    %v2708 = vmul.f32 %v2701, %v2706
    %2710 = vrot.lane.b32.xlu0 %v2708, 32
    %v2711 = vpop.permute.xlu0 %2710
    %v2713 = vadd.f32 %v2703, %v2711
    %v2714 = vtanh.pop %v2713
    %2716 = vrot.lane.b32.xlu0 %v2714, 64
    %v2717 = vpop.permute.xlu0 %2716
    %v2719 = vmul.f32 %v2701, %v2717
    %v2720 = vld [vmem:[#allocation2 + $0x128] sm:$0xff]
    %v2721 = vld [vmem:[#allocation2 + $0x130] sm:$0xff]
    %v2722 = vld [vmem:[#allocation2 + $0x138] sm:$0xff]
    %v2723 = vld [vmem:[#allocation2 + $0x140] sm:$0xff]
    %v2724 = vld [vmem:[#allocation2 + $0x148] sm:$0x1]
    %v2725 = vlaneseq
    %v2726 = vshrl.u32 %v2725, 7
    %v2727 = vsub.s32 0, %v2726
    %v2728 = vrot.slane %v2724, %v2727
    %2730 = vrot.lane.b32.xlu0 %v2719, 32
    %v2731 = vpop.permute.xlu0 %2730
    %v2732 = vsel %vm197, %v2731, 0
    %2734 = vmatprep.subr.mxu0 0.0
    %2735 = vmatpush1.msra.mxu0 %v2720
    %2736 = vmatprep.subr.mxu0 0.0
    %2737 = vmatpush1.msra.mxu0 %v2721
    %2738 = vmatprep.subr.mxu0 0.0
    %2739 = vmatpush1.msra.mxu0 %v2722
    %2740 = vmatprep.subr.mxu0 0.0
    %2741 = vmatpush1.msra.mxu0 %v2723
    %2742 = vmatprep.subr.mxu0 0.0
    %2743 = vmatpush1.msra.mxu0 0.0
    %2744 = vmatprep.subr.mxu0 0.0
    %2745 = vmatpush1.msra.mxu0 0.0
    %2746 = vmatprep.subr.mxu0 0.0
    %2747 = vmatpush1.msra.mxu0 0.0
    %2748 = vmatprep.subr.mxu0 0.0
    %2749 = vmatpush1.msra.mxu0 0.0
    %2750 = vmatprep.subr.mxu0 0.0
    %2751 = vmatpush1.msra.mxu0 0.0
    %2752 = vmatprep.subr.mxu0 0.0
    %2753 = vmatpush1.msra.mxu0 0.0
    %2754 = vmatprep.subr.mxu0 0.0
    %2755 = vmatpush1.msra.mxu0 0.0
    %2756 = vmatprep.subr.mxu0 0.0
    %2757 = vmatpush1.msra.mxu0 0.0
    %2758 = vmatprep.subr.mxu0 0.0
    %2759 = vmatpush1.msra.mxu0 0.0
    %2760 = vmatprep.subr.mxu0 0.0
    %2761 = vmatpush1.msra.mxu0 0.0
    %2762 = vmatprep.subr.mxu0 0.0
    %2763 = vmatpush1.msra.mxu0 0.0
    %2764 = vmatprep.subr.mxu0 0.0
    %2765 = vmatpush1.msra.mxu0 0.0
    %2766 = vmatprep.subr.mxu0 0.0
    %2767 = vmatpush1.msra.mxu0 0.0
    %2768 = vmatprep.subr.mxu0 0.0
    %2769 = vmatpush1.msra.mxu0 0.0
    %2770 = vmatprep.subr.mxu0 0.0
    %2771 = vmatpush1.msra.mxu0 0.0
    %2772 = vmatprep.subr.mxu0 0.0
    %2773 = vmatpush1.msra.mxu0 0.0
    %2774 = vmatprep.subr.mxu0 0.0
    %2775 = vmatpush1.msra.mxu0 0.0
    %2776 = vmatprep.subr.mxu0 0.0
    %2777 = vmatpush1.msra.mxu0 0.0
    %2778 = vmatprep.subr.mxu0 0.0
    %2779 = vmatpush1.msra.mxu0 0.0
    %2780 = vmatprep.subr.mxu0 0.0
    %2781 = vmatpush1.msra.mxu0 0.0
    %2782 = vmatprep.subr.mxu0 0.0
    %2783 = vmatpush1.msra.mxu0 0.0
    %2784 = vmatprep.subr.mxu0 0.0
    %2785 = vmatpush1.msra.mxu0 0.0
    %2786 = vmatprep.subr.mxu0 0.0
    %2787 = vmatpush1.msra.mxu0 0.0
    %2788 = vmatprep.subr.mxu0 0.0
    %2789 = vmatpush1.msra.mxu0 0.0
    %2790 = vmatprep.subr.mxu0 0.0
    %2791 = vmatpush1.msra.mxu0 0.0
    %2792 = vmatprep.subr.mxu0 0.0
    %2793 = vmatpush1.msra.mxu0 0.0
    %2794 = vmatprep.subr.mxu0 0.0
    %2795 = vmatpush1.msra.mxu0 0.0
    %2796 = vmatprep.subr.mxu0 0.0
    %2797 = vmatpush1.msra.mxu0 0.0
    %2798 = vmatprep.mubr.f32.mxu0 0.0
    %2799 = vmatmul.mubr.f32.gmra.mrb[0].mxu0 %v2732
    %v2800 = vpop.f32.mrb[0].mxu0
    %v2801 = vadd.f32 %v2728, %v2800
    %v2802 = vpop.f32.mrb[0].mxu0
    %2803 = vdwg.mxu0
    %v2804 = vxor.u32 %v2801, 2147483648
    %v2805 = vmul.f32 %v2804, 1.442695
    %v2806 = vpow.pop %v2805
    %v2807 = vadd.f32 %v2806, 1.0
    %v2808 = vrcp.pop %v2807
    %v2809 = vmul.f32 1.0, %v2808
    %v2810 = vtanh.pop %v2801
    %v2811 = vmul.f32 %v2809, %v2713
    %2813 = vrot.lane.b32.xlu0 %v2810, 64
    %v2814 = vpop.permute.xlu0 %2813
    %v2816 = vmul.f32 %v2809, %v2814
    %2818 = vrot.lane.b32.xlu0 %v2816, 32
    %v2819 = vpop.permute.xlu0 %2818
    %v2821 = vadd.f32 %v2811, %v2819
    %v2822 = vtanh.pop %v2821
    %2824 = vrot.lane.b32.xlu0 %v2822, 64
    %v2825 = vpop.permute.xlu0 %2824
    %v2827 = vmul.f32 %v2809, %v2825
    %2829 = vrot.lane.b32.xlu0 %v2827, 32
    %v2830 = vpop.permute.xlu0 %2829
    %v2831 = vsel %vm197, %v2830, 0
    %2833 = vmatprep.subr.mxu0 0.0
    %2834 = vmatpush1.msra.mxu0 %v2720
    %2835 = vmatprep.subr.mxu0 0.0
    %2836 = vmatpush1.msra.mxu0 %v2721
    %2837 = vmatprep.subr.mxu0 0.0
    %2838 = vmatpush1.msra.mxu0 %v2722
    %2839 = vmatprep.subr.mxu0 0.0
    %2840 = vmatpush1.msra.mxu0 %v2723
    %2841 = vmatprep.subr.mxu0 0.0
    %2842 = vmatpush1.msra.mxu0 0.0
    %2843 = vmatprep.subr.mxu0 0.0
    %2844 = vmatpush1.msra.mxu0 0.0
    %2845 = vmatprep.subr.mxu0 0.0
    %2846 = vmatpush1.msra.mxu0 0.0
    %2847 = vmatprep.subr.mxu0 0.0
    %2848 = vmatpush1.msra.mxu0 0.0
    %2849 = vmatprep.subr.mxu0 0.0
    %2850 = vmatpush1.msra.mxu0 0.0
    %2851 = vmatprep.subr.mxu0 0.0
    %2852 = vmatpush1.msra.mxu0 0.0
    %2853 = vmatprep.subr.mxu0 0.0
    %2854 = vmatpush1.msra.mxu0 0.0
    %2855 = vmatprep.subr.mxu0 0.0
    %2856 = vmatpush1.msra.mxu0 0.0
    %2857 = vmatprep.subr.mxu0 0.0
    %2858 = vmatpush1.msra.mxu0 0.0
    %2859 = vmatprep.subr.mxu0 0.0
    %2860 = vmatpush1.msra.mxu0 0.0
    %2861 = vmatprep.subr.mxu0 0.0
    %2862 = vmatpush1.msra.mxu0 0.0
    %2863 = vmatprep.subr.mxu0 0.0
    %2864 = vmatpush1.msra.mxu0 0.0
    %2865 = vmatprep.subr.mxu0 0.0
    %2866 = vmatpush1.msra.mxu0 0.0
    %2867 = vmatprep.subr.mxu0 0.0
    %2868 = vmatpush1.msra.mxu0 0.0
    %2869 = vmatprep.subr.mxu0 0.0
    %2870 = vmatpush1.msra.mxu0 0.0
    %2871 = vmatprep.subr.mxu0 0.0
    %2872 = vmatpush1.msra.mxu0 0.0
    %2873 = vmatprep.subr.mxu0 0.0
    %2874 = vmatpush1.msra.mxu0 0.0
    %2875 = vmatprep.subr.mxu0 0.0
    %2876 = vmatpush1.msra.mxu0 0.0
    %2877 = vmatprep.subr.mxu0 0.0
    %2878 = vmatpush1.msra.mxu0 0.0
    %2879 = vmatprep.subr.mxu0 0.0
    %2880 = vmatpush1.msra.mxu0 0.0
    %2881 = vmatprep.subr.mxu0 0.0
    %2882 = vmatpush1.msra.mxu0 0.0
    %2883 = vmatprep.subr.mxu0 0.0
    %2884 = vmatpush1.msra.mxu0 0.0
    %2885 = vmatprep.subr.mxu0 0.0
    %2886 = vmatpush1.msra.mxu0 0.0
    %2887 = vmatprep.subr.mxu0 0.0
    %2888 = vmatpush1.msra.mxu0 0.0
    %2889 = vmatprep.subr.mxu0 0.0
    %2890 = vmatpush1.msra.mxu0 0.0
    %2891 = vmatprep.subr.mxu0 0.0
    %2892 = vmatpush1.msra.mxu0 0.0
    %2893 = vmatprep.subr.mxu0 0.0
    %2894 = vmatpush1.msra.mxu0 0.0
    %2895 = vmatprep.subr.mxu0 0.0
    %2896 = vmatpush1.msra.mxu0 0.0
    %2897 = vmatprep.mubr.f32.mxu0 0.0
    %2898 = vmatmul.mubr.f32.gmra.mrb[0].mxu0 %v2831
    %v2899 = vpop.f32.mrb[0].mxu0
    %v2900 = vadd.f32 %v2728, %v2899
    %v2901 = vpop.f32.mrb[0].mxu0
    %2902 = vdwg.mxu0
    %v2903 = vxor.u32 %v2900, 2147483648
    %v2904 = vmul.f32 %v2903, 1.442695
    %v2905 = vpow.pop %v2904
    %v2906 = vadd.f32 %v2905, 1.0
    %v2907 = vrcp.pop %v2906
    %v2908 = vmul.f32 1.0, %v2907
    %v2909 = vtanh.pop %v2900
    %v2910 = vmul.f32 %v2908, %v2821
    %2912 = vrot.lane.b32.xlu0 %v2909, 64
    %v2913 = vpop.permute.xlu0 %2912
    %v2915 = vmul.f32 %v2908, %v2913
    %2917 = vrot.lane.b32.xlu0 %v2915, 32
    %v2918 = vpop.permute.xlu0 %2917
    %v2920 = vadd.f32 %v2910, %v2918
    %v2921 = vtanh.pop %v2920
    %2923 = vrot.lane.b32.xlu0 %v2921, 64
    %v2924 = vpop.permute.xlu0 %2923
    %v2926 = vmul.f32 %v2908, %v2924
    %2928 = vrot.lane.b32.xlu0 %v2926, 32
    %v2929 = vpop.permute.xlu0 %2928
    %v2930 = vsel %vm197, %v2929, 0
    %2932 = vmatprep.subr.mxu0 0.0
    %2933 = vmatpush1.msra.mxu0 %v2720
    %2934 = vmatprep.subr.mxu0 0.0
    %2935 = vmatpush1.msra.mxu0 %v2721
    %2936 = vmatprep.subr.mxu0 0.0
    %2937 = vmatpush1.msra.mxu0 %v2722
    %2938 = vmatprep.subr.mxu0 0.0
    %2939 = vmatpush1.msra.mxu0 %v2723
    %2940 = vmatprep.subr.mxu0 0.0
    %2941 = vmatpush1.msra.mxu0 0.0
    %2942 = vmatprep.subr.mxu0 0.0
    %2943 = vmatpush1.msra.mxu0 0.0
    %2944 = vmatprep.subr.mxu0 0.0
    %2945 = vmatpush1.msra.mxu0 0.0
    %2946 = vmatprep.subr.mxu0 0.0
    %2947 = vmatpush1.msra.mxu0 0.0
    %2948 = vmatprep.subr.mxu0 0.0
    %2949 = vmatpush1.msra.mxu0 0.0
    %2950 = vmatprep.subr.mxu0 0.0
    %2951 = vmatpush1.msra.mxu0 0.0
    %2952 = vmatprep.subr.mxu0 0.0
    %2953 = vmatpush1.msra.mxu0 0.0
    %2954 = vmatprep.subr.mxu0 0.0
    %2955 = vmatpush1.msra.mxu0 0.0
    %2956 = vmatprep.subr.mxu0 0.0
    %2957 = vmatpush1.msra.mxu0 0.0
    %2958 = vmatprep.subr.mxu0 0.0
    %2959 = vmatpush1.msra.mxu0 0.0
    %2960 = vmatprep.subr.mxu0 0.0
    %2961 = vmatpush1.msra.mxu0 0.0
    %2962 = vmatprep.subr.mxu0 0.0
    %2963 = vmatpush1.msra.mxu0 0.0
    %2964 = vmatprep.subr.mxu0 0.0
    %2965 = vmatpush1.msra.mxu0 0.0
    %2966 = vmatprep.subr.mxu0 0.0
    %2967 = vmatpush1.msra.mxu0 0.0
    %2968 = vmatprep.subr.mxu0 0.0
    %2969 = vmatpush1.msra.mxu0 0.0
    %2970 = vmatprep.subr.mxu0 0.0
    %2971 = vmatpush1.msra.mxu0 0.0
    %2972 = vmatprep.subr.mxu0 0.0
    %2973 = vmatpush1.msra.mxu0 0.0
    %2974 = vmatprep.subr.mxu0 0.0
    %2975 = vmatpush1.msra.mxu0 0.0
    %2976 = vmatprep.subr.mxu0 0.0
    %2977 = vmatpush1.msra.mxu0 0.0
    %2978 = vmatprep.subr.mxu0 0.0
    %2979 = vmatpush1.msra.mxu0 0.0
    %2980 = vmatprep.subr.mxu0 0.0
    %2981 = vmatpush1.msra.mxu0 0.0
    %2982 = vmatprep.subr.mxu0 0.0
    %2983 = vmatpush1.msra.mxu0 0.0
    %2984 = vmatprep.subr.mxu0 0.0
    %2985 = vmatpush1.msra.mxu0 0.0
    %2986 = vmatprep.subr.mxu0 0.0
    %2987 = vmatpush1.msra.mxu0 0.0
    %2988 = vmatprep.subr.mxu0 0.0
    %2989 = vmatpush1.msra.mxu0 0.0
    %2990 = vmatprep.subr.mxu0 0.0
    %2991 = vmatpush1.msra.mxu0 0.0
    %2992 = vmatprep.subr.mxu0 0.0
    %2993 = vmatpush1.msra.mxu0 0.0
    %2994 = vmatprep.subr.mxu0 0.0
    %2995 = vmatpush1.msra.mxu0 0.0
    %2996 = vmatprep.mubr.f32.mxu0 0.0
    %2997 = vmatmul.mubr.f32.gmra.mrb[0].mxu0 %v2930
    %v2998 = vpop.f32.mrb[0].mxu0
    %v2999 = vadd.f32 %v2728, %v2998
    %v3000 = vpop.f32.mrb[0].mxu0
    %3001 = vdwg.mxu0
    %v3002 = vxor.u32 %v2999, 2147483648
    %v3003 = vmul.f32 %v3002, 1.442695
    %v3004 = vpow.pop %v3003
    %v3005 = vadd.f32 %v3004, 1.0
    %v3006 = vrcp.pop %v3005
    %v3007 = vmul.f32 1.0, %v3006
    %v3008 = vtanh.pop %v2999
    %v3009 = vmul.f32 %v3007, %v2920
    %3011 = vrot.lane.b32.xlu0 %v3008, 64
    %v3012 = vpop.permute.xlu0 %3011
    %v3014 = vmul.f32 %v3007, %v3012
    %3016 = vrot.lane.b32.xlu0 %v3014, 32
    %v3017 = vpop.permute.xlu0 %3016
    %v3019 = vadd.f32 %v3009, %v3017
    %v3020 = vtanh.pop %v3019
    %3022 = vrot.lane.b32.xlu0 %v3020, 64
    %v3023 = vpop.permute.xlu0 %3022
    %v3025 = vmul.f32 %v3007, %v3023
    %3027 = vrot.lane.b32.xlu0 %v3025, 32
    %v3028 = vpop.permute.xlu0 %3027
    %v3029 = vsel %vm197, %v3028, 0
    %3031 = vmatprep.subr.mxu0 0.0
    %3032 = vmatpush1.msra.mxu0 %v2720
    %3033 = vmatprep.subr.mxu0 0.0
    %3034 = vmatpush1.msra.mxu0 %v2721
    %3035 = vmatprep.subr.mxu0 0.0
    %3036 = vmatpush1.msra.mxu0 %v2722
    %3037 = vmatprep.subr.mxu0 0.0
    %3038 = vmatpush1.msra.mxu0 %v2723
    %3039 = vmatprep.subr.mxu0 0.0
    %3040 = vmatpush1.msra.mxu0 0.0
    %3041 = vmatprep.subr.mxu0 0.0
    %3042 = vmatpush1.msra.mxu0 0.0
    %3043 = vmatprep.subr.mxu0 0.0
    %3044 = vmatpush1.msra.mxu0 0.0
    %3045 = vmatprep.subr.mxu0 0.0
    %3046 = vmatpush1.msra.mxu0 0.0
    %3047 = vmatprep.subr.mxu0 0.0
    %3048 = vmatpush1.msra.mxu0 0.0
    %3049 = vmatprep.subr.mxu0 0.0
    %3050 = vmatpush1.msra.mxu0 0.0
    %3051 = vmatprep.subr.mxu0 0.0
    %3052 = vmatpush1.msra.mxu0 0.0
    %3053 = vmatprep.subr.mxu0 0.0
    %3054 = vmatpush1.msra.mxu0 0.0
    %3055 = vmatprep.subr.mxu0 0.0
    %3056 = vmatpush1.msra.mxu0 0.0
    %3057 = vmatprep.subr.mxu0 0.0
    %3058 = vmatpush1.msra.mxu0 0.0
    %3059 = vmatprep.subr.mxu0 0.0
    %3060 = vmatpush1.msra.mxu0 0.0
    %3061 = vmatprep.subr.mxu0 0.0
    %3062 = vmatpush1.msra.mxu0 0.0
    %3063 = vmatprep.subr.mxu0 0.0
    %3064 = vmatpush1.msra.mxu0 0.0
    %3065 = vmatprep.subr.mxu0 0.0
    %3066 = vmatpush1.msra.mxu0 0.0
    %3067 = vmatprep.subr.mxu0 0.0
    %3068 = vmatpush1.msra.mxu0 0.0
    %3069 = vmatprep.subr.mxu0 0.0
    %3070 = vmatpush1.msra.mxu0 0.0
    %3071 = vmatprep.subr.mxu0 0.0
    %3072 = vmatpush1.msra.mxu0 0.0
    %3073 = vmatprep.subr.mxu0 0.0
    %3074 = vmatpush1.msra.mxu0 0.0
    %3075 = vmatprep.subr.mxu0 0.0
    %3076 = vmatpush1.msra.mxu0 0.0
    %3077 = vmatprep.subr.mxu0 0.0
    %3078 = vmatpush1.msra.mxu0 0.0
    %3079 = vmatprep.subr.mxu0 0.0
    %3080 = vmatpush1.msra.mxu0 0.0
    %3081 = vmatprep.subr.mxu0 0.0
    %3082 = vmatpush1.msra.mxu0 0.0
    %3083 = vmatprep.subr.mxu0 0.0
    %3084 = vmatpush1.msra.mxu0 0.0
    %3085 = vmatprep.subr.mxu0 0.0
    %3086 = vmatpush1.msra.mxu0 0.0
    %3087 = vmatprep.subr.mxu0 0.0
    %3088 = vmatpush1.msra.mxu0 0.0
    %3089 = vmatprep.subr.mxu0 0.0
    %3090 = vmatpush1.msra.mxu0 0.0
    %3091 = vmatprep.subr.mxu0 0.0
    %3092 = vmatpush1.msra.mxu0 0.0
    %3093 = vmatprep.subr.mxu0 0.0
    %3094 = vmatpush1.msra.mxu0 0.0
    %3095 = vmatprep.mubr.f32.mxu0 0.0
    %3096 = vmatmul.mubr.f32.gmra.mrb[0].mxu0 %v3029
    %v3097 = vpop.f32.mrb[0].mxu0
    %v3098 = vadd.f32 %v2728, %v3097
    %v3099 = vpop.f32.mrb[0].mxu0
    %3100 = vdwg.mxu0
    %v3101 = vxor.u32 %v3098, 2147483648
    %v3102 = vmul.f32 %v3101, 1.442695
    %v3103 = vpow.pop %v3102
    %v3104 = vadd.f32 %v3103, 1.0
    %v3105 = vrcp.pop %v3104
    %v3106 = vmul.f32 1.0, %v3105
    %v3107 = vtanh.pop %v3098
    %v3108 = vmul.f32 %v3106, %v3019
    %3110 = vrot.lane.b32.xlu0 %v3107, 64
    %v3111 = vpop.permute.xlu0 %3110
    %v3113 = vmul.f32 %v3106, %v3111
    %3115 = vrot.lane.b32.xlu0 %v3113, 32
    %v3116 = vpop.permute.xlu0 %3115
    %v3118 = vadd.f32 %v3108, %v3116
    %v3119 = vtanh.pop %v3118
    %3121 = vrot.lane.b32.xlu0 %v3119, 64
    %v3122 = vpop.permute.xlu0 %3121
    %v3124 = vmul.f32 %v3106, %v3122
    %v3125 = vld [vmem:[#allocation2 + $0x150] sm:$0xff]
    %v3126 = vld [vmem:[#allocation2 + $0x158] sm:$0xff]
    %v3127 = vld [vmem:[#allocation2 + $0x160] sm:$0xff]
    %v3128 = vld [vmem:[#allocation2 + $0x168] sm:$0xff]
    %v3129 = vld [vmem:[#allocation2 + $0x170] sm:$0x1]
    %v3130 = vlaneseq
    %v3131 = vshrl.u32 %v3130, 7
    %v3132 = vsub.s32 0, %v3131
    %v3133 = vrot.slane %v3129, %v3132
    %3135 = vrot.lane.b32.xlu0 %v3124, 32
    %v3136 = vpop.permute.xlu0 %3135
    %v3137 = vsel %vm197, %v3136, 0
    %3139 = vmatprep.subr.mxu0 0.0
    %3140 = vmatpush1.msra.mxu0 %v3125
    %3141 = vmatprep.subr.mxu0 0.0
    %3142 = vmatpush1.msra.mxu0 %v3126
    %3143 = vmatprep.subr.mxu0 0.0
    %3144 = vmatpush1.msra.mxu0 %v3127
    %3145 = vmatprep.subr.mxu0 0.0
    %3146 = vmatpush1.msra.mxu0 %v3128
    %3147 = vmatprep.subr.mxu0 0.0
    %3148 = vmatpush1.msra.mxu0 0.0
    %3149 = vmatprep.subr.mxu0 0.0
    %3150 = vmatpush1.msra.mxu0 0.0
    %3151 = vmatprep.subr.mxu0 0.0
    %3152 = vmatpush1.msra.mxu0 0.0
    %3153 = vmatprep.subr.mxu0 0.0
    %3154 = vmatpush1.msra.mxu0 0.0
    %3155 = vmatprep.subr.mxu0 0.0
    %3156 = vmatpush1.msra.mxu0 0.0
    %3157 = vmatprep.subr.mxu0 0.0
    %3158 = vmatpush1.msra.mxu0 0.0
    %3159 = vmatprep.subr.mxu0 0.0
    %3160 = vmatpush1.msra.mxu0 0.0
    %3161 = vmatprep.subr.mxu0 0.0
    %3162 = vmatpush1.msra.mxu0 0.0
    %3163 = vmatprep.subr.mxu0 0.0
    %3164 = vmatpush1.msra.mxu0 0.0
    %3165 = vmatprep.subr.mxu0 0.0
    %3166 = vmatpush1.msra.mxu0 0.0
    %3167 = vmatprep.subr.mxu0 0.0
    %3168 = vmatpush1.msra.mxu0 0.0
    %3169 = vmatprep.subr.mxu0 0.0
    %3170 = vmatpush1.msra.mxu0 0.0
    %3171 = vmatprep.subr.mxu0 0.0
    %3172 = vmatpush1.msra.mxu0 0.0
    %3173 = vmatprep.subr.mxu0 0.0
    %3174 = vmatpush1.msra.mxu0 0.0
    %3175 = vmatprep.subr.mxu0 0.0
    %3176 = vmatpush1.msra.mxu0 0.0
    %3177 = vmatprep.subr.mxu0 0.0
    %3178 = vmatpush1.msra.mxu0 0.0
    %3179 = vmatprep.subr.mxu0 0.0
    %3180 = vmatpush1.msra.mxu0 0.0
    %3181 = vmatprep.subr.mxu0 0.0
    %3182 = vmatpush1.msra.mxu0 0.0
    %3183 = vmatprep.subr.mxu0 0.0
    %3184 = vmatpush1.msra.mxu0 0.0
    %3185 = vmatprep.subr.mxu0 0.0
    %3186 = vmatpush1.msra.mxu0 0.0
    %3187 = vmatprep.subr.mxu0 0.0
    %3188 = vmatpush1.msra.mxu0 0.0
    %3189 = vmatprep.subr.mxu0 0.0
    %3190 = vmatpush1.msra.mxu0 0.0
    %3191 = vmatprep.subr.mxu0 0.0
    %3192 = vmatpush1.msra.mxu0 0.0
    %3193 = vmatprep.subr.mxu0 0.0
    %3194 = vmatpush1.msra.mxu0 0.0
    %3195 = vmatprep.subr.mxu0 0.0
    %3196 = vmatpush1.msra.mxu0 0.0
    %3197 = vmatprep.subr.mxu0 0.0
    %3198 = vmatpush1.msra.mxu0 0.0
    %3199 = vmatprep.subr.mxu0 0.0
    %3200 = vmatpush1.msra.mxu0 0.0
    %3201 = vmatprep.subr.mxu0 0.0
    %3202 = vmatpush1.msra.mxu0 0.0
    %3203 = vmatprep.mubr.f32.mxu0 0.0
    %3204 = vmatmul.mubr.f32.gmra.mrb[0].mxu0 %v2732
    %v3205 = vpop.f32.mrb[0].mxu0
    %v3206 = vadd.f32 %v3133, %v3205
    %v3207 = vpop.f32.mrb[0].mxu0
    %3208 = vmatprep.mubr.f32.mxu0 0.0
    %3209 = vmatmul.mubr.f32.gmra.mrb[0].mxu0 %v2831
    %v3210 = vpop.f32.mrb[0].mxu0
    %v3211 = vadd.f32 %v3133, %v3210
    %v3212 = vpop.f32.mrb[0].mxu0
    %3213 = vmatprep.mubr.f32.mxu0 0.0
    %3214 = vmatmul.mubr.f32.gmra.mrb[0].mxu0 %v2930
    %v3215 = vpop.f32.mrb[0].mxu0
    %v3216 = vadd.f32 %v3133, %v3215
    %v3217 = vpop.f32.mrb[0].mxu0
    %3218 = vmatprep.mubr.f32.mxu0 0.0
    %3219 = vmatmul.mubr.f32.gmra.mrb[0].mxu0 %v3029
    %v3220 = vpop.f32.mrb[0].mxu0
    %v3221 = vadd.f32 %v3133, %v3220
    %v3222 = vpop.f32.mrb[0].mxu0
    %3223 = vmatprep.mubr.f32.mxu0 0.0
    %3224 = vmatmul.mubr.f32.gmra.mrb[0].mxu0 %v3137
    %v3225 = vpop.f32.mrb[0].mxu0
    %v3226 = vadd.f32 %v3133, %v3225
    %v3227 = vpop.f32.mrb[0].mxu0
    %3228 = vdwg.mxu0
    %3229 = vst [vmem:[%s3] sm:$0xff] %v3206
    %3230 = vst [vmem:[%s3 + $0x8] sm:$0xff] %v3211
    %3231 = vst [vmem:[%s3 + $0x10] sm:$0xff] %v3216
    %3232 = vst [vmem:[%s3 + $0x18] sm:$0xff] %v3221
    %3233 = vst [vmem:[%s3 + $0x20] sm:$0xff] %v3226
    %3234 = vst [vmem:[%s3 + $0x28] sm:$0xff] %v2437
    // Predicated region
    $region18: #{vae_forward.1} parent=1 // pred_check
      _
    $region19: #{vae_forward.1} parent=1 // pred_check_branch
      %3236 = sbr.rel (0) target = $region21
    $region20: #{vae_forward.1} parent=1 // pred_region
      _
    $region21: #{vae_forward.1} parent=1 // pred_fallthru
      _
    // Predicated region
    $region22: #{vae_forward.1} parent=1 // pred_check
      _
    $region23: #{vae_forward.1} parent=1 // pred_check_branch
      %3238 = sbr.rel (0) target = $region25
    $region24: #{vae_forward.1} parent=1 // pred_region
      _
    $region25: #{vae_forward.1} parent=1 // pred_fallthru
      _
    %3239 = vsyncpa [#allocation3], 1

</llo_original>
